<compile_context>
chip_gen: v7x
topology: tpu7x:2x2x1
jax: 0.10.0
libtpu: 0.0.40
codegen_flags: <defaults>
</compile_context>

<pallas_src>
import functools

import jax
import jax.numpy as jnp
from jax import lax
from jax.experimental import pallas as pl
from jax.experimental.pallas import tpu as pltpu

FREQ = 500                  # fixed by nn.Conv1d(500, 32, 1)
WIDTH = 40                  # fixed by nn.Linear(32 * 40, n_rnn_dim)
CNN_CH = 32
PACK = 4                    # width positions packed per 128-lane row
W4 = WIDTH // PACK          # 10 packed width groups
LANES = PACK * CNN_CH       # 128
BN_EPS = 1e-5
HEAD_PAD = 128              # lane-dense padded width of the merged head
TIME_UNROLL_MAX = 32        # unroll the LSTM time loop up to this seq_len


# ---------------------------------------------------------------------------
# Fused kernel: conv1 -> ResCNN stack -> dense2 -> biLSTM -> merged heads
# ---------------------------------------------------------------------------
def hydranet_kernel(*refs, n_cnn, n_rnn_layers, seq_len, hidden, n_rnn_dim):
    (x_ref, jrev_ref, wd_ref, bd_ref, w1_ref, b1_ref, w2_ref, b2_ref,
     w2d_ref, b2d_ref) = refs[:10]
    lstm_refs = refs[10:10 + 3 * n_rnn_layers]
    whead_ref, bhead_ref = refs[10 + 3 * n_rnn_layers:12 + 3 * n_rnn_layers]
    out_ref = refs[12 + 3 * n_rnn_layers]
    gx_ref = refs[13 + 3 * n_rnn_layers]          # (B, 8H) input-gate scratch
    inp2_ref = refs[14 + 3 * n_rnn_layers]        # (B, 2*n_rnn_dim) scratch
    seq_refs = (refs[15 + 3 * n_rnn_layers], refs[16 + 3 * n_rnn_layers])

    B = seq_len
    H = hidden
    f32 = jnp.float32

    # ---- self.dense: Conv1d(500, 32, 1), lane-dense block-diagonal form ----
    # rows = (g, b) packed width groups, cols = 4 x 32 channels (128 lanes).
    h = jnp.dot(x_ref[...], wd_ref[...], preferred_element_type=f32) + bd_ref[...]

    # ---- self.cnn: ResCNN stack (eval-mode BN folded into conv1) -----------
    for i in range(n_cnn):
        c1 = jnp.maximum(
            jnp.dot(h, w1_ref[i], preferred_element_type=f32) + b1_ref[i], 0.0)
        c2 = jnp.dot(c1, w2_ref[i], preferred_element_type=f32) + b2_ref[i]
        h = jnp.maximum(c2 + h, 0.0)                               # (W4*B, 128)

    # ---- self.dense2: 10 grouped K=128 dots (one per packed width group) ---
    acc = jnp.zeros((B, n_rnn_dim), f32)
    for g in range(W4):
        acc = acc + jnp.dot(h[g * B:(g + 1) * B, :], w2d_ref[g],
                            preferred_element_type=f32)
    r = acc + b2d_ref[...]                                         # (B, n_rnn_dim)

    # ---- self.lstm: multi-layer bidirectional LSTM over the length-B seq ---
    # Gate columns (blocks of H): [i_f i_b f_f f_b o_f o_b g_f g_b]; packed
    # state hc/cc = [fwd | bwd] (1, 2H).  jrev is the (B, B) anti-identity
    # used (once per layer, off the serial path) for the time reversal.
    jrev = jrev_ref[...]
    lane2h = lax.broadcasted_iota(jnp.int32, (B, 2 * H), 1)
    is_fwd = lane2h < H

    inp = r
    for l in range(n_rnn_layers):
        wih_ref, whh_ref, bias_ref = lstm_refs[3 * l:3 * l + 3]
        seq_out = seq_refs[l % 2]
        if l > 0:
            prev = seq_refs[(l - 1) % 2][...]     # raw: row t = [h_f(t) | h_b(B-1-t)]
            prev_rev = jnp.dot(jrev, prev, preferred_element_type=f32)
            inp = jnp.where(is_fwd, prev, prev_rev)   # un-reverse the bwd half

        # fused fwd+bwd input projection, fully hoisted out of the time loop:
        # row t of gx = inp[t] @ Wih_f + inp[B-1-t] @ Wih_b + (b_f + b_b)
        inp_rev = jnp.dot(jrev, inp, preferred_element_type=f32)
        inp2_ref[:, :n_rnn_dim] = inp
        inp2_ref[:, n_rnn_dim:] = inp_rev
        gx_ref[...] = (jnp.dot(inp2_ref[...], wih_ref[...],
                               preferred_element_type=f32) + bias_ref[...])

        whh = whh_ref[...]                         # loop-invariant (2H, 8H)
        # TODO(synk): stage whh explicitly on the MXU (matmul_push_rhs /
        #             matmul_acc_lhs / matmul_pop) to shave per-step weight
        #             re-pushes off the serial chain.
        # TODO(synk): the f/o/g gate slices start at lane offsets 2H/4H/6H and
        #             add XLU rotates to the recurrence; replicate cc/hc across
        #             the 8H frame if a bundle dump shows they are not hidden
        #             under the whh matmul latency.

        def step(t, hc, cc):
            gx = gx_ref[pl.ds(t, 1), :]                            # (1, 8H)
            gates = gx + jnp.dot(hc, whh, preferred_element_type=f32)
            sig = jax.nn.sigmoid(gates[:, :6 * H])
            g_g = jnp.tanh(gates[:, 6 * H:])
            cc_n = sig[:, 2 * H:4 * H] * cc + sig[:, :2 * H] * g_g
            hc_n = sig[:, 4 * H:6 * H] * jnp.tanh(cc_n)
            seq_out[pl.ds(t, 1), :] = hc_n         # one contiguous (1, 2H) store
            return hc_n, cc_n

        hc0 = jnp.zeros((1, 2 * H), f32)
        cc0 = jnp.zeros((1, 2 * H), f32)
        if B <= TIME_UNROLL_MAX:
            hc, cc = hc0, cc0
            for t in range(B):
                hc, cc = step(t, hc, cc)
        else:
            lax.fori_loop(0, B, lambda t, c: step(t, c[0], c[1]), (hc0, cc0))

    final = seq_refs[(n_rnn_layers - 1) % 2][...]
    final_rev = jnp.dot(jrev, final, preferred_element_type=f32)
    feats = jnp.where(is_fwd, final, final_rev)                    # (B, 2H)

    # ---- fcDep + fcAnx merged lane-dense head: Linear + ReLU ---------------
    logits = jnp.dot(feats, whead_ref[...],
                     preferred_element_type=f32) + bhead_ref[...]
    out_ref[...] = jnp.maximum(logits, 0.0)


# ---------------------------------------------------------------------------
# Wrapper
# ---------------------------------------------------------------------------
def hydranet_forward(x, params, *, n_cnn_layers, n_rnn_layers, h_rnn_layer,
                     n_rnn_dim, n_classes):
    B = x.shape[0]
    assert x.shape[1:] == (FREQ, WIDTH), "HydraNet expects (B, 500, 40) input"
    assert 2 * h_rnn_layer == n_rnn_dim, (
        "fcDep/fcAnx consume the (B, 2*h) LSTM output, so the PyTorch module "
        "only works when 2*h_rnn_layer == n_rnn_dim")

    # lane-dense packed layout: row = g*B + b, col = j*FREQ + f  (w = 4g + j)
    xp = jnp.transpose(x, (2, 0, 1)).reshape(W4, PACK, B, FREQ)
    xp = jnp.transpose(xp, (0, 2, 1, 3)).reshape(W4 * B, PACK * FREQ)

    # anti-identity time-reversal matrix (host-built, tiny)
    jrev = jnp.flip(jnp.eye(B, dtype=jnp.float32), axis=0)

    inputs = [xp, jrev] + list(params)
    vmem = pl.BlockSpec(memory_space=pltpu.MemorySpace.VMEM)

    # scoped-VMEM budget from the actual footprint (+headroom for temporaries)
    footprint = sum(int(a.size) * a.dtype.itemsize for a in inputs)
    footprint += B * HEAD_PAD * 4 + B * 16 * h_rnn_layer * 4   # out + scratch
    vmem_limit = int(min(max(2 * footprint + (16 << 20), 32 << 20), 100 << 20))

    # TODO(synk): v7x — split the CNN/dense2 stage into its own pallas_call
    #             gridded "parallel" over row chunks so both TensorCores work,
    #             and tile xp via a gridded BlockSpec for very large B
    #             (64 MiB VMEM cap); the serial LSTM+head stays a second call.
    out = pl.pallas_call(
        functools.partial(hydranet_kernel, n_cnn=n_cnn_layers,
                          n_rnn_layers=n_rnn_layers, seq_len=B,
                          hidden=h_rnn_layer, n_rnn_dim=n_rnn_dim),
        in_specs=[vmem] * len(inputs),
        out_specs=vmem,
        out_shape=jax.ShapeDtypeStruct((B, HEAD_PAD), jnp.float32),
        scratch_shapes=[
            pltpu.VMEM((B, 8 * h_rnn_layer), jnp.float32),      # gx (gates)
            pltpu.VMEM((B, 2 * n_rnn_dim), jnp.float32),        # [inp | inp_rev]
            pltpu.VMEM((B, 2 * h_rnn_layer), jnp.float32),      # seq ping
            pltpu.VMEM((B, 2 * h_rnn_layer), jnp.float32),      # seq pong
        ],
        compiler_params=pltpu.CompilerParams(vmem_limit_bytes=vmem_limit),
    )(*inputs)
    phq8 = out[:, :n_classes]
    gad7 = out[:, n_classes:2 * n_classes - 1]
    return phq8, gad7


# ---------------------------------------------------------------------------
# Parameter construction (PyTorch-layout init, host-side repacking)
# ---------------------------------------------------------------------------
def _uniform(key, shape, bound):
    return jax.random.uniform(key, shape, jnp.float32, -bound, bound)


def _block_diag(block, copies):
    n, m = block.shape
    out = jnp.zeros((copies * n, copies * m), jnp.float32)
    for j in range(copies):
        out = out.at[j * n:(j + 1) * n, j * m:(j + 1) * m].set(block)
    return out


def _pack_lstm_dir(w_ih, w_hh, b_ih, b_hh, direction, H):
    """Repack one PyTorch LSTM direction into the fused 8H gate layout.

    Target column blocks (width H): [i_f i_b f_f f_b o_f o_b g_f g_b].
    `direction` = 0 (forward) / 1 (backward) selects the even/odd blocks.
    """
    in_l = w_ih.shape[1]
    eight = 8 * H
    wih_c = jnp.zeros((in_l, eight), jnp.float32)
    whh_c = jnp.zeros((H, eight), jnp.float32)
    b_c = jnp.zeros((1, eight), jnp.float32)
    bias = b_ih + b_hh
    # PyTorch gate row order: i, f, g, o  ->  target gate-pair index 0, 1, 3, 2
    for src, pair in ((0, 0), (1, 1), (2, 3), (3, 2)):
        col = (2 * pair + direction) * H
        wih_c = wih_c.at[:, col:col + H].set(w_ih[src * H:(src + 1) * H, :].T)
        whh_c = whh_c.at[:, col:col + H].set(w_hh[src * H:(src + 1) * H, :].T)
        b_c = b_c.at[0, col:col + H].set(bias[src * H:(src + 1) * H])
    return wih_c, whh_c, b_c


def build_params(key, *, n_cnn_layers, n_rnn_dim, h_rnn_layer, n_rnn_layers,
                 n_classes):
    assert 2 * h_rnn_layer == n_rnn_dim
    assert 2 * n_classes - 1 <= HEAD_PAD
    H = h_rnn_layer
    keys = iter(jax.random.split(key, 256))

    # self.dense = Conv1d(500, 32, 1) -> block-diagonal (2000, 128)
    kd = 1.0 / (FREQ ** 0.5)
    wd = _uniform(next(keys), (CNN_CH, FREQ), kd)             # (out, in)
    bd = _uniform(next(keys), (CNN_CH,), kd)
    wd_bd = _block_diag(wd.T, PACK)
    bd_bd = jnp.tile(bd, PACK).reshape(1, LANES)

    # self.cnn = n x ResCNN(32, 32); BN PRECEDES conv1 inside ResCNN, so the
    # eval-mode fold scales conv1's INPUT columns and shifts its bias.
    kc = 1.0 / (CNN_CH ** 0.5)
    w1l, b1l, w2l, b2l = [], [], [], []
    for _ in range(n_cnn_layers):
        gamma = jnp.ones((CNN_CH,), jnp.float32)              # BN defaults
        beta = jnp.zeros((CNN_CH,), jnp.float32)
        mean = jnp.zeros((CNN_CH,), jnp.float32)
        var = jnp.ones((CNN_CH,), jnp.float32)
        w1 = _uniform(next(keys), (CNN_CH, CNN_CH), kc)
        b1 = _uniform(next(keys), (CNN_CH,), kc)
        w2 = _uniform(next(keys), (CNN_CH, CNN_CH), kc)
        b2 = _uniform(next(keys), (CNN_CH,), kc)
        s = gamma * lax.rsqrt(var + BN_EPS)                   # BN: y = s*x + t
        t = beta - mean * s
        w1l.append(_block_diag(w1.T * s[:, None], PACK))      # (128, 128)
        b1l.append(jnp.tile(b1 + w1 @ t, PACK).reshape(1, LANES))
        w2l.append(_block_diag(w2.T, PACK))
        b2l.append(jnp.tile(b2, PACK).reshape(1, LANES))
    w1_all = jnp.stack(w1l)
    b1_all = jnp.stack(b1l)
    w2_all = jnp.stack(w2l)
    b2_all = jnp.stack(b2l)

    # self.dense2 = Linear(32*40, n_rnn_dim) -> 10 grouped (128, n_rnn) blocks
    k2 = 1.0 / ((CNN_CH * WIDTH) ** 0.5)
    wd2 = _uniform(next(keys), (n_rnn_dim, CNN_CH * WIDTH), k2)
    b2d = _uniform(next(keys), (n_rnn_dim,), k2)
    w2d_g = jnp.transpose(wd2.reshape(n_rnn_dim, CNN_CH, W4, PACK),
                          (2, 3, 1, 0)).reshape(W4, LANES, n_rnn_dim)
    b2d_row = b2d.reshape(1, n_rnn_dim)

    # self.lstm = LSTM(n_rnn_dim, H, n_rnn_layers, bidirectional)
    kl = 1.0 / (H ** 0.5)
    lstm_flat = []
    for l in range(n_rnn_layers):
        in_l = n_rnn_dim if l == 0 else 2 * H
        packed = []
        for d in range(2):  # 0 = forward, 1 = backward
            w_ih = _uniform(next(keys), (4 * H, in_l), kl)
            w_hh = _uniform(next(keys), (4 * H, H), kl)
            b_ih = _uniform(next(keys), (4 * H,), kl)
            b_hh = _uniform(next(keys), (4 * H,), kl)
            packed.append(_pack_lstm_dir(w_ih, w_hh, b_ih, b_hh, d, H))
        (wihf, whhf, bf), (wihb, whhb, bb) = packed
        wih_cat = jnp.concatenate([wihf, wihb], axis=0)       # (2*in_l, 8H)
        whh_cat = jnp.concatenate([whhf, whhb], axis=0)       # (2H, 8H)
        lstm_flat += [wih_cat, whh_cat, bf + bb]

    # fcDep / fcAnx (= Linear + ReLU) merged into one zero-padded (2H, 128) head
    kh = 1.0 / (n_rnn_dim ** 0.5)
    wdep = _uniform(next(keys), (n_classes, n_rnn_dim), kh)
    bdep = _uniform(next(keys), (n_classes,), kh)
    wanx = _uniform(next(keys), (n_classes - 1, n_rnn_dim), kh)
    banx = _uniform(next(keys), (n_classes - 1,), kh)
    whead = jnp.zeros((2 * H, HEAD_PAD), jnp.float32)
    whead = whead.at[:, :n_classes].set(wdep.T)
    whead = whead.at[:, n_classes:2 * n_classes - 1].set(wanx.T)
    bhead = jnp.zeros((1, HEAD_PAD), jnp.float32)
    bhead = bhead.at[0, :n_classes].set(bdep)
    bhead = bhead.at[0, n_classes:2 * n_classes - 1].set(banx)

    return ([wd_bd, bd_bd, w1_all, b1_all, w2_all, b2_all, w2d_g, b2d_row]
            + lstm_flat + [whead, bhead])


# ---------------------------------------------------------------------------
if __name__ == "__main__":
    B = 2
    n_cnn_layers = 2
    n_rnn_dim = 32
    h_rnn_layer = 16   # the PyTorch module requires 2*h_rnn_layer == n_rnn_dim
    n_rnn_layers = 2
    n_classes = 4

    x = jax.random.normal(jax.random.PRNGKey(0), (B, FREQ, WIDTH), jnp.float32)
    params = build_params(jax.random.PRNGKey(42), n_cnn_layers=n_cnn_layers,
                          n_rnn_dim=n_rnn_dim, h_rnn_layer=h_rnn_layer,
                          n_rnn_layers=n_rnn_layers, n_classes=n_classes)

    phq8, gad7 = hydranet_forward(
        x, params, n_cnn_layers=n_cnn_layers, n_rnn_layers=n_rnn_layers,
        h_rnn_layer=h_rnn_layer, n_rnn_dim=n_rnn_dim, n_classes=n_classes)

    jax.block_until_ready((phq8, gad7))
    assert phq8.shape == (B, n_classes) and gad7.shape == (B, n_classes - 1)
    print("KERNEL_OK")
</pallas_src>

<mosaic_0001>
module attributes {stable_mosaic.version = 11 : i64} {
  func.func @hydranet_kernel(%arg0: memref<20x2000xf32, #tpu.memory_space<vmem>>, %arg1: memref<2x2xf32, #tpu.memory_space<vmem>>, %arg2: memref<2000x128xf32, #tpu.memory_space<vmem>>, %arg3: memref<1x128xf32, #tpu.memory_space<vmem>>, %arg4: memref<2x128x128xf32, #tpu.memory_space<vmem>>, %arg5: memref<2x1x128xf32, #tpu.memory_space<vmem>>, %arg6: memref<2x128x128xf32, #tpu.memory_space<vmem>>, %arg7: memref<2x1x128xf32, #tpu.memory_space<vmem>>, %arg8: memref<10x128x32xf32, #tpu.memory_space<vmem>>, %arg9: memref<1x32xf32, #tpu.memory_space<vmem>>, %arg10: memref<64x128xf32, #tpu.memory_space<vmem>>, %arg11: memref<32x128xf32, #tpu.memory_space<vmem>>, %arg12: memref<1x128xf32, #tpu.memory_space<vmem>>, %arg13: memref<64x128xf32, #tpu.memory_space<vmem>>, %arg14: memref<32x128xf32, #tpu.memory_space<vmem>>, %arg15: memref<1x128xf32, #tpu.memory_space<vmem>>, %arg16: memref<32x128xf32, #tpu.memory_space<vmem>>, %arg17: memref<1x128xf32, #tpu.memory_space<vmem>>, %arg18: memref<2x128xf32, #tpu.memory_space<vmem>>, %arg19: memref<2x128xf32, #tpu.memory_space<vmem>>, %arg20: memref<2x64xf32, #tpu.memory_space<vmem>>, %arg21: memref<2x32xf32, #tpu.memory_space<vmem>>, %arg22: memref<2x32xf32, #tpu.memory_space<vmem>>) attributes {dimension_semantics = [], scalar_prefetch = 0 : i64, scratch_operands = 4 : i64, tpu.core_type = #tpu.core_type<tc>} {
    %c0 = arith.constant 0 : index
    %c0_0 = arith.constant 0 : index
    %0 = vector.load %arg0[%c0, %c0_0] : memref<20x2000xf32, #tpu.memory_space<vmem>>, vector<20x2000xf32>
    %c0_1 = arith.constant 0 : index
    %c0_2 = arith.constant 0 : index
    %1 = vector.load %arg2[%c0_1, %c0_2] : memref<2000x128xf32, #tpu.memory_space<vmem>>, vector<2000x128xf32>
    %cst = arith.constant dense<0.000000e+00> : vector<20x128xf32>
    %2 = tpu.matmul %0, %1, %cst {dimension_numbers = #tpu.dot_dimension_numbers<[1], [0], [0], [1], [0, 0, 1, 1], [], []>} : vector<20x2000xf32>, vector<2000x128xf32>, vector<20x128xf32> -> vector<20x128xf32>
    %c0_3 = arith.constant 0 : index
    %c0_4 = arith.constant 0 : index
    %3 = vector.load %arg3[%c0_3, %c0_4] : memref<1x128xf32, #tpu.memory_space<vmem>>, vector<1x128xf32>
    %4 = vector.broadcast %3 : vector<1x128xf32> to vector<20x128xf32>
    %5 = arith.addf %2, %4 : vector<20x128xf32>
    %c0_5 = arith.constant 0 : index
    %c0_6 = arith.constant 0 : index
    %c0_7 = arith.constant 0 : index
    %6 = vector.load %arg4[%c0_5, %c0_6, %c0_7] : memref<2x128x128xf32, #tpu.memory_space<vmem>>, vector<1x128x128xf32>
    %7 = vector.shape_cast %6 : vector<1x128x128xf32> to vector<128x128xf32>
    %cst_8 = arith.constant dense<0.000000e+00> : vector<20x128xf32>
    %8 = tpu.matmul %5, %7, %cst_8 {dimension_numbers = #tpu.dot_dimension_numbers<[1], [0], [0], [1], [0, 0, 1, 1], [], []>} : vector<20x128xf32>, vector<128x128xf32>, vector<20x128xf32> -> vector<20x128xf32>
    %c0_9 = arith.constant 0 : index
    %c0_10 = arith.constant 0 : index
    %c0_11 = arith.constant 0 : index
    %9 = vector.load %arg5[%c0_9, %c0_10, %c0_11] : memref<2x1x128xf32, #tpu.memory_space<vmem>>, vector<1x1x128xf32>
    %10 = vector.shape_cast %9 : vector<1x1x128xf32> to vector<1x128xf32>
    %11 = vector.broadcast %10 : vector<1x128xf32> to vector<20x128xf32>
    %12 = arith.addf %8, %11 : vector<20x128xf32>
    %cst_12 = arith.constant 0.000000e+00 : f32
    %13 = vector.broadcast %cst_12 : f32 to vector<20x128xf32>
    %14 = arith.maximumf %12, %13 : vector<20x128xf32>
    %c0_13 = arith.constant 0 : index
    %c0_14 = arith.constant 0 : index
    %c0_15 = arith.constant 0 : index
    %15 = vector.load %arg6[%c0_13, %c0_14, %c0_15] : memref<2x128x128xf32, #tpu.memory_space<vmem>>, vector<1x128x128xf32>
    %16 = vector.shape_cast %15 : vector<1x128x128xf32> to vector<128x128xf32>
    %cst_16 = arith.constant dense<0.000000e+00> : vector<20x128xf32>
    %17 = tpu.matmul %14, %16, %cst_16 {dimension_numbers = #tpu.dot_dimension_numbers<[1], [0], [0], [1], [0, 0, 1, 1], [], []>} : vector<20x128xf32>, vector<128x128xf32>, vector<20x128xf32> -> vector<20x128xf32>
    %c0_17 = arith.constant 0 : index
    %c0_18 = arith.constant 0 : index
    %c0_19 = arith.constant 0 : index
    %18 = vector.load %arg7[%c0_17, %c0_18, %c0_19] : memref<2x1x128xf32, #tpu.memory_space<vmem>>, vector<1x1x128xf32>
    %19 = vector.shape_cast %18 : vector<1x1x128xf32> to vector<1x128xf32>
    %20 = vector.broadcast %19 : vector<1x128xf32> to vector<20x128xf32>
    %21 = arith.addf %17, %20 : vector<20x128xf32>
    %22 = arith.addf %21, %5 : vector<20x128xf32>
    %cst_20 = arith.constant 0.000000e+00 : f32
    %23 = vector.broadcast %cst_20 : f32 to vector<20x128xf32>
    %24 = arith.maximumf %22, %23 : vector<20x128xf32>
    %c1 = arith.constant 1 : index
    %c0_21 = arith.constant 0 : index
    %c0_22 = arith.constant 0 : index
    %25 = vector.load %arg4[%c1, %c0_21, %c0_22] : memref<2x128x128xf32, #tpu.memory_space<vmem>>, vector<1x128x128xf32>
    %26 = vector.shape_cast %25 : vector<1x128x128xf32> to vector<128x128xf32>
    %cst_23 = arith.constant dense<0.000000e+00> : vector<20x128xf32>
    %27 = tpu.matmul %24, %26, %cst_23 {dimension_numbers = #tpu.dot_dimension_numbers<[1], [0], [0], [1], [0, 0, 1, 1], [], []>} : vector<20x128xf32>, vector<128x128xf32>, vector<20x128xf32> -> vector<20x128xf32>
    %c1_24 = arith.constant 1 : index
    %c0_25 = arith.constant 0 : index
    %c0_26 = arith.constant 0 : index
    %28 = vector.load %arg5[%c1_24, %c0_25, %c0_26] : memref<2x1x128xf32, #tpu.memory_space<vmem>>, vector<1x1x128xf32>
    %29 = vector.shape_cast %28 : vector<1x1x128xf32> to vector<1x128xf32>
    %30 = vector.broadcast %29 : vector<1x128xf32> to vector<20x128xf32>
    %31 = arith.addf %27, %30 : vector<20x128xf32>
    %cst_27 = arith.constant 0.000000e+00 : f32
    %32 = vector.broadcast %cst_27 : f32 to vector<20x128xf32>
    %33 = arith.maximumf %31, %32 : vector<20x128xf32>
    %c1_28 = arith.constant 1 : index
    %c0_29 = arith.constant 0 : index
    %c0_30 = arith.constant 0 : index
    %34 = vector.load %arg6[%c1_28, %c0_29, %c0_30] : memref<2x128x128xf32, #tpu.memory_space<vmem>>, vector<1x128x128xf32>
    %35 = vector.shape_cast %34 : vector<1x128x128xf32> to vector<128x128xf32>
    %cst_31 = arith.constant dense<0.000000e+00> : vector<20x128xf32>
    %36 = tpu.matmul %33, %35, %cst_31 {dimension_numbers = #tpu.dot_dimension_numbers<[1], [0], [0], [1], [0, 0, 1, 1], [], []>} : vector<20x128xf32>, vector<128x128xf32>, vector<20x128xf32> -> vector<20x128xf32>
    %c1_32 = arith.constant 1 : index
    %c0_33 = arith.constant 0 : index
    %c0_34 = arith.constant 0 : index
    %37 = vector.load %arg7[%c1_32, %c0_33, %c0_34] : memref<2x1x128xf32, #tpu.memory_space<vmem>>, vector<1x1x128xf32>
    %38 = vector.shape_cast %37 : vector<1x1x128xf32> to vector<1x128xf32>
    %39 = vector.broadcast %38 : vector<1x128xf32> to vector<20x128xf32>
    %40 = arith.addf %36, %39 : vector<20x128xf32>
    %41 = arith.addf %40, %24 : vector<20x128xf32>
    %cst_35 = arith.constant 0.000000e+00 : f32
    %42 = vector.broadcast %cst_35 : f32 to vector<20x128xf32>
    %43 = arith.maximumf %41, %42 : vector<20x128xf32>
    %cst_36 = arith.constant 0.000000e+00 : f32
    %44 = vector.broadcast %cst_36 : f32 to vector<2x32xf32>
    %45 = vector.extract_strided_slice %43 {offsets = [0, 0], sizes = [2, 128], strides = [1, 1]} : vector<20x128xf32> to vector<2x128xf32>
    %c0_37 = arith.constant 0 : index
    %c0_38 = arith.constant 0 : index
    %c0_39 = arith.constant 0 : index
    %46 = vector.load %arg8[%c0_37, %c0_38, %c0_39] : memref<10x128x32xf32, #tpu.memory_space<vmem>>, vector<1x128x32xf32>
    %47 = vector.shape_cast %46 : vector<1x128x32xf32> to vector<128x32xf32>
    %cst_40 = arith.constant dense<0.000000e+00> : vector<2x32xf32>
    %48 = tpu.matmul %45, %47, %cst_40 {dimension_numbers = #tpu.dot_dimension_numbers<[1], [0], [0], [1], [0, 0, 1, 1], [], []>} : vector<2x128xf32>, vector<128x32xf32>, vector<2x32xf32> -> vector<2x32xf32>
    %49 = arith.addf %44, %48 : vector<2x32xf32>
    %50 = vector.extract_strided_slice %43 {offsets = [2, 0], sizes = [2, 128], strides = [1, 1]} : vector<20x128xf32> to vector<2x128xf32>
    %c1_41 = arith.constant 1 : index
    %c0_42 = arith.constant 0 : index
    %c0_43 = arith.constant 0 : index
    %51 = vector.load %arg8[%c1_41, %c0_42, %c0_43] : memref<10x128x32xf32, #tpu.memory_space<vmem>>, vector<1x128x32xf32>
    %52 = vector.shape_cast %51 : vector<1x128x32xf32> to vector<128x32xf32>
    %cst_44 = arith.constant dense<0.000000e+00> : vector<2x32xf32>
    %53 = tpu.matmul %50, %52, %cst_44 {dimension_numbers = #tpu.dot_dimension_numbers<[1], [0], [0], [1], [0, 0, 1, 1], [], []>} : vector<2x128xf32>, vector<128x32xf32>, vector<2x32xf32> -> vector<2x32xf32>
    %54 = arith.addf %49, %53 : vector<2x32xf32>
    %55 = vector.extract_strided_slice %43 {offsets = [4, 0], sizes = [2, 128], strides = [1, 1]} : vector<20x128xf32> to vector<2x128xf32>
    %c2 = arith.constant 2 : index
    %c0_45 = arith.constant 0 : index
    %c0_46 = arith.constant 0 : index
    %56 = vector.load %arg8[%c2, %c0_45, %c0_46] : memref<10x128x32xf32, #tpu.memory_space<vmem>>, vector<1x128x32xf32>
    %57 = vector.shape_cast %56 : vector<1x128x32xf32> to vector<128x32xf32>
    %cst_47 = arith.constant dense<0.000000e+00> : vector<2x32xf32>
    %58 = tpu.matmul %55, %57, %cst_47 {dimension_numbers = #tpu.dot_dimension_numbers<[1], [0], [0], [1], [0, 0, 1, 1], [], []>} : vector<2x128xf32>, vector<128x32xf32>, vector<2x32xf32> -> vector<2x32xf32>
    %59 = arith.addf %54, %58 : vector<2x32xf32>
    %60 = vector.extract_strided_slice %43 {offsets = [6, 0], sizes = [2, 128], strides = [1, 1]} : vector<20x128xf32> to vector<2x128xf32>
    %c3 = arith.constant 3 : index
    %c0_48 = arith.constant 0 : index
    %c0_49 = arith.constant 0 : index
    %61 = vector.load %arg8[%c3, %c0_48, %c0_49] : memref<10x128x32xf32, #tpu.memory_space<vmem>>, vector<1x128x32xf32>
    %62 = vector.shape_cast %61 : vector<1x128x32xf32> to vector<128x32xf32>
    %cst_50 = arith.constant dense<0.000000e+00> : vector<2x32xf32>
    %63 = tpu.matmul %60, %62, %cst_50 {dimension_numbers = #tpu.dot_dimension_numbers<[1], [0], [0], [1], [0, 0, 1, 1], [], []>} : vector<2x128xf32>, vector<128x32xf32>, vector<2x32xf32> -> vector<2x32xf32>
    %64 = arith.addf %59, %63 : vector<2x32xf32>
    %65 = vector.extract_strided_slice %43 {offsets = [8, 0], sizes = [2, 128], strides = [1, 1]} : vector<20x128xf32> to vector<2x128xf32>
    %c4 = arith.constant 4 : index
    %c0_51 = arith.constant 0 : index
    %c0_52 = arith.constant 0 : index
    %66 = vector.load %arg8[%c4, %c0_51, %c0_52] : memref<10x128x32xf32, #tpu.memory_space<vmem>>, vector<1x128x32xf32>
    %67 = vector.shape_cast %66 : vector<1x128x32xf32> to vector<128x32xf32>
    %cst_53 = arith.constant dense<0.000000e+00> : vector<2x32xf32>
    %68 = tpu.matmul %65, %67, %cst_53 {dimension_numbers = #tpu.dot_dimension_numbers<[1], [0], [0], [1], [0, 0, 1, 1], [], []>} : vector<2x128xf32>, vector<128x32xf32>, vector<2x32xf32> -> vector<2x32xf32>
    %69 = arith.addf %64, %68 : vector<2x32xf32>
    %70 = vector.extract_strided_slice %43 {offsets = [10, 0], sizes = [2, 128], strides = [1, 1]} : vector<20x128xf32> to vector<2x128xf32>
    %c5 = arith.constant 5 : index
    %c0_54 = arith.constant 0 : index
    %c0_55 = arith.constant 0 : index
    %71 = vector.load %arg8[%c5, %c0_54, %c0_55] : memref<10x128x32xf32, #tpu.memory_space<vmem>>, vector<1x128x32xf32>
    %72 = vector.shape_cast %71 : vector<1x128x32xf32> to vector<128x32xf32>
    %cst_56 = arith.constant dense<0.000000e+00> : vector<2x32xf32>
    %73 = tpu.matmul %70, %72, %cst_56 {dimension_numbers = #tpu.dot_dimension_numbers<[1], [0], [0], [1], [0, 0, 1, 1], [], []>} : vector<2x128xf32>, vector<128x32xf32>, vector<2x32xf32> -> vector<2x32xf32>
    %74 = arith.addf %69, %73 : vector<2x32xf32>
    %75 = vector.extract_strided_slice %43 {offsets = [12, 0], sizes = [2, 128], strides = [1, 1]} : vector<20x128xf32> to vector<2x128xf32>
    %c6 = arith.constant 6 : index
    %c0_57 = arith.constant 0 : index
    %c0_58 = arith.constant 0 : index
    %76 = vector.load %arg8[%c6, %c0_57, %c0_58] : memref<10x128x32xf32, #tpu.memory_space<vmem>>, vector<1x128x32xf32>
    %77 = vector.shape_cast %76 : vector<1x128x32xf32> to vector<128x32xf32>
    %cst_59 = arith.constant dense<0.000000e+00> : vector<2x32xf32>
    %78 = tpu.matmul %75, %77, %cst_59 {dimension_numbers = #tpu.dot_dimension_numbers<[1], [0], [0], [1], [0, 0, 1, 1], [], []>} : vector<2x128xf32>, vector<128x32xf32>, vector<2x32xf32> -> vector<2x32xf32>
    %79 = arith.addf %74, %78 : vector<2x32xf32>
    %80 = vector.extract_strided_slice %43 {offsets = [14, 0], sizes = [2, 128], strides = [1, 1]} : vector<20x128xf32> to vector<2x128xf32>
    %c7 = arith.constant 7 : index
    %c0_60 = arith.constant 0 : index
    %c0_61 = arith.constant 0 : index
    %81 = vector.load %arg8[%c7, %c0_60, %c0_61] : memref<10x128x32xf32, #tpu.memory_space<vmem>>, vector<1x128x32xf32>
    %82 = vector.shape_cast %81 : vector<1x128x32xf32> to vector<128x32xf32>
    %cst_62 = arith.constant dense<0.000000e+00> : vector<2x32xf32>
    %83 = tpu.matmul %80, %82, %cst_62 {dimension_numbers = #tpu.dot_dimension_numbers<[1], [0], [0], [1], [0, 0, 1, 1], [], []>} : vector<2x128xf32>, vector<128x32xf32>, vector<2x32xf32> -> vector<2x32xf32>
    %84 = arith.addf %79, %83 : vector<2x32xf32>
    %85 = vector.extract_strided_slice %43 {offsets = [16, 0], sizes = [2, 128], strides = [1, 1]} : vector<20x128xf32> to vector<2x128xf32>
    %c8 = arith.constant 8 : index
    %c0_63 = arith.constant 0 : index
    %c0_64 = arith.constant 0 : index
    %86 = vector.load %arg8[%c8, %c0_63, %c0_64] : memref<10x128x32xf32, #tpu.memory_space<vmem>>, vector<1x128x32xf32>
    %87 = vector.shape_cast %86 : vector<1x128x32xf32> to vector<128x32xf32>
    %cst_65 = arith.constant dense<0.000000e+00> : vector<2x32xf32>
    %88 = tpu.matmul %85, %87, %cst_65 {dimension_numbers = #tpu.dot_dimension_numbers<[1], [0], [0], [1], [0, 0, 1, 1], [], []>} : vector<2x128xf32>, vector<128x32xf32>, vector<2x32xf32> -> vector<2x32xf32>
    %89 = arith.addf %84, %88 : vector<2x32xf32>
    %90 = vector.extract_strided_slice %43 {offsets = [18, 0], sizes = [2, 128], strides = [1, 1]} : vector<20x128xf32> to vector<2x128xf32>
    %c9 = arith.constant 9 : index
    %c0_66 = arith.constant 0 : index
    %c0_67 = arith.constant 0 : index
    %91 = vector.load %arg8[%c9, %c0_66, %c0_67] : memref<10x128x32xf32, #tpu.memory_space<vmem>>, vector<1x128x32xf32>
    %92 = vector.shape_cast %91 : vector<1x128x32xf32> to vector<128x32xf32>
    %cst_68 = arith.constant dense<0.000000e+00> : vector<2x32xf32>
    %93 = tpu.matmul %90, %92, %cst_68 {dimension_numbers = #tpu.dot_dimension_numbers<[1], [0], [0], [1], [0, 0, 1, 1], [], []>} : vector<2x128xf32>, vector<128x32xf32>, vector<2x32xf32> -> vector<2x32xf32>
    %94 = arith.addf %89, %93 : vector<2x32xf32>
    %c0_69 = arith.constant 0 : index
    %c0_70 = arith.constant 0 : index
    %95 = vector.load %arg9[%c0_69, %c0_70] : memref<1x32xf32, #tpu.memory_space<vmem>>, vector<1x32xf32>
    %96 = vector.broadcast %95 : vector<1x32xf32> to vector<2x32xf32>
    %97 = arith.addf %94, %96 : vector<2x32xf32>
    %c0_71 = arith.constant 0 : index
    %c0_72 = arith.constant 0 : index
    %98 = vector.load %arg1[%c0_71, %c0_72] : memref<2x2xf32, #tpu.memory_space<vmem>>, vector<2x2xf32>
    %99 = tpu.iota {dimensions = array<i32: 1>} : vector<2x32xi32>
    %c16_i32 = arith.constant 16 : i32
    %100 = vector.broadcast %c16_i32 : i32 to vector<2x32xi32>
    %101 = arith.cmpi slt, %99, %100 : vector<2x32xi32>
    %cst_73 = arith.constant dense<0.000000e+00> : vector<2x32xf32>
    %102 = tpu.matmul %98, %97, %cst_73 {dimension_numbers = #tpu.dot_dimension_numbers<[1], [0], [0], [1], [0, 0, 1, 1], [], []>} : vector<2x2xf32>, vector<2x32xf32>, vector<2x32xf32> -> vector<2x32xf32>
    %c0_74 = arith.constant 0 : index
    %c0_75 = arith.constant 0 : index
    %103 = vector.load %arg20[%c0_74, %c0_75] : memref<2x64xf32, #tpu.memory_space<vmem>>, vector<2x32xf32>
    tpu.vector_store %arg20[%c0_74, %c0_75], %97 {strides = array<i32>} : memref<2x64xf32, #tpu.memory_space<vmem>>, vector<2x32xf32>,
    %c0_76 = arith.constant 0 : index
    %c32 = arith.constant 32 : index
    %104 = vector.load %arg20[%c0_76, %c32] : memref<2x64xf32, #tpu.memory_space<vmem>>, vector<2x32xf32>
    tpu.vector_store %arg20[%c0_76, %c32], %102 {strides = array<i32>} : memref<2x64xf32, #tpu.memory_space<vmem>>, vector<2x32xf32>,
    %c0_77 = arith.constant 0 : index
    %c0_78 = arith.constant 0 : index
    %105 = vector.load %arg20[%c0_77, %c0_78] : memref<2x64xf32, #tpu.memory_space<vmem>>, vector<2x64xf32>
    %c0_79 = arith.constant 0 : index
    %c0_80 = arith.constant 0 : index
    %106 = vector.load %arg10[%c0_79, %c0_80] : memref<64x128xf32, #tpu.memory_space<vmem>>, vector<64x128xf32>
    %cst_81 = arith.constant dense<0.000000e+00> : vector<2x128xf32>
    %107 = tpu.matmul %105, %106, %cst_81 {dimension_numbers = #tpu.dot_dimension_numbers<[1], [0], [0], [1], [0, 0, 1, 1], [], []>} : vector<2x64xf32>, vector<64x128xf32>, vector<2x128xf32> -> vector<2x128xf32>
    %c0_82 = arith.constant 0 : index
    %c0_83 = arith.constant 0 : index
    %108 = vector.load %arg12[%c0_82, %c0_83] : memref<1x128xf32, #tpu.memory_space<vmem>>, vector<1x128xf32>
    %109 = vector.broadcast %108 : vector<1x128xf32> to vector<2x128xf32>
    %110 = arith.addf %107, %109 : vector<2x128xf32>
    %c0_84 = arith.constant 0 : index
    %c0_85 = arith.constant 0 : index
    %111 = vector.load %arg19[%c0_84, %c0_85] : memref<2x128xf32, #tpu.memory_space<vmem>>, vector<2x128xf32>
    tpu.vector_store %arg19[%c0_84, %c0_85], %110 {strides = array<i32>} : memref<2x128xf32, #tpu.memory_space<vmem>>, vector<2x128xf32>,
    %c0_86 = arith.constant 0 : index
    %c0_87 = arith.constant 0 : index
    %112 = vector.load %arg11[%c0_86, %c0_87] : memref<32x128xf32, #tpu.memory_space<vmem>>, vector<32x128xf32>
    %cst_88 = arith.constant 0.000000e+00 : f32
    %113 = vector.broadcast %cst_88 : f32 to vector<1x32xf32>
    %cst_89 = arith.constant 0.000000e+00 : f32
    %114 = vector.broadcast %cst_89 : f32 to vector<1x32xf32>
    %c0_90 = arith.constant 0 : index
    %c0_91 = arith.constant 0 : index
    %115 = vector.load %arg19[%c0_90, %c0_91] : memref<2x128xf32, #tpu.memory_space<vmem>>, vector<1x128xf32>
    %cst_92 = arith.constant dense<0.000000e+00> : vector<1x128xf32>
    %116 = tpu.matmul %113, %112, %cst_92 {dimension_numbers = #tpu.dot_dimension_numbers<[1], [0], [0], [1], [0, 0, 1, 1], [], []>} : vector<1x32xf32>, vector<32x128xf32>, vector<1x128xf32> -> vector<1x128xf32>
    %117 = arith.addf %115, %116 : vector<1x128xf32>
    %118 = vector.extract_strided_slice %117 {offsets = [0, 0], sizes = [1, 96], strides = [1, 1]} : vector<1x128xf32> to vector<1x96xf32>
    %119 = arith.negf %118 : vector<1x96xf32>
    %120 = math.exp %119 : vector<1x96xf32>
    %cst_93 = arith.constant 1.000000e+00 : f32
    %121 = vector.broadcast %cst_93 : f32 to vector<1x96xf32>
    %122 = arith.addf %121, %120 : vector<1x96xf32>
    %123 = arith.divf %121, %122 : vector<1x96xf32>
    %124 = vector.extract_strided_slice %117 {offsets = [0, 96], sizes = [1, 32], strides = [1, 1]} : vector<1x128xf32> to vector<1x32xf32>
    %125 = math.tanh %124 : vector<1x32xf32>
    %126 = vector.extract_strided_slice %123 {offsets = [0, 32], sizes = [1, 32], strides = [1, 1]} : vector<1x96xf32> to vector<1x32xf32>
    %127 = arith.mulf %126, %114 : vector<1x32xf32>
    %128 = vector.extract_strided_slice %123 {offsets = [0, 0], sizes = [1, 32], strides = [1, 1]} : vector<1x96xf32> to vector<1x32xf32>
    %129 = arith.mulf %128, %125 : vector<1x32xf32>
    %130 = arith.addf %127, %129 : vector<1x32xf32>
    %131 = vector.extract_strided_slice %123 {offsets = [0, 64], sizes = [1, 32], strides = [1, 1]} : vector<1x96xf32> to vector<1x32xf32>
    %132 = math.tanh %130 : vector<1x32xf32>
    %133 = arith.mulf %131, %132 : vector<1x32xf32>
    %c0_94 = arith.constant 0 : index
    %c0_95 = arith.constant 0 : index
    %134 = vector.load %arg21[%c0_94, %c0_95] : memref<2x32xf32, #tpu.memory_space<vmem>>, vector<1x32xf32>
    tpu.vector_store %arg21[%c0_94, %c0_95], %133 {strides = array<i32>} : memref<2x32xf32, #tpu.memory_space<vmem>>, vector<1x32xf32>,
    %c1_96 = arith.constant 1 : index
    %c0_97 = arith.constant 0 : index
    %135 = vector.load %arg19[%c1_96, %c0_97] : memref<2x128xf32, #tpu.memory_space<vmem>>, vector<1x128xf32>
    %cst_98 = arith.constant dense<0.000000e+00> : vector<1x128xf32>
    %136 = tpu.matmul %133, %112, %cst_98 {dimension_numbers = #tpu.dot_dimension_numbers<[1], [0], [0], [1], [0, 0, 1, 1], [], []>} : vector<1x32xf32>, vector<32x128xf32>, vector<1x128xf32> -> vector<1x128xf32>
    %137 = arith.addf %135, %136 : vector<1x128xf32>
    %138 = vector.extract_strided_slice %137 {offsets = [0, 0], sizes = [1, 96], strides = [1, 1]} : vector<1x128xf32> to vector<1x96xf32>
    %139 = arith.negf %138 : vector<1x96xf32>
    %140 = math.exp %139 : vector<1x96xf32>
    %cst_99 = arith.constant 1.000000e+00 : f32
    %141 = vector.broadcast %cst_99 : f32 to vector<1x96xf32>
    %142 = arith.addf %141, %140 : vector<1x96xf32>
    %143 = arith.divf %141, %142 : vector<1x96xf32>
    %144 = vector.extract_strided_slice %137 {offsets = [0, 96], sizes = [1, 32], strides = [1, 1]} : vector<1x128xf32> to vector<1x32xf32>
    %145 = math.tanh %144 : vector<1x32xf32>
    %146 = vector.extract_strided_slice %143 {offsets = [0, 32], sizes = [1, 32], strides = [1, 1]} : vector<1x96xf32> to vector<1x32xf32>
    %147 = arith.mulf %146, %130 : vector<1x32xf32>
    %148 = vector.extract_strided_slice %143 {offsets = [0, 0], sizes = [1, 32], strides = [1, 1]} : vector<1x96xf32> to vector<1x32xf32>
    %149 = arith.mulf %148, %145 : vector<1x32xf32>
    %150 = arith.addf %147, %149 : vector<1x32xf32>
    %151 = vector.extract_strided_slice %143 {offsets = [0, 64], sizes = [1, 32], strides = [1, 1]} : vector<1x96xf32> to vector<1x32xf32>
    %152 = math.tanh %150 : vector<1x32xf32>
    %153 = arith.mulf %151, %152 : vector<1x32xf32>
    %c1_100 = arith.constant 1 : index
    %c0_101 = arith.constant 0 : index
    %154 = vector.load %arg21[%c1_100, %c0_101] : memref<2x32xf32, #tpu.memory_space<vmem>>, vector<1x32xf32>
    tpu.vector_store %arg21[%c1_100, %c0_101], %153 {strides = array<i32>} : memref<2x32xf32, #tpu.memory_space<vmem>>, vector<1x32xf32>,
    %c0_102 = arith.constant 0 : index
    %c0_103 = arith.constant 0 : index
    %155 = vector.load %arg21[%c0_102, %c0_103] : memref<2x32xf32, #tpu.memory_space<vmem>>, vector<2x32xf32>
    %cst_104 = arith.constant dense<0.000000e+00> : vector<2x32xf32>
    %156 = tpu.matmul %98, %155, %cst_104 {dimension_numbers = #tpu.dot_dimension_numbers<[1], [0], [0], [1], [0, 0, 1, 1], [], []>} : vector<2x2xf32>, vector<2x32xf32>, vector<2x32xf32> -> vector<2x32xf32>
    %157 = arith.select %101, %155, %156 : vector<2x32xi1>, vector<2x32xf32>
    %cst_105 = arith.constant dense<0.000000e+00> : vector<2x32xf32>
    %158 = tpu.matmul %98, %157, %cst_105 {dimension_numbers = #tpu.dot_dimension_numbers<[1], [0], [0], [1], [0, 0, 1, 1], [], []>} : vector<2x2xf32>, vector<2x32xf32>, vector<2x32xf32> -> vector<2x32xf32>
    %c0_106 = arith.constant 0 : index
    %c0_107 = arith.constant 0 : index
    %159 = vector.load %arg20[%c0_106, %c0_107] : memref<2x64xf32, #tpu.memory_space<vmem>>, vector<2x32xf32>
    tpu.vector_store %arg20[%c0_106, %c0_107], %157 {strides = array<i32>} : memref<2x64xf32, #tpu.memory_space<vmem>>, vector<2x32xf32>,
    %c0_108 = arith.constant 0 : index
    %c32_109 = arith.constant 32 : index
    %160 = vector.load %arg20[%c0_108, %c32_109] : memref<2x64xf32, #tpu.memory_space<vmem>>, vector<2x32xf32>
    tpu.vector_store %arg20[%c0_108, %c32_109], %158 {strides = array<i32>} : memref<2x64xf32, #tpu.memory_space<vmem>>, vector<2x32xf32>,
    %c0_110 = arith.constant 0 : index
    %c0_111 = arith.constant 0 : index
    %161 = vector.load %arg20[%c0_110, %c0_111] : memref<2x64xf32, #tpu.memory_space<vmem>>, vector<2x64xf32>
    %c0_112 = arith.constant 0 : index
    %c0_113 = arith.constant 0 : index
    %162 = vector.load %arg13[%c0_112, %c0_113] : memref<64x128xf32, #tpu.memory_space<vmem>>, vector<64x128xf32>
    %cst_114 = arith.constant dense<0.000000e+00> : vector<2x128xf32>
    %163 = tpu.matmul %161, %162, %cst_114 {dimension_numbers = #tpu.dot_dimension_numbers<[1], [0], [0], [1], [0, 0, 1, 1], [], []>} : vector<2x64xf32>, vector<64x128xf32>, vector<2x128xf32> -> vector<2x128xf32>
    %c0_115 = arith.constant 0 : index
    %c0_116 = arith.constant 0 : index
    %164 = vector.load %arg15[%c0_115, %c0_116] : memref<1x128xf32, #tpu.memory_space<vmem>>, vector<1x128xf32>
    %165 = vector.broadcast %164 : vector<1x128xf32> to vector<2x128xf32>
    %166 = arith.addf %163, %165 : vector<2x128xf32>
    %c0_117 = arith.constant 0 : index
    %c0_118 = arith.constant 0 : index
    %167 = vector.load %arg19[%c0_117, %c0_118] : memref<2x128xf32, #tpu.memory_space<vmem>>, vector<2x128xf32>
    tpu.vector_store %arg19[%c0_117, %c0_118], %166 {strides = array<i32>} : memref<2x128xf32, #tpu.memory_space<vmem>>, vector<2x128xf32>,
    %c0_119 = arith.constant 0 : index
    %c0_120 = arith.constant 0 : index
    %168 = vector.load %arg14[%c0_119, %c0_120] : memref<32x128xf32, #tpu.memory_space<vmem>>, vector<32x128xf32>
    %cst_121 = arith.constant 0.000000e+00 : f32
    %169 = vector.broadcast %cst_121 : f32 to vector<1x32xf32>
    %cst_122 = arith.constant 0.000000e+00 : f32
    %170 = vector.broadcast %cst_122 : f32 to vector<1x32xf32>
    %c0_123 = arith.constant 0 : index
    %c0_124 = arith.constant 0 : index
    %171 = vector.load %arg19[%c0_123, %c0_124] : memref<2x128xf32, #tpu.memory_space<vmem>>, vector<1x128xf32>
    %cst_125 = arith.constant dense<0.000000e+00> : vector<1x128xf32>
    %172 = tpu.matmul %169, %168, %cst_125 {dimension_numbers = #tpu.dot_dimension_numbers<[1], [0], [0], [1], [0, 0, 1, 1], [], []>} : vector<1x32xf32>, vector<32x128xf32>, vector<1x128xf32> -> vector<1x128xf32>
    %173 = arith.addf %171, %172 : vector<1x128xf32>
    %174 = vector.extract_strided_slice %173 {offsets = [0, 0], sizes = [1, 96], strides = [1, 1]} : vector<1x128xf32> to vector<1x96xf32>
    %175 = arith.negf %174 : vector<1x96xf32>
    %176 = math.exp %175 : vector<1x96xf32>
    %cst_126 = arith.constant 1.000000e+00 : f32
    %177 = vector.broadcast %cst_126 : f32 to vector<1x96xf32>
    %178 = arith.addf %177, %176 : vector<1x96xf32>
    %179 = arith.divf %177, %178 : vector<1x96xf32>
    %180 = vector.extract_strided_slice %173 {offsets = [0, 96], sizes = [1, 32], strides = [1, 1]} : vector<1x128xf32> to vector<1x32xf32>
    %181 = math.tanh %180 : vector<1x32xf32>
    %182 = vector.extract_strided_slice %179 {offsets = [0, 32], sizes = [1, 32], strides = [1, 1]} : vector<1x96xf32> to vector<1x32xf32>
    %183 = arith.mulf %182, %170 : vector<1x32xf32>
    %184 = vector.extract_strided_slice %179 {offsets = [0, 0], sizes = [1, 32], strides = [1, 1]} : vector<1x96xf32> to vector<1x32xf32>
    %185 = arith.mulf %184, %181 : vector<1x32xf32>
    %186 = arith.addf %183, %185 : vector<1x32xf32>
    %187 = vector.extract_strided_slice %179 {offsets = [0, 64], sizes = [1, 32], strides = [1, 1]} : vector<1x96xf32> to vector<1x32xf32>
    %188 = math.tanh %186 : vector<1x32xf32>
    %189 = arith.mulf %187, %188 : vector<1x32xf32>
    %c0_127 = arith.constant 0 : index
    %c0_128 = arith.constant 0 : index
    %190 = vector.load %arg22[%c0_127, %c0_128] : memref<2x32xf32, #tpu.memory_space<vmem>>, vector<1x32xf32>
    tpu.vector_store %arg22[%c0_127, %c0_128], %189 {strides = array<i32>} : memref<2x32xf32, #tpu.memory_space<vmem>>, vector<1x32xf32>,
    %c1_129 = arith.constant 1 : index
    %c0_130 = arith.constant 0 : index
    %191 = vector.load %arg19[%c1_129, %c0_130] : memref<2x128xf32, #tpu.memory_space<vmem>>, vector<1x128xf32>
    %cst_131 = arith.constant dense<0.000000e+00> : vector<1x128xf32>
    %192 = tpu.matmul %189, %168, %cst_131 {dimension_numbers = #tpu.dot_dimension_numbers<[1], [0], [0], [1], [0, 0, 1, 1], [], []>} : vector<1x32xf32>, vector<32x128xf32>, vector<1x128xf32> -> vector<1x128xf32>
    %193 = arith.addf %191, %192 : vector<1x128xf32>
    %194 = vector.extract_strided_slice %193 {offsets = [0, 0], sizes = [1, 96], strides = [1, 1]} : vector<1x128xf32> to vector<1x96xf32>
    %195 = arith.negf %194 : vector<1x96xf32>
    %196 = math.exp %195 : vector<1x96xf32>
    %cst_132 = arith.constant 1.000000e+00 : f32
    %197 = vector.broadcast %cst_132 : f32 to vector<1x96xf32>
    %198 = arith.addf %197, %196 : vector<1x96xf32>
    %199 = arith.divf %197, %198 : vector<1x96xf32>
    %200 = vector.extract_strided_slice %193 {offsets = [0, 96], sizes = [1, 32], strides = [1, 1]} : vector<1x128xf32> to vector<1x32xf32>
    %201 = math.tanh %200 : vector<1x32xf32>
    %202 = vector.extract_strided_slice %199 {offsets = [0, 32], sizes = [1, 32], strides = [1, 1]} : vector<1x96xf32> to vector<1x32xf32>
    %203 = arith.mulf %202, %186 : vector<1x32xf32>
    %204 = vector.extract_strided_slice %199 {offsets = [0, 0], sizes = [1, 32], strides = [1, 1]} : vector<1x96xf32> to vector<1x32xf32>
    %205 = arith.mulf %204, %201 : vector<1x32xf32>
    %206 = arith.addf %203, %205 : vector<1x32xf32>
    %207 = vector.extract_strided_slice %199 {offsets = [0, 64], sizes = [1, 32], strides = [1, 1]} : vector<1x96xf32> to vector<1x32xf32>
    %208 = math.tanh %206 : vector<1x32xf32>
    %209 = arith.mulf %207, %208 : vector<1x32xf32>
    %c1_133 = arith.constant 1 : index
    %c0_134 = arith.constant 0 : index
    %210 = vector.load %arg22[%c1_133, %c0_134] : memref<2x32xf32, #tpu.memory_space<vmem>>, vector<1x32xf32>
    tpu.vector_store %arg22[%c1_133, %c0_134], %209 {strides = array<i32>} : memref<2x32xf32, #tpu.memory_space<vmem>>, vector<1x32xf32>,
    %c0_135 = arith.constant 0 : index
    %c0_136 = arith.constant 0 : index
    %211 = vector.load %arg22[%c0_135, %c0_136] : memref<2x32xf32, #tpu.memory_space<vmem>>, vector<2x32xf32>
    %cst_137 = arith.constant dense<0.000000e+00> : vector<2x32xf32>
    %212 = tpu.matmul %98, %211, %cst_137 {dimension_numbers = #tpu.dot_dimension_numbers<[1], [0], [0], [1], [0, 0, 1, 1], [], []>} : vector<2x2xf32>, vector<2x32xf32>, vector<2x32xf32> -> vector<2x32xf32>
    %213 = arith.select %101, %211, %212 : vector<2x32xi1>, vector<2x32xf32>
    %c0_138 = arith.constant 0 : index
    %c0_139 = arith.constant 0 : index
    %214 = vector.load %arg16[%c0_138, %c0_139] : memref<32x128xf32, #tpu.memory_space<vmem>>, vector<32x128xf32>
    %cst_140 = arith.constant dense<0.000000e+00> : vector<2x128xf32>
    %215 = tpu.matmul %213, %214, %cst_140 {dimension_numbers = #tpu.dot_dimension_numbers<[1], [0], [0], [1], [0, 0, 1, 1], [], []>} : vector<2x32xf32>, vector<32x128xf32>, vector<2x128xf32> -> vector<2x128xf32>
    %c0_141 = arith.constant 0 : index
    %c0_142 = arith.constant 0 : index
    %216 = vector.load %arg17[%c0_141, %c0_142] : memref<1x128xf32, #tpu.memory_space<vmem>>, vector<1x128xf32>
    %217 = vector.broadcast %216 : vector<1x128xf32> to vector<2x128xf32>
    %218 = arith.addf %215, %217 : vector<2x128xf32>
    %cst_143 = arith.constant 0.000000e+00 : f32
    %219 = vector.broadcast %cst_143 : f32 to vector<2x128xf32>
    %220 = arith.maximumf %218, %219 : vector<2x128xf32>
    %c0_144 = arith.constant 0 : index
    %c0_145 = arith.constant 0 : index
    %221 = vector.load %arg18[%c0_144, %c0_145] : memref<2x128xf32, #tpu.memory_space<vmem>>, vector<2x128xf32>
    tpu.vector_store %arg18[%c0_144, %c0_145], %220 {strides = array<i32>} : memref<2x128xf32, #tpu.memory_space<vmem>>, vector<2x128xf32>,
    return
  }
}

</mosaic_0001>

<llo_original>
// kernel: tpu_custom_call.1
$region0: #{tpu_custom_call.1}
  #allocation0 [shape = 'u32[]', space=smem, size = 0x4, offset = 0x4, fixed_abs, tag = 'smem constant byte address 0x4 - core index']
  #allocation1 [shape = 'u32[144,128]{1,0:T(1,128)}', space=vmem, size = 0x12000, scoped, tag = 'internal scratch']
  #allocation2 [shape = 'f32[2,128]{1,0:T(2,128)}', space=vmem, size = 0x400, scoped, tag = 'scratch operand']
  #allocation3 [shape = 'f32[2,64]{1,0:T(2,128)}', space=vmem, size = 0x400, scoped, tag = 'scratch operand']
  #allocation4 [shape = 'f32[2,32]{1,0:T(2,128)}', space=vmem, size = 0x400, scoped, tag = 'scratch operand']
  #allocation5 [shape = 'f32[2,32]{1,0:T(2,128)}', space=vmem, size = 0x400, scoped, tag = 'scratch operand']
  %s0 = inlined_call_operand.vmem [shape: f32[20,2000], index: 0, kind: input, shape index: {}]
  %s1 = inlined_call_operand.vmem [shape: f32[2,2], index: 1, kind: input, shape index: {}]
  %s2 = inlined_call_operand.hbm [shape: f32[2000,128], index: 2, kind: input, shape index: {}]
  %s3 = inlined_call_operand.vmem [shape: f32[1,128], index: 3, kind: input, shape index: {}]
  %s4 = inlined_call_operand.vmem [shape: f32[2,128,128], index: 4, kind: input, shape index: {}]
  %s5 = inlined_call_operand.vmem [shape: f32[2,1,128], index: 5, kind: input, shape index: {}]
  %s6 = inlined_call_operand.vmem [shape: f32[2,128,128], index: 6, kind: input, shape index: {}]
  %s7 = inlined_call_operand.vmem [shape: f32[2,1,128], index: 7, kind: input, shape index: {}]
  %s8 = inlined_call_operand.vmem [shape: f32[10,128,32], index: 8, kind: input, shape index: {}]
  %s9 = inlined_call_operand.vmem [shape: f32[1,32], index: 9, kind: input, shape index: {}]
  %s10 = inlined_call_operand.vmem [shape: f32[64,128], index: 10, kind: input, shape index: {}]
  %s11 = inlined_call_operand.vmem [shape: f32[32,128], index: 11, kind: input, shape index: {}]
  %s12 = inlined_call_operand.vmem [shape: f32[1,128], index: 12, kind: input, shape index: {}]
  %s13 = inlined_call_operand.vmem [shape: f32[64,128], index: 13, kind: input, shape index: {}]
  %s14 = inlined_call_operand.vmem [shape: f32[32,128], index: 14, kind: input, shape index: {}]
  %s15 = inlined_call_operand.vmem [shape: f32[1,128], index: 15, kind: input, shape index: {}]
  %s16 = inlined_call_operand.vmem [shape: f32[32,128], index: 16, kind: input, shape index: {}]
  %s17 = inlined_call_operand.vmem [shape: f32[1,128], index: 17, kind: input, shape index: {}]
  %s18 = inlined_call_operand.hbm [shape: f32[2,128], index: 18, kind: output, shape index: {}]
  %s19 = sld [smem:[#allocation0]]
  $region86: #{tpu_custom_call.1} parent=0
    _
  %s21 = ssub.s32 1, %s19
  %s22 = scalar_select 0, %s21, %s19
  $region1: #{tpu_custom_call.1} parent=0
    #allocation6 [shape = 'u8[1024000]{0}', space=vmem, size = 0xfa000, scoped, tag = 'input window, operand 2, single buffered']
    #allocation7 [shape = 's32[1]{0}', space=sflag, size = 0x4, scoped, tag = 'scoped memory for tpu_custom_call.1']
    #allocation8 [shape = 's32[1]{0}', space=sflag, size = 0x4, scoped, tag = 'scoped memory for tpu_custom_call.1']
    #allocation9 [shape = 'u8[1024]{0}', space=vmem, size = 0x400, scoped, tag = 'output window, operand 0, single buffered']
    %23 = vsyncpa [#allocation7], 0
    %24 = vsyncpa [#allocation8], 0
    // Predicated region
    $region2: #{tpu_custom_call.1} parent=1 // pred_check
      _
    $region3: #{tpu_custom_call.1} parent=1 // pred_check_branch
      %26 = sbr.rel (0) target = $region5
    $region4: #{tpu_custom_call.1} parent=1 // pred_region
      _
    $region5: #{tpu_custom_call.1} parent=1 // pred_fallthru
      _
    // Predicated region
    $region6: #{tpu_custom_call.1} parent=1 // pred_check
      _
    $region7: #{tpu_custom_call.1} parent=1 // pred_check_branch
      %28 = sbr.rel (0) target = $region9
    $region8: #{tpu_custom_call.1} parent=1 // pred_region
      _
    $region9: #{tpu_custom_call.1} parent=1 // pred_fallthru
      _
    // Predicated region
    $region10: #{tpu_custom_call.1} parent=1 // pred_check
      _
    $region11: #{tpu_custom_call.1} parent=1 // pred_check_branch
      %30 = sbr.rel (0) target = $region13
    $region12: #{tpu_custom_call.1} parent=1 // pred_region
      %s32 = ssub.s32 32000, 32000
      %33 = vsyncadd [#allocation7], %s32
      %s34 = sshll.u32 [#allocation6], 4
      %s35 = int_to_ptr.vmem [resolvable:$true] %s34
      %40 = dma.hbm_to_vmem [thread:$0]  %s2, 32000, %s35, [#allocation7], 128, 128, 8
    $region13: #{tpu_custom_call.1} parent=1 // pred_fallthru
      _
    // Predicated region
    $region14: #{tpu_custom_call.1} parent=1 // pred_check
      _
    $region15: #{tpu_custom_call.1} parent=1 // pred_check_branch
      %42 = sbr.rel (0) target = $region17
    $region16: #{tpu_custom_call.1} parent=1 // pred_region
      _
    $region17: #{tpu_custom_call.1} parent=1 // pred_fallthru
      _
    // Predicated region
    $region18: #{tpu_custom_call.1} parent=1 // pred_check
      _
    $region19: #{tpu_custom_call.1} parent=1 // pred_check_branch
      %44 = sbr.rel (0) target = $region21
    $region20: #{tpu_custom_call.1} parent=1 // pred_region
      _
    $region21: #{tpu_custom_call.1} parent=1 // pred_fallthru
      _
    // Predicated region
    $region22: #{tpu_custom_call.1} parent=1 // pred_check
      _
    $region23: #{tpu_custom_call.1} parent=1 // pred_check_branch
      %46 = sbr.rel (0) target = $region25
    $region24: #{tpu_custom_call.1} parent=1 // pred_region
      _
    $region25: #{tpu_custom_call.1} parent=1 // pred_fallthru
      _
    // Predicated region
    $region26: #{tpu_custom_call.1} parent=1 // pred_check
      _
    $region27: #{tpu_custom_call.1} parent=1 // pred_check_branch
      %48 = sbr.rel (0) target = $region29
    $region28: #{tpu_custom_call.1} parent=1 // pred_region
      _
    $region29: #{tpu_custom_call.1} parent=1 // pred_fallthru
      _
    // Predicated region
    $region30: #{tpu_custom_call.1} parent=1 // pred_check
      _
    $region31: #{tpu_custom_call.1} parent=1 // pred_check_branch
      %50 = sbr.rel (0) target = $region33
    $region32: #{tpu_custom_call.1} parent=1 // pred_region
      _
    $region33: #{tpu_custom_call.1} parent=1 // pred_fallthru
      _
    // Predicated region
    $region34: #{tpu_custom_call.1} parent=1 // pred_check
      _
    $region35: #{tpu_custom_call.1} parent=1 // pred_check_branch
      %52 = sbr.rel (0) target = $region37
    $region36: #{tpu_custom_call.1} parent=1 // pred_region
      _
    $region37: #{tpu_custom_call.1} parent=1 // pred_fallthru
      _
    // Predicated region
    $region38: #{tpu_custom_call.1} parent=1 // pred_check
      _
    $region39: #{tpu_custom_call.1} parent=1 // pred_check_branch
      %54 = sbr.rel (0) target = $region41
    $region40: #{tpu_custom_call.1} parent=1 // pred_region
      _
    $region41: #{tpu_custom_call.1} parent=1 // pred_fallthru
      _
    // Predicated region
    $region42: #{tpu_custom_call.1} parent=1 // pred_check
      _
    $region43: #{tpu_custom_call.1} parent=1 // pred_check_branch
      %56 = sbr.rel (0) target = $region45
    $region44: #{tpu_custom_call.1} parent=1 // pred_region
      _
    $region45: #{tpu_custom_call.1} parent=1 // pred_fallthru
      _
    // Predicated region
    $region46: #{tpu_custom_call.1} parent=1 // pred_check
      _
    $region47: #{tpu_custom_call.1} parent=1 // pred_check_branch
      %58 = sbr.rel (0) target = $region49
    $region48: #{tpu_custom_call.1} parent=1 // pred_region
      _
    $region49: #{tpu_custom_call.1} parent=1 // pred_fallthru
      _
    // Predicated region
    $region50: #{tpu_custom_call.1} parent=1 // pred_check
      _
    $region51: #{tpu_custom_call.1} parent=1 // pred_check_branch
      %60 = sbr.rel (0) target = $region53
    $region52: #{tpu_custom_call.1} parent=1 // pred_region
      _
    $region53: #{tpu_custom_call.1} parent=1 // pred_fallthru
      _
    // Predicated region
    $region54: #{tpu_custom_call.1} parent=1 // pred_check
      _
    $region55: #{tpu_custom_call.1} parent=1 // pred_check_branch
      %62 = sbr.rel (0) target = $region57
    $region56: #{tpu_custom_call.1} parent=1 // pred_region
      _
    $region57: #{tpu_custom_call.1} parent=1 // pred_fallthru
      _
    // Predicated region
    $region58: #{tpu_custom_call.1} parent=1 // pred_check
      _
    $region59: #{tpu_custom_call.1} parent=1 // pred_check_branch
      %64 = sbr.rel (0) target = $region61
    $region60: #{tpu_custom_call.1} parent=1 // pred_region
      _
    $region61: #{tpu_custom_call.1} parent=1 // pred_fallthru
      _
    // Predicated region
    $region62: #{tpu_custom_call.1} parent=1 // pred_check
      _
    $region63: #{tpu_custom_call.1} parent=1 // pred_check_branch
      %66 = sbr.rel (0) target = $region65
    $region64: #{tpu_custom_call.1} parent=1 // pred_region
      _
    $region65: #{tpu_custom_call.1} parent=1 // pred_fallthru
      _
    // Predicated region
    $region66: #{tpu_custom_call.1} parent=1 // pred_check
      _
    $region67: #{tpu_custom_call.1} parent=1 // pred_check_branch
      %68 = sbr.rel (0) target = $region69
    $region68: #{tpu_custom_call.1} parent=1 // pred_region
      _
    $region69: #{tpu_custom_call.1} parent=1 // pred_fallthru
      _
    // Predicated region
    $region70: #{tpu_custom_call.1} parent=1 // pred_check
      _
    $region71: #{tpu_custom_call.1} parent=1 // pred_check_branch
      %70 = sbr.rel (0) target = $region73
    $region72: #{tpu_custom_call.1} parent=1 // pred_region
      _
    $region73: #{tpu_custom_call.1} parent=1 // pred_fallthru
      _
    // Predicated region
    $region74: #{tpu_custom_call.1} parent=1 // pred_check
      _
    $region75: #{tpu_custom_call.1} parent=1 // pred_check_branch
      %72 = sbr.rel (0) target = $region77
    $region76: #{tpu_custom_call.1} parent=1 // pred_region
      %73 = dma.done [#allocation7], 32000
    $region77: #{tpu_custom_call.1} parent=1 // pred_fallthru
      _
    %v74 = vld [vmem:[%s0] sm:$0xff]
    %v75 = vld [vmem:[%s0 + $0x8] sm:$0xff]
    %v76 = vld [vmem:[%s0 + $0x10] sm:$0xff]
    %v77 = vld [vmem:[%s0 + $0x18] sm:$0xff]
    %v78 = vld [vmem:[%s0 + $0x20] sm:$0xff]
    %v79 = vld [vmem:[%s0 + $0x28] sm:$0xff]
    %v80 = vld [vmem:[%s0 + $0x30] sm:$0xff]
    %v81 = vld [vmem:[%s0 + $0x38] sm:$0xff]
    %v82 = vld [vmem:[%s0 + $0x40] sm:$0xff]
    %v83 = vld [vmem:[%s0 + $0x48] sm:$0xff]
    %v84 = vld [vmem:[%s0 + $0x50] sm:$0xff]
    %v85 = vld [vmem:[%s0 + $0x58] sm:$0xff]
    %v86 = vld [vmem:[%s0 + $0x60] sm:$0xff]
    %v87 = vld [vmem:[%s0 + $0x68] sm:$0xff]
    %v88 = vld [vmem:[%s0 + $0x70] sm:$0xff]
    %v89 = vld [vmem:[%s0 + $0x78] sm:$0xff]
    %v90 = vld [vmem:[%s0 + $0x80] sm:$0xff]
    %v91 = vld [vmem:[%s0 + $0x88] sm:$0xff]
    %v92 = vld [vmem:[%s0 + $0x90] sm:$0xff]
    %v93 = vld [vmem:[%s0 + $0x98] sm:$0xff]
    %v94 = vld [vmem:[%s0 + $0xa0] sm:$0xff]
    %v95 = vld [vmem:[%s0 + $0xa8] sm:$0xff]
    %v96 = vld [vmem:[%s0 + $0xb0] sm:$0xff]
    %v97 = vld [vmem:[%s0 + $0xb8] sm:$0xff]
    %v98 = vld [vmem:[%s0 + $0xc0] sm:$0xff]
    %v99 = vld [vmem:[%s0 + $0xc8] sm:$0xff]
    %v100 = vld [vmem:[%s0 + $0xd0] sm:$0xff]
    %v101 = vld [vmem:[%s0 + $0xd8] sm:$0xff]
    %v102 = vld [vmem:[%s0 + $0xe0] sm:$0xff]
    %v103 = vld [vmem:[%s0 + $0xe8] sm:$0xff]
    %v104 = vld [vmem:[%s0 + $0xf0] sm:$0xff]
    %v105 = vld [vmem:[%s0 + $0xf8] sm:$0xff]
    %v106 = vld [vmem:[%s0 + $0x100] sm:$0xf]
    %v107 = vld [vmem:[%s0 + $0x108] sm:$0xf]
    %v108 = vld [vmem:[%s0 + $0x110] sm:$0xf]
    %v109 = vld [vmem:[%s0 + $0x118] sm:$0xf]
    %v110 = vld [vmem:[%s0 + $0x120] sm:$0xf]
    %v111 = vld [vmem:[%s0 + $0x128] sm:$0xf]
    %v112 = vld [vmem:[%s0 + $0x130] sm:$0xf]
    %v113 = vld [vmem:[%s0 + $0x138] sm:$0xf]
    %v114 = vld [vmem:[%s0 + $0x140] sm:$0xf]
    %v115 = vld [vmem:[%s0 + $0x148] sm:$0xf]
    %v116 = vld [vmem:[%s0 + $0x150] sm:$0xf]
    %v117 = vld [vmem:[%s0 + $0x158] sm:$0xf]
    %v118 = vld [vmem:[%s0 + $0x160] sm:$0xf]
    %v119 = vld [vmem:[%s0 + $0x168] sm:$0xf]
    %v120 = vld [vmem:[%s0 + $0x170] sm:$0xf]
    %v121 = vld [vmem:[%s0 + $0x178] sm:$0xf]
    %v122 = vld [vmem:[#allocation6] sm:$0xff]
    %v123 = vld [vmem:[#allocation6 + $0x8] sm:$0xff]
    %v124 = vld [vmem:[#allocation6 + $0x10] sm:$0xff]
    %v125 = vld [vmem:[#allocation6 + $0x18] sm:$0xff]
    %v126 = vld [vmem:[#allocation6 + $0x20] sm:$0xff]
    %v127 = vld [vmem:[#allocation6 + $0x28] sm:$0xff]
    %v128 = vld [vmem:[#allocation6 + $0x30] sm:$0xff]
    %v129 = vld [vmem:[#allocation6 + $0x38] sm:$0xff]
    %v130 = vld [vmem:[#allocation6 + $0x40] sm:$0xff]
    %v131 = vld [vmem:[#allocation6 + $0x48] sm:$0xff]
    %v132 = vld [vmem:[#allocation6 + $0x50] sm:$0xff]
    %v133 = vld [vmem:[#allocation6 + $0x58] sm:$0xff]
    %v134 = vld [vmem:[#allocation6 + $0x60] sm:$0xff]
    %v135 = vld [vmem:[#allocation6 + $0x68] sm:$0xff]
    %v136 = vld [vmem:[#allocation6 + $0x70] sm:$0xff]
    %v137 = vld [vmem:[#allocation6 + $0x78] sm:$0xff]
    %v138 = vld [vmem:[#allocation6 + $0x80] sm:$0xff]
    %v139 = vld [vmem:[#allocation6 + $0x88] sm:$0xff]
    %v140 = vld [vmem:[#allocation6 + $0x90] sm:$0xff]
    %v141 = vld [vmem:[#allocation6 + $0x98] sm:$0xff]
    %v142 = vld [vmem:[#allocation6 + $0xa0] sm:$0xff]
    %v143 = vld [vmem:[#allocation6 + $0xa8] sm:$0xff]
    %v144 = vld [vmem:[#allocation6 + $0xb0] sm:$0xff]
    %v145 = vld [vmem:[#allocation6 + $0xb8] sm:$0xff]
    %v146 = vld [vmem:[#allocation6 + $0xc0] sm:$0xff]
    %v147 = vld [vmem:[#allocation6 + $0xc8] sm:$0xff]
    %v148 = vld [vmem:[#allocation6 + $0xd0] sm:$0xff]
    %v149 = vld [vmem:[#allocation6 + $0xd8] sm:$0xff]
    %v150 = vld [vmem:[#allocation6 + $0xe0] sm:$0xff]
    %v151 = vld [vmem:[#allocation6 + $0xe8] sm:$0xff]
    %v152 = vld [vmem:[#allocation6 + $0xf0] sm:$0xff]
    %v153 = vld [vmem:[#allocation6 + $0xf8] sm:$0xff]
    %v154 = vld [vmem:[#allocation6 + $0x100] sm:$0xff]
    %v155 = vld [vmem:[#allocation6 + $0x108] sm:$0xff]
    %v156 = vld [vmem:[#allocation6 + $0x110] sm:$0xff]
    %v157 = vld [vmem:[#allocation6 + $0x118] sm:$0xff]
    %v158 = vld [vmem:[#allocation6 + $0x120] sm:$0xff]
    %v159 = vld [vmem:[#allocation6 + $0x128] sm:$0xff]
    %v160 = vld [vmem:[#allocation6 + $0x130] sm:$0xff]
    %v161 = vld [vmem:[#allocation6 + $0x138] sm:$0xff]
    %v162 = vld [vmem:[#allocation6 + $0x140] sm:$0xff]
    %v163 = vld [vmem:[#allocation6 + $0x148] sm:$0xff]
    %v164 = vld [vmem:[#allocation6 + $0x150] sm:$0xff]
    %v165 = vld [vmem:[#allocation6 + $0x158] sm:$0xff]
    %v166 = vld [vmem:[#allocation6 + $0x160] sm:$0xff]
    %v167 = vld [vmem:[#allocation6 + $0x168] sm:$0xff]
    %v168 = vld [vmem:[#allocation6 + $0x170] sm:$0xff]
    %v169 = vld [vmem:[#allocation6 + $0x178] sm:$0xff]
    %v170 = vld [vmem:[#allocation6 + $0x180] sm:$0xff]
    %v171 = vld [vmem:[#allocation6 + $0x188] sm:$0xff]
    %v172 = vld [vmem:[#allocation6 + $0x190] sm:$0xff]
    %v173 = vld [vmem:[#allocation6 + $0x198] sm:$0xff]
    %v174 = vld [vmem:[#allocation6 + $0x1a0] sm:$0xff]
    %v175 = vld [vmem:[#allocation6 + $0x1a8] sm:$0xff]
    %v176 = vld [vmem:[#allocation6 + $0x1b0] sm:$0xff]
    %v177 = vld [vmem:[#allocation6 + $0x1b8] sm:$0xff]
    %v178 = vld [vmem:[#allocation6 + $0x1c0] sm:$0xff]
    %v179 = vld [vmem:[#allocation6 + $0x1c8] sm:$0xff]
    %v180 = vld [vmem:[#allocation6 + $0x1d0] sm:$0xff]
    %v181 = vld [vmem:[#allocation6 + $0x1d8] sm:$0xff]
    %v182 = vld [vmem:[#allocation6 + $0x1e0] sm:$0xff]
    %v183 = vld [vmem:[#allocation6 + $0x1e8] sm:$0xff]
    %v184 = vld [vmem:[#allocation6 + $0x1f0] sm:$0xff]
    %v185 = vld [vmem:[#allocation6 + $0x1f8] sm:$0xff]
    %v186 = vld [vmem:[#allocation6 + $0x200] sm:$0xff]
    %v187 = vld [vmem:[#allocation6 + $0x208] sm:$0xff]
    %v188 = vld [vmem:[#allocation6 + $0x210] sm:$0xff]
    %v189 = vld [vmem:[#allocation6 + $0x218] sm:$0xff]
    %v190 = vld [vmem:[#allocation6 + $0x220] sm:$0xff]
    %v191 = vld [vmem:[#allocation6 + $0x228] sm:$0xff]
    %v192 = vld [vmem:[#allocation6 + $0x230] sm:$0xff]
    %v193 = vld [vmem:[#allocation6 + $0x238] sm:$0xff]
    %v194 = vld [vmem:[#allocation6 + $0x240] sm:$0xff]
    %v195 = vld [vmem:[#allocation6 + $0x248] sm:$0xff]
    %v196 = vld [vmem:[#allocation6 + $0x250] sm:$0xff]
    %v197 = vld [vmem:[#allocation6 + $0x258] sm:$0xff]
    %v198 = vld [vmem:[#allocation6 + $0x260] sm:$0xff]
    %v199 = vld [vmem:[#allocation6 + $0x268] sm:$0xff]
    %v200 = vld [vmem:[#allocation6 + $0x270] sm:$0xff]
    %v201 = vld [vmem:[#allocation6 + $0x278] sm:$0xff]
    %v202 = vld [vmem:[#allocation6 + $0x280] sm:$0xff]
    %v203 = vld [vmem:[#allocation6 + $0x288] sm:$0xff]
    %v204 = vld [vmem:[#allocation6 + $0x290] sm:$0xff]
    %v205 = vld [vmem:[#allocation6 + $0x298] sm:$0xff]
    %v206 = vld [vmem:[#allocation6 + $0x2a0] sm:$0xff]
    %v207 = vld [vmem:[#allocation6 + $0x2a8] sm:$0xff]
    %v208 = vld [vmem:[#allocation6 + $0x2b0] sm:$0xff]
    %v209 = vld [vmem:[#allocation6 + $0x2b8] sm:$0xff]
    %v210 = vld [vmem:[#allocation6 + $0x2c0] sm:$0xff]
    %v211 = vld [vmem:[#allocation6 + $0x2c8] sm:$0xff]
    %v212 = vld [vmem:[#allocation6 + $0x2d0] sm:$0xff]
    %v213 = vld [vmem:[#allocation6 + $0x2d8] sm:$0xff]
    %v214 = vld [vmem:[#allocation6 + $0x2e0] sm:$0xff]
    %v215 = vld [vmem:[#allocation6 + $0x2e8] sm:$0xff]
    %v216 = vld [vmem:[#allocation6 + $0x2f0] sm:$0xff]
    %v217 = vld [vmem:[#allocation6 + $0x2f8] sm:$0xff]
    %v218 = vld [vmem:[#allocation6 + $0x300] sm:$0xff]
    %v219 = vld [vmem:[#allocation6 + $0x308] sm:$0xff]
    %v220 = vld [vmem:[#allocation6 + $0x310] sm:$0xff]
    %v221 = vld [vmem:[#allocation6 + $0x318] sm:$0xff]
    %v222 = vld [vmem:[#allocation6 + $0x320] sm:$0xff]
    %v223 = vld [vmem:[#allocation6 + $0x328] sm:$0xff]
    %v224 = vld [vmem:[#allocation6 + $0x330] sm:$0xff]
    %v225 = vld [vmem:[#allocation6 + $0x338] sm:$0xff]
    %v226 = vld [vmem:[#allocation6 + $0x340] sm:$0xff]
    %v227 = vld [vmem:[#allocation6 + $0x348] sm:$0xff]
    %v228 = vld [vmem:[#allocation6 + $0x350] sm:$0xff]
    %v229 = vld [vmem:[#allocation6 + $0x358] sm:$0xff]
    %v230 = vld [vmem:[#allocation6 + $0x360] sm:$0xff]
    %v231 = vld [vmem:[#allocation6 + $0x368] sm:$0xff]
    %v232 = vld [vmem:[#allocation6 + $0x370] sm:$0xff]
    %v233 = vld [vmem:[#allocation6 + $0x378] sm:$0xff]
    %v234 = vld [vmem:[#allocation6 + $0x380] sm:$0xff]
    %v235 = vld [vmem:[#allocation6 + $0x388] sm:$0xff]
    %v236 = vld [vmem:[#allocation6 + $0x390] sm:$0xff]
    %v237 = vld [vmem:[#allocation6 + $0x398] sm:$0xff]
    %v238 = vld [vmem:[#allocation6 + $0x3a0] sm:$0xff]
    %v239 = vld [vmem:[#allocation6 + $0x3a8] sm:$0xff]
    %v240 = vld [vmem:[#allocation6 + $0x3b0] sm:$0xff]
    %v241 = vld [vmem:[#allocation6 + $0x3b8] sm:$0xff]
    %v242 = vld [vmem:[#allocation6 + $0x3c0] sm:$0xff]
    %v243 = vld [vmem:[#allocation6 + $0x3c8] sm:$0xff]
    %v244 = vld [vmem:[#allocation6 + $0x3d0] sm:$0xff]
    %v245 = vld [vmem:[#allocation6 + $0x3d8] sm:$0xff]
    %v246 = vld [vmem:[#allocation6 + $0x3e0] sm:$0xff]
    %v247 = vld [vmem:[#allocation6 + $0x3e8] sm:$0xff]
    %v248 = vld [vmem:[#allocation6 + $0x3f0] sm:$0xff]
    %v249 = vld [vmem:[#allocation6 + $0x3f8] sm:$0xff]
    %v250 = vld [vmem:[#allocation6 + $0x400] sm:$0xff]
    %v251 = vld [vmem:[#allocation6 + $0x408] sm:$0xff]
    %v252 = vld [vmem:[#allocation6 + $0x410] sm:$0xff]
    %v253 = vld [vmem:[#allocation6 + $0x418] sm:$0xff]
    %v254 = vld [vmem:[#allocation6 + $0x420] sm:$0xff]
    %v255 = vld [vmem:[#allocation6 + $0x428] sm:$0xff]
    %v256 = vld [vmem:[#allocation6 + $0x430] sm:$0xff]
    %v257 = vld [vmem:[#allocation6 + $0x438] sm:$0xff]
    %v258 = vld [vmem:[#allocation6 + $0x440] sm:$0xff]
    %v259 = vld [vmem:[#allocation6 + $0x448] sm:$0xff]
    %v260 = vld [vmem:[#allocation6 + $0x450] sm:$0xff]
    %v261 = vld [vmem:[#allocation6 + $0x458] sm:$0xff]
    %v262 = vld [vmem:[#allocation6 + $0x460] sm:$0xff]
    %v263 = vld [vmem:[#allocation6 + $0x468] sm:$0xff]
    %v264 = vld [vmem:[#allocation6 + $0x470] sm:$0xff]
    %v265 = vld [vmem:[#allocation6 + $0x478] sm:$0xff]
    %v266 = vld [vmem:[#allocation6 + $0x480] sm:$0xff]
    %v267 = vld [vmem:[#allocation6 + $0x488] sm:$0xff]
    %v268 = vld [vmem:[#allocation6 + $0x490] sm:$0xff]
    %v269 = vld [vmem:[#allocation6 + $0x498] sm:$0xff]
    %v270 = vld [vmem:[#allocation6 + $0x4a0] sm:$0xff]
    %v271 = vld [vmem:[#allocation6 + $0x4a8] sm:$0xff]
    %v272 = vld [vmem:[#allocation6 + $0x4b0] sm:$0xff]
    %v273 = vld [vmem:[#allocation6 + $0x4b8] sm:$0xff]
    %v274 = vld [vmem:[#allocation6 + $0x4c0] sm:$0xff]
    %v275 = vld [vmem:[#allocation6 + $0x4c8] sm:$0xff]
    %v276 = vld [vmem:[#allocation6 + $0x4d0] sm:$0xff]
    %v277 = vld [vmem:[#allocation6 + $0x4d8] sm:$0xff]
    %v278 = vld [vmem:[#allocation6 + $0x4e0] sm:$0xff]
    %v279 = vld [vmem:[#allocation6 + $0x4e8] sm:$0xff]
    %v280 = vld [vmem:[#allocation6 + $0x4f0] sm:$0xff]
    %v281 = vld [vmem:[#allocation6 + $0x4f8] sm:$0xff]
    %v282 = vld [vmem:[#allocation6 + $0x500] sm:$0xff]
    %v283 = vld [vmem:[#allocation6 + $0x508] sm:$0xff]
    %v284 = vld [vmem:[#allocation6 + $0x510] sm:$0xff]
    %v285 = vld [vmem:[#allocation6 + $0x518] sm:$0xff]
    %v286 = vld [vmem:[#allocation6 + $0x520] sm:$0xff]
    %v287 = vld [vmem:[#allocation6 + $0x528] sm:$0xff]
    %v288 = vld [vmem:[#allocation6 + $0x530] sm:$0xff]
    %v289 = vld [vmem:[#allocation6 + $0x538] sm:$0xff]
    %v290 = vld [vmem:[#allocation6 + $0x540] sm:$0xff]
    %v291 = vld [vmem:[#allocation6 + $0x548] sm:$0xff]
    %v292 = vld [vmem:[#allocation6 + $0x550] sm:$0xff]
    %v293 = vld [vmem:[#allocation6 + $0x558] sm:$0xff]
    %v294 = vld [vmem:[#allocation6 + $0x560] sm:$0xff]
    %v295 = vld [vmem:[#allocation6 + $0x568] sm:$0xff]
    %v296 = vld [vmem:[#allocation6 + $0x570] sm:$0xff]
    %v297 = vld [vmem:[#allocation6 + $0x578] sm:$0xff]
    %v298 = vld [vmem:[#allocation6 + $0x580] sm:$0xff]
    %v299 = vld [vmem:[#allocation6 + $0x588] sm:$0xff]
    %v300 = vld [vmem:[#allocation6 + $0x590] sm:$0xff]
    %v301 = vld [vmem:[#allocation6 + $0x598] sm:$0xff]
    %v302 = vld [vmem:[#allocation6 + $0x5a0] sm:$0xff]
    %v303 = vld [vmem:[#allocation6 + $0x5a8] sm:$0xff]
    %v304 = vld [vmem:[#allocation6 + $0x5b0] sm:$0xff]
    %v305 = vld [vmem:[#allocation6 + $0x5b8] sm:$0xff]
    %v306 = vld [vmem:[#allocation6 + $0x5c0] sm:$0xff]
    %v307 = vld [vmem:[#allocation6 + $0x5c8] sm:$0xff]
    %v308 = vld [vmem:[#allocation6 + $0x5d0] sm:$0xff]
    %v309 = vld [vmem:[#allocation6 + $0x5d8] sm:$0xff]
    %v310 = vld [vmem:[#allocation6 + $0x5e0] sm:$0xff]
    %v311 = vld [vmem:[#allocation6 + $0x5e8] sm:$0xff]
    %v312 = vld [vmem:[#allocation6 + $0x5f0] sm:$0xff]
    %v313 = vld [vmem:[#allocation6 + $0x5f8] sm:$0xff]
    %v314 = vld [vmem:[#allocation6 + $0x600] sm:$0xff]
    %v315 = vld [vmem:[#allocation6 + $0x608] sm:$0xff]
    %v316 = vld [vmem:[#allocation6 + $0x610] sm:$0xff]
    %v317 = vld [vmem:[#allocation6 + $0x618] sm:$0xff]
    %v318 = vld [vmem:[#allocation6 + $0x620] sm:$0xff]
    %v319 = vld [vmem:[#allocation6 + $0x628] sm:$0xff]
    %v320 = vld [vmem:[#allocation6 + $0x630] sm:$0xff]
    %v321 = vld [vmem:[#allocation6 + $0x638] sm:$0xff]
    %v322 = vld [vmem:[#allocation6 + $0x640] sm:$0xff]
    %v323 = vld [vmem:[#allocation6 + $0x648] sm:$0xff]
    %v324 = vld [vmem:[#allocation6 + $0x650] sm:$0xff]
    %v325 = vld [vmem:[#allocation6 + $0x658] sm:$0xff]
    %v326 = vld [vmem:[#allocation6 + $0x660] sm:$0xff]
    %v327 = vld [vmem:[#allocation6 + $0x668] sm:$0xff]
    %v328 = vld [vmem:[#allocation6 + $0x670] sm:$0xff]
    %v329 = vld [vmem:[#allocation6 + $0x678] sm:$0xff]
    %v330 = vld [vmem:[#allocation6 + $0x680] sm:$0xff]
    %v331 = vld [vmem:[#allocation6 + $0x688] sm:$0xff]
    %v332 = vld [vmem:[#allocation6 + $0x690] sm:$0xff]
    %v333 = vld [vmem:[#allocation6 + $0x698] sm:$0xff]
    %v334 = vld [vmem:[#allocation6 + $0x6a0] sm:$0xff]
    %v335 = vld [vmem:[#allocation6 + $0x6a8] sm:$0xff]
    %v336 = vld [vmem:[#allocation6 + $0x6b0] sm:$0xff]
    %v337 = vld [vmem:[#allocation6 + $0x6b8] sm:$0xff]
    %v338 = vld [vmem:[#allocation6 + $0x6c0] sm:$0xff]
    %v339 = vld [vmem:[#allocation6 + $0x6c8] sm:$0xff]
    %v340 = vld [vmem:[#allocation6 + $0x6d0] sm:$0xff]
    %v341 = vld [vmem:[#allocation6 + $0x6d8] sm:$0xff]
    %v342 = vld [vmem:[#allocation6 + $0x6e0] sm:$0xff]
    %v343 = vld [vmem:[#allocation6 + $0x6e8] sm:$0xff]
    %v344 = vld [vmem:[#allocation6 + $0x6f0] sm:$0xff]
    %v345 = vld [vmem:[#allocation6 + $0x6f8] sm:$0xff]
    %v346 = vld [vmem:[#allocation6 + $0x700] sm:$0xff]
    %v347 = vld [vmem:[#allocation6 + $0x708] sm:$0xff]
    %v348 = vld [vmem:[#allocation6 + $0x710] sm:$0xff]
    %v349 = vld [vmem:[#allocation6 + $0x718] sm:$0xff]
    %v350 = vld [vmem:[#allocation6 + $0x720] sm:$0xff]
    %v351 = vld [vmem:[#allocation6 + $0x728] sm:$0xff]
    %v352 = vld [vmem:[#allocation6 + $0x730] sm:$0xff]
    %v353 = vld [vmem:[#allocation6 + $0x738] sm:$0xff]
    %v354 = vld [vmem:[#allocation6 + $0x740] sm:$0xff]
    %v355 = vld [vmem:[#allocation6 + $0x748] sm:$0xff]
    %v356 = vld [vmem:[#allocation6 + $0x750] sm:$0xff]
    %v357 = vld [vmem:[#allocation6 + $0x758] sm:$0xff]
    %v358 = vld [vmem:[#allocation6 + $0x760] sm:$0xff]
    %v359 = vld [vmem:[#allocation6 + $0x768] sm:$0xff]
    %v360 = vld [vmem:[#allocation6 + $0x770] sm:$0xff]
    %v361 = vld [vmem:[#allocation6 + $0x778] sm:$0xff]
    %v362 = vld [vmem:[#allocation6 + $0x780] sm:$0xff]
    %v363 = vld [vmem:[#allocation6 + $0x788] sm:$0xff]
    %v364 = vld [vmem:[#allocation6 + $0x790] sm:$0xff]
    %v365 = vld [vmem:[#allocation6 + $0x798] sm:$0xff]
    %v366 = vld [vmem:[#allocation6 + $0x7a0] sm:$0xff]
    %v367 = vld [vmem:[#allocation6 + $0x7a8] sm:$0xff]
    %v368 = vld [vmem:[#allocation6 + $0x7b0] sm:$0xff]
    %v369 = vld [vmem:[#allocation6 + $0x7b8] sm:$0xff]
    %v370 = vld [vmem:[#allocation6 + $0x7c0] sm:$0xff]
    %v371 = vld [vmem:[#allocation6 + $0x7c8] sm:$0xff]
    %v372 = vld [vmem:[%s3] sm:$0x1]
    %v374 = vlaneseq
    %v375 = vshrl.u32 %v374, 7
    %v376 = vsub.s32 0, %v375
    %v377 = vrot.slane %v372, %v376
    %vm379 = vcmask 654336
    %v381 = vsel %vm379, %v89, 0
    %v384 = vsel %vm379, %v105, 0
    %v387 = vsel %vm379, %v121, 0
    %389 = vmatprep.subr.mxu0 0.0
    %390 = vmatpush1.msra.mxu0 %v122
    %391 = vmatprep.subr.mxu0 0.0
    %392 = vmatpush1.msra.mxu0 %v123
    %393 = vmatprep.subr.mxu0 0.0
    %394 = vmatpush1.msra.mxu0 %v124
    %395 = vmatprep.subr.mxu0 0.0
    %396 = vmatpush1.msra.mxu0 %v125
    %397 = vmatprep.subr.mxu0 0.0
    %398 = vmatpush1.msra.mxu0 %v126
    %399 = vmatprep.subr.mxu0 0.0
    %400 = vmatpush1.msra.mxu0 %v127
    %401 = vmatprep.subr.mxu0 0.0
    %402 = vmatpush1.msra.mxu0 %v128
    %403 = vmatprep.subr.mxu0 0.0
    %404 = vmatpush1.msra.mxu0 %v129
    %405 = vmatprep.subr.mxu0 0.0
    %406 = vmatpush1.msra.mxu0 %v130
    %407 = vmatprep.subr.mxu0 0.0
    %408 = vmatpush1.msra.mxu0 %v131
    %409 = vmatprep.subr.mxu0 0.0
    %410 = vmatpush1.msra.mxu0 %v132
    %411 = vmatprep.subr.mxu0 0.0
    %412 = vmatpush1.msra.mxu0 %v133
    %413 = vmatprep.subr.mxu0 0.0
    %414 = vmatpush1.msra.mxu0 %v134
    %415 = vmatprep.subr.mxu0 0.0
    %416 = vmatpush1.msra.mxu0 %v135
    %417 = vmatprep.subr.mxu0 0.0
    %418 = vmatpush1.msra.mxu0 %v136
    %419 = vmatprep.subr.mxu0 0.0
    %420 = vmatpush1.msra.mxu0 %v137
    %421 = vmatprep.subr.mxu0 0.0
    %422 = vmatpush1.msra.mxu0 %v138
    %423 = vmatprep.subr.mxu0 0.0
    %424 = vmatpush1.msra.mxu0 %v139
    %425 = vmatprep.subr.mxu0 0.0
    %426 = vmatpush1.msra.mxu0 %v140
    %427 = vmatprep.subr.mxu0 0.0
    %428 = vmatpush1.msra.mxu0 %v141
    %429 = vmatprep.subr.mxu0 0.0
    %430 = vmatpush1.msra.mxu0 %v142
    %431 = vmatprep.subr.mxu0 0.0
    %432 = vmatpush1.msra.mxu0 %v143
    %433 = vmatprep.subr.mxu0 0.0
    %434 = vmatpush1.msra.mxu0 %v144
    %435 = vmatprep.subr.mxu0 0.0
    %436 = vmatpush1.msra.mxu0 %v145
    %437 = vmatprep.subr.mxu0 0.0
    %438 = vmatpush1.msra.mxu0 %v146
    %439 = vmatprep.subr.mxu0 0.0
    %440 = vmatpush1.msra.mxu0 %v147
    %441 = vmatprep.subr.mxu0 0.0
    %442 = vmatpush1.msra.mxu0 %v148
    %443 = vmatprep.subr.mxu0 0.0
    %444 = vmatpush1.msra.mxu0 %v149
    %445 = vmatprep.subr.mxu0 0.0
    %446 = vmatpush1.msra.mxu0 %v150
    %447 = vmatprep.subr.mxu0 0.0
    %448 = vmatpush1.msra.mxu0 %v151
    %449 = vmatprep.subr.mxu0 0.0
    %450 = vmatpush1.msra.mxu0 %v152
    %451 = vmatprep.subr.mxu0 0.0
    %452 = vmatpush1.msra.mxu0 %v153
    %453 = vmatprep.mubr.f32.mxu0 %v75
    %454 = vmatmul.mubr.f32.gmra.mrb[0].mxu0 %v74
    %v455 = vpop.f32.mrb[0].mxu0
    %v456 = vadd.f32 %v377, %v455
    %v457 = vpop.f32.mrb[0].mxu0
    %458 = vmatprep.mubr.f32.mxu0 %v91
    %459 = vmatmul.mubr.f32.gmra.mrb[0].mxu0 %v90
    %v460 = vpop.f32.mrb[0].mxu0
    %v461 = vadd.f32 %v377, %v460
    %v462 = vpop.f32.mrb[0].mxu0
    %463 = vmatprep.mubr.f32.mxu0 %v107
    %464 = vmatmul.mubr.f32.gmra.mrb[0].mxu0 %v106
    %v465 = vpop.f32.mrb[0].mxu0
    %v466 = vadd.f32 %v377, %v465
    %v467 = vpop.f32.mrb[0].mxu0
    %468 = vdwg.mxu0
    %469 = vmatprep.subr.mxu0 0.0
    %470 = vmatpush1.msra.mxu0 %v154
    %471 = vmatprep.subr.mxu0 0.0
    %472 = vmatpush1.msra.mxu0 %v155
    %473 = vmatprep.subr.mxu0 0.0
    %474 = vmatpush1.msra.mxu0 %v156
    %475 = vmatprep.subr.mxu0 0.0
    %476 = vmatpush1.msra.mxu0 %v157
    %477 = vmatprep.subr.mxu0 0.0
    %478 = vmatpush1.msra.mxu0 %v158
    %479 = vmatprep.subr.mxu0 0.0
    %480 = vmatpush1.msra.mxu0 %v159
    %481 = vmatprep.subr.mxu0 0.0
    %482 = vmatpush1.msra.mxu0 %v160
    %483 = vmatprep.subr.mxu0 0.0
    %484 = vmatpush1.msra.mxu0 %v161
    %485 = vmatprep.subr.mxu0 0.0
    %486 = vmatpush1.msra.mxu0 %v162
    %487 = vmatprep.subr.mxu0 0.0
    %488 = vmatpush1.msra.mxu0 %v163
    %489 = vmatprep.subr.mxu0 0.0
    %490 = vmatpush1.msra.mxu0 %v164
    %491 = vmatprep.subr.mxu0 0.0
    %492 = vmatpush1.msra.mxu0 %v165
    %493 = vmatprep.subr.mxu0 0.0
    %494 = vmatpush1.msra.mxu0 %v166
    %495 = vmatprep.subr.mxu0 0.0
    %496 = vmatpush1.msra.mxu0 %v167
    %497 = vmatprep.subr.mxu0 0.0
    %498 = vmatpush1.msra.mxu0 %v168
    %499 = vmatprep.subr.mxu0 0.0
    %500 = vmatpush1.msra.mxu0 %v169
    %501 = vmatprep.subr.mxu0 0.0
    %502 = vmatpush1.msra.mxu0 %v170
    %503 = vmatprep.subr.mxu0 0.0
    %504 = vmatpush1.msra.mxu0 %v171
    %505 = vmatprep.subr.mxu0 0.0
    %506 = vmatpush1.msra.mxu0 %v172
    %507 = vmatprep.subr.mxu0 0.0
    %508 = vmatpush1.msra.mxu0 %v173
    %509 = vmatprep.subr.mxu0 0.0
    %510 = vmatpush1.msra.mxu0 %v174
    %511 = vmatprep.subr.mxu0 0.0
    %512 = vmatpush1.msra.mxu0 %v175
    %513 = vmatprep.subr.mxu0 0.0
    %514 = vmatpush1.msra.mxu0 %v176
    %515 = vmatprep.subr.mxu0 0.0
    %516 = vmatpush1.msra.mxu0 %v177
    %517 = vmatprep.subr.mxu0 0.0
    %518 = vmatpush1.msra.mxu0 %v178
    %519 = vmatprep.subr.mxu0 0.0
    %520 = vmatpush1.msra.mxu0 %v179
    %521 = vmatprep.subr.mxu0 0.0
    %522 = vmatpush1.msra.mxu0 %v180
    %523 = vmatprep.subr.mxu0 0.0
    %524 = vmatpush1.msra.mxu0 %v181
    %525 = vmatprep.subr.mxu0 0.0
    %526 = vmatpush1.msra.mxu0 %v182
    %527 = vmatprep.subr.mxu0 0.0
    %528 = vmatpush1.msra.mxu0 %v183
    %529 = vmatprep.subr.mxu0 0.0
    %530 = vmatpush1.msra.mxu0 %v184
    %531 = vmatprep.subr.mxu0 0.0
    %532 = vmatpush1.msra.mxu0 %v185
    %533 = vmatprep.mubr.f32.mxu0 %v77
    %534 = vmatmul.mubr.f32.gmra.mrb[0].mxu0 %v76
    %v535 = vpop.f32.mrb[0].mxu0
    %v536 = vadd.f32 %v456, %v535
    %v537 = vpop.f32.mrb[0].mxu0
    %538 = vmatprep.mubr.f32.mxu0 %v93
    %539 = vmatmul.mubr.f32.gmra.mrb[0].mxu0 %v92
    %v540 = vpop.f32.mrb[0].mxu0
    %v541 = vadd.f32 %v461, %v540
    %v542 = vpop.f32.mrb[0].mxu0
    %543 = vmatprep.mubr.f32.mxu0 %v109
    %544 = vmatmul.mubr.f32.gmra.mrb[0].mxu0 %v108
    %v545 = vpop.f32.mrb[0].mxu0
    %v546 = vadd.f32 %v466, %v545
    %v547 = vpop.f32.mrb[0].mxu0
    %548 = vdwg.mxu0
    %549 = vmatprep.subr.mxu0 0.0
    %550 = vmatpush1.msra.mxu0 %v186
    %551 = vmatprep.subr.mxu0 0.0
    %552 = vmatpush1.msra.mxu0 %v187
    %553 = vmatprep.subr.mxu0 0.0
    %554 = vmatpush1.msra.mxu0 %v188
    %555 = vmatprep.subr.mxu0 0.0
    %556 = vmatpush1.msra.mxu0 %v189
    %557 = vmatprep.subr.mxu0 0.0
    %558 = vmatpush1.msra.mxu0 %v190
    %559 = vmatprep.subr.mxu0 0.0
    %560 = vmatpush1.msra.mxu0 %v191
    %561 = vmatprep.subr.mxu0 0.0
    %562 = vmatpush1.msra.mxu0 %v192
    %563 = vmatprep.subr.mxu0 0.0
    %564 = vmatpush1.msra.mxu0 %v193
    %565 = vmatprep.subr.mxu0 0.0
    %566 = vmatpush1.msra.mxu0 %v194
    %567 = vmatprep.subr.mxu0 0.0
    %568 = vmatpush1.msra.mxu0 %v195
    %569 = vmatprep.subr.mxu0 0.0
    %570 = vmatpush1.msra.mxu0 %v196
    %571 = vmatprep.subr.mxu0 0.0
    %572 = vmatpush1.msra.mxu0 %v197
    %573 = vmatprep.subr.mxu0 0.0
    %574 = vmatpush1.msra.mxu0 %v198
    %575 = vmatprep.subr.mxu0 0.0
    %576 = vmatpush1.msra.mxu0 %v199
    %577 = vmatprep.subr.mxu0 0.0
    %578 = vmatpush1.msra.mxu0 %v200
    %579 = vmatprep.subr.mxu0 0.0
    %580 = vmatpush1.msra.mxu0 %v201
    %581 = vmatprep.subr.mxu0 0.0
    %582 = vmatpush1.msra.mxu0 %v202
    %583 = vmatprep.subr.mxu0 0.0
    %584 = vmatpush1.msra.mxu0 %v203
    %585 = vmatprep.subr.mxu0 0.0
    %586 = vmatpush1.msra.mxu0 %v204
    %587 = vmatprep.subr.mxu0 0.0
    %588 = vmatpush1.msra.mxu0 %v205
    %589 = vmatprep.subr.mxu0 0.0
    %590 = vmatpush1.msra.mxu0 %v206
    %591 = vmatprep.subr.mxu0 0.0
    %592 = vmatpush1.msra.mxu0 %v207
    %593 = vmatprep.subr.mxu0 0.0
    %594 = vmatpush1.msra.mxu0 %v208
    %595 = vmatprep.subr.mxu0 0.0
    %596 = vmatpush1.msra.mxu0 %v209
    %597 = vmatprep.subr.mxu0 0.0
    %598 = vmatpush1.msra.mxu0 %v210
    %599 = vmatprep.subr.mxu0 0.0
    %600 = vmatpush1.msra.mxu0 %v211
    %601 = vmatprep.subr.mxu0 0.0
    %602 = vmatpush1.msra.mxu0 %v212
    %603 = vmatprep.subr.mxu0 0.0
    %604 = vmatpush1.msra.mxu0 %v213
    %605 = vmatprep.subr.mxu0 0.0
    %606 = vmatpush1.msra.mxu0 %v214
    %607 = vmatprep.subr.mxu0 0.0
    %608 = vmatpush1.msra.mxu0 %v215
    %609 = vmatprep.subr.mxu0 0.0
    %610 = vmatpush1.msra.mxu0 %v216
    %611 = vmatprep.subr.mxu0 0.0
    %612 = vmatpush1.msra.mxu0 %v217
    %613 = vmatprep.mubr.f32.mxu0 %v79
    %614 = vmatmul.mubr.f32.gmra.mrb[0].mxu0 %v78
    %v615 = vpop.f32.mrb[0].mxu0
    %v616 = vadd.f32 %v536, %v615
    %v617 = vpop.f32.mrb[0].mxu0
    %618 = vmatprep.mubr.f32.mxu0 %v95
    %619 = vmatmul.mubr.f32.gmra.mrb[0].mxu0 %v94
    %v620 = vpop.f32.mrb[0].mxu0
    %v621 = vadd.f32 %v541, %v620
    %v622 = vpop.f32.mrb[0].mxu0
    %623 = vmatprep.mubr.f32.mxu0 %v111
    %624 = vmatmul.mubr.f32.gmra.mrb[0].mxu0 %v110
    %v625 = vpop.f32.mrb[0].mxu0
    %v626 = vadd.f32 %v546, %v625
    %v627 = vpop.f32.mrb[0].mxu0
    %628 = vdwg.mxu0
    %629 = vmatprep.subr.mxu0 0.0
    %630 = vmatpush1.msra.mxu0 %v218
    %631 = vmatprep.subr.mxu0 0.0
    %632 = vmatpush1.msra.mxu0 %v219
    %633 = vmatprep.subr.mxu0 0.0
    %634 = vmatpush1.msra.mxu0 %v220
    %635 = vmatprep.subr.mxu0 0.0
    %636 = vmatpush1.msra.mxu0 %v221
    %637 = vmatprep.subr.mxu0 0.0
    %638 = vmatpush1.msra.mxu0 %v222
    %639 = vmatprep.subr.mxu0 0.0
    %640 = vmatpush1.msra.mxu0 %v223
    %641 = vmatprep.subr.mxu0 0.0
    %642 = vmatpush1.msra.mxu0 %v224
    %643 = vmatprep.subr.mxu0 0.0
    %644 = vmatpush1.msra.mxu0 %v225
    %645 = vmatprep.subr.mxu0 0.0
    %646 = vmatpush1.msra.mxu0 %v226
    %647 = vmatprep.subr.mxu0 0.0
    %648 = vmatpush1.msra.mxu0 %v227
    %649 = vmatprep.subr.mxu0 0.0
    %650 = vmatpush1.msra.mxu0 %v228
    %651 = vmatprep.subr.mxu0 0.0
    %652 = vmatpush1.msra.mxu0 %v229
    %653 = vmatprep.subr.mxu0 0.0
    %654 = vmatpush1.msra.mxu0 %v230
    %655 = vmatprep.subr.mxu0 0.0
    %656 = vmatpush1.msra.mxu0 %v231
    %657 = vmatprep.subr.mxu0 0.0
    %658 = vmatpush1.msra.mxu0 %v232
    %659 = vmatprep.subr.mxu0 0.0
    %660 = vmatpush1.msra.mxu0 %v233
    %661 = vmatprep.subr.mxu0 0.0
    %662 = vmatpush1.msra.mxu0 %v234
    %663 = vmatprep.subr.mxu0 0.0
    %664 = vmatpush1.msra.mxu0 %v235
    %665 = vmatprep.subr.mxu0 0.0
    %666 = vmatpush1.msra.mxu0 %v236
    %667 = vmatprep.subr.mxu0 0.0
    %668 = vmatpush1.msra.mxu0 %v237
    %669 = vmatprep.subr.mxu0 0.0
    %670 = vmatpush1.msra.mxu0 %v238
    %671 = vmatprep.subr.mxu0 0.0
    %672 = vmatpush1.msra.mxu0 %v239
    %673 = vmatprep.subr.mxu0 0.0
    %674 = vmatpush1.msra.mxu0 %v240
    %675 = vmatprep.subr.mxu0 0.0
    %676 = vmatpush1.msra.mxu0 %v241
    %677 = vmatprep.subr.mxu0 0.0
    %678 = vmatpush1.msra.mxu0 %v242
    %679 = vmatprep.subr.mxu0 0.0
    %680 = vmatpush1.msra.mxu0 %v243
    %681 = vmatprep.subr.mxu0 0.0
    %682 = vmatpush1.msra.mxu0 %v244
    %683 = vmatprep.subr.mxu0 0.0
    %684 = vmatpush1.msra.mxu0 %v245
    %685 = vmatprep.subr.mxu0 0.0
    %686 = vmatpush1.msra.mxu0 %v246
    %687 = vmatprep.subr.mxu0 0.0
    %688 = vmatpush1.msra.mxu0 %v247
    %689 = vmatprep.subr.mxu0 0.0
    %690 = vmatpush1.msra.mxu0 %v248
    %691 = vmatprep.subr.mxu0 0.0
    %692 = vmatpush1.msra.mxu0 %v249
    %693 = vmatprep.mubr.f32.mxu0 %v81
    %694 = vmatmul.mubr.f32.gmra.mrb[0].mxu0 %v80
    %v695 = vpop.f32.mrb[0].mxu0
    %v696 = vadd.f32 %v616, %v695
    %v697 = vpop.f32.mrb[0].mxu0
    %698 = vmatprep.mubr.f32.mxu0 %v97
    %699 = vmatmul.mubr.f32.gmra.mrb[0].mxu0 %v96
    %v700 = vpop.f32.mrb[0].mxu0
    %v701 = vadd.f32 %v621, %v700
    %v702 = vpop.f32.mrb[0].mxu0
    %703 = vmatprep.mubr.f32.mxu0 %v113
    %704 = vmatmul.mubr.f32.gmra.mrb[0].mxu0 %v112
    %v705 = vpop.f32.mrb[0].mxu0
    %v706 = vadd.f32 %v626, %v705
    %v707 = vpop.f32.mrb[0].mxu0
    %708 = vdwg.mxu0
    %709 = vmatprep.subr.mxu0 0.0
    %710 = vmatpush1.msra.mxu0 %v250
    %711 = vmatprep.subr.mxu0 0.0
    %712 = vmatpush1.msra.mxu0 %v251
    %713 = vmatprep.subr.mxu0 0.0
    %714 = vmatpush1.msra.mxu0 %v252
    %715 = vmatprep.subr.mxu0 0.0
    %716 = vmatpush1.msra.mxu0 %v253
    %717 = vmatprep.subr.mxu0 0.0
    %718 = vmatpush1.msra.mxu0 %v254
    %719 = vmatprep.subr.mxu0 0.0
    %720 = vmatpush1.msra.mxu0 %v255
    %721 = vmatprep.subr.mxu0 0.0
    %722 = vmatpush1.msra.mxu0 %v256
    %723 = vmatprep.subr.mxu0 0.0
    %724 = vmatpush1.msra.mxu0 %v257
    %725 = vmatprep.subr.mxu0 0.0
    %726 = vmatpush1.msra.mxu0 %v258
    %727 = vmatprep.subr.mxu0 0.0
    %728 = vmatpush1.msra.mxu0 %v259
    %729 = vmatprep.subr.mxu0 0.0
    %730 = vmatpush1.msra.mxu0 %v260
    %731 = vmatprep.subr.mxu0 0.0
    %732 = vmatpush1.msra.mxu0 %v261
    %733 = vmatprep.subr.mxu0 0.0
    %734 = vmatpush1.msra.mxu0 %v262
    %735 = vmatprep.subr.mxu0 0.0
    %736 = vmatpush1.msra.mxu0 %v263
    %737 = vmatprep.subr.mxu0 0.0
    %738 = vmatpush1.msra.mxu0 %v264
    %739 = vmatprep.subr.mxu0 0.0
    %740 = vmatpush1.msra.mxu0 %v265
    %741 = vmatprep.subr.mxu0 0.0
    %742 = vmatpush1.msra.mxu0 %v266
    %743 = vmatprep.subr.mxu0 0.0
    %744 = vmatpush1.msra.mxu0 %v267
    %745 = vmatprep.subr.mxu0 0.0
    %746 = vmatpush1.msra.mxu0 %v268
    %747 = vmatprep.subr.mxu0 0.0
    %748 = vmatpush1.msra.mxu0 %v269
    %749 = vmatprep.subr.mxu0 0.0
    %750 = vmatpush1.msra.mxu0 %v270
    %751 = vmatprep.subr.mxu0 0.0
    %752 = vmatpush1.msra.mxu0 %v271
    %753 = vmatprep.subr.mxu0 0.0
    %754 = vmatpush1.msra.mxu0 %v272
    %755 = vmatprep.subr.mxu0 0.0
    %756 = vmatpush1.msra.mxu0 %v273
    %757 = vmatprep.subr.mxu0 0.0
    %758 = vmatpush1.msra.mxu0 %v274
    %759 = vmatprep.subr.mxu0 0.0
    %760 = vmatpush1.msra.mxu0 %v275
    %761 = vmatprep.subr.mxu0 0.0
    %762 = vmatpush1.msra.mxu0 %v276
    %763 = vmatprep.subr.mxu0 0.0
    %764 = vmatpush1.msra.mxu0 %v277
    %765 = vmatprep.subr.mxu0 0.0
    %766 = vmatpush1.msra.mxu0 %v278
    %767 = vmatprep.subr.mxu0 0.0
    %768 = vmatpush1.msra.mxu0 %v279
    %769 = vmatprep.subr.mxu0 0.0
    %770 = vmatpush1.msra.mxu0 %v280
    %771 = vmatprep.subr.mxu0 0.0
    %772 = vmatpush1.msra.mxu0 %v281
    %773 = vmatprep.mubr.f32.mxu0 %v83
    %774 = vmatmul.mubr.f32.gmra.mrb[0].mxu0 %v82
    %v775 = vpop.f32.mrb[0].mxu0
    %v776 = vadd.f32 %v696, %v775
    %v777 = vpop.f32.mrb[0].mxu0
    %778 = vmatprep.mubr.f32.mxu0 %v99
    %779 = vmatmul.mubr.f32.gmra.mrb[0].mxu0 %v98
    %v780 = vpop.f32.mrb[0].mxu0
    %v781 = vadd.f32 %v701, %v780
    %v782 = vpop.f32.mrb[0].mxu0
    %783 = vmatprep.mubr.f32.mxu0 %v115
    %784 = vmatmul.mubr.f32.gmra.mrb[0].mxu0 %v114
    %v785 = vpop.f32.mrb[0].mxu0
    %v786 = vadd.f32 %v706, %v785
    %v787 = vpop.f32.mrb[0].mxu0
    %788 = vdwg.mxu0
    %789 = vmatprep.subr.mxu0 0.0
    %790 = vmatpush1.msra.mxu0 %v282
    %791 = vmatprep.subr.mxu0 0.0
    %792 = vmatpush1.msra.mxu0 %v283
    %793 = vmatprep.subr.mxu0 0.0
    %794 = vmatpush1.msra.mxu0 %v284
    %795 = vmatprep.subr.mxu0 0.0
    %796 = vmatpush1.msra.mxu0 %v285
    %797 = vmatprep.subr.mxu0 0.0
    %798 = vmatpush1.msra.mxu0 %v286
    %799 = vmatprep.subr.mxu0 0.0
    %800 = vmatpush1.msra.mxu0 %v287
    %801 = vmatprep.subr.mxu0 0.0
    %802 = vmatpush1.msra.mxu0 %v288
    %803 = vmatprep.subr.mxu0 0.0
    %804 = vmatpush1.msra.mxu0 %v289
    %805 = vmatprep.subr.mxu0 0.0
    %806 = vmatpush1.msra.mxu0 %v290
    %807 = vmatprep.subr.mxu0 0.0
    %808 = vmatpush1.msra.mxu0 %v291
    %809 = vmatprep.subr.mxu0 0.0
    %810 = vmatpush1.msra.mxu0 %v292
    %811 = vmatprep.subr.mxu0 0.0
    %812 = vmatpush1.msra.mxu0 %v293
    %813 = vmatprep.subr.mxu0 0.0
    %814 = vmatpush1.msra.mxu0 %v294
    %815 = vmatprep.subr.mxu0 0.0
    %816 = vmatpush1.msra.mxu0 %v295
    %817 = vmatprep.subr.mxu0 0.0
    %818 = vmatpush1.msra.mxu0 %v296
    %819 = vmatprep.subr.mxu0 0.0
    %820 = vmatpush1.msra.mxu0 %v297
    %821 = vmatprep.subr.mxu0 0.0
    %822 = vmatpush1.msra.mxu0 %v298
    %823 = vmatprep.subr.mxu0 0.0
    %824 = vmatpush1.msra.mxu0 %v299
    %825 = vmatprep.subr.mxu0 0.0
    %826 = vmatpush1.msra.mxu0 %v300
    %827 = vmatprep.subr.mxu0 0.0
    %828 = vmatpush1.msra.mxu0 %v301
    %829 = vmatprep.subr.mxu0 0.0
    %830 = vmatpush1.msra.mxu0 %v302
    %831 = vmatprep.subr.mxu0 0.0
    %832 = vmatpush1.msra.mxu0 %v303
    %833 = vmatprep.subr.mxu0 0.0
    %834 = vmatpush1.msra.mxu0 %v304
    %835 = vmatprep.subr.mxu0 0.0
    %836 = vmatpush1.msra.mxu0 %v305
    %837 = vmatprep.subr.mxu0 0.0
    %838 = vmatpush1.msra.mxu0 %v306
    %839 = vmatprep.subr.mxu0 0.0
    %840 = vmatpush1.msra.mxu0 %v307
    %841 = vmatprep.subr.mxu0 0.0
    %842 = vmatpush1.msra.mxu0 %v308
    %843 = vmatprep.subr.mxu0 0.0
    %844 = vmatpush1.msra.mxu0 %v309
    %845 = vmatprep.subr.mxu0 0.0
    %846 = vmatpush1.msra.mxu0 %v310
    %847 = vmatprep.subr.mxu0 0.0
    %848 = vmatpush1.msra.mxu0 %v311
    %849 = vmatprep.subr.mxu0 0.0
    %850 = vmatpush1.msra.mxu0 %v312
    %851 = vmatprep.subr.mxu0 0.0
    %852 = vmatpush1.msra.mxu0 %v313
    %853 = vmatprep.mubr.f32.mxu0 %v85
    %854 = vmatmul.mubr.f32.gmra.mrb[0].mxu0 %v84
    %v855 = vpop.f32.mrb[0].mxu0
    %v856 = vadd.f32 %v776, %v855
    %v857 = vpop.f32.mrb[0].mxu0
    %858 = vmatprep.mubr.f32.mxu0 %v101
    %859 = vmatmul.mubr.f32.gmra.mrb[0].mxu0 %v100
    %v860 = vpop.f32.mrb[0].mxu0
    %v861 = vadd.f32 %v781, %v860
    %v862 = vpop.f32.mrb[0].mxu0
    %863 = vmatprep.mubr.f32.mxu0 %v117
    %864 = vmatmul.mubr.f32.gmra.mrb[0].mxu0 %v116
    %v865 = vpop.f32.mrb[0].mxu0
    %v866 = vadd.f32 %v786, %v865
    %v867 = vpop.f32.mrb[0].mxu0
    %868 = vdwg.mxu0
    %869 = vmatprep.subr.mxu0 0.0
    %870 = vmatpush1.msra.mxu0 %v314
    %871 = vmatprep.subr.mxu0 0.0
    %872 = vmatpush1.msra.mxu0 %v315
    %873 = vmatprep.subr.mxu0 0.0
    %874 = vmatpush1.msra.mxu0 %v316
    %875 = vmatprep.subr.mxu0 0.0
    %876 = vmatpush1.msra.mxu0 %v317
    %877 = vmatprep.subr.mxu0 0.0
    %878 = vmatpush1.msra.mxu0 %v318
    %879 = vmatprep.subr.mxu0 0.0
    %880 = vmatpush1.msra.mxu0 %v319
    %881 = vmatprep.subr.mxu0 0.0
    %882 = vmatpush1.msra.mxu0 %v320
    %883 = vmatprep.subr.mxu0 0.0
    %884 = vmatpush1.msra.mxu0 %v321
    %885 = vmatprep.subr.mxu0 0.0
    %886 = vmatpush1.msra.mxu0 %v322
    %887 = vmatprep.subr.mxu0 0.0
    %888 = vmatpush1.msra.mxu0 %v323
    %889 = vmatprep.subr.mxu0 0.0
    %890 = vmatpush1.msra.mxu0 %v324
    %891 = vmatprep.subr.mxu0 0.0
    %892 = vmatpush1.msra.mxu0 %v325
    %893 = vmatprep.subr.mxu0 0.0
    %894 = vmatpush1.msra.mxu0 %v326
    %895 = vmatprep.subr.mxu0 0.0
    %896 = vmatpush1.msra.mxu0 %v327
    %897 = vmatprep.subr.mxu0 0.0
    %898 = vmatpush1.msra.mxu0 %v328
    %899 = vmatprep.subr.mxu0 0.0
    %900 = vmatpush1.msra.mxu0 %v329
    %901 = vmatprep.subr.mxu0 0.0
    %902 = vmatpush1.msra.mxu0 %v330
    %903 = vmatprep.subr.mxu0 0.0
    %904 = vmatpush1.msra.mxu0 %v331
    %905 = vmatprep.subr.mxu0 0.0
    %906 = vmatpush1.msra.mxu0 %v332
    %907 = vmatprep.subr.mxu0 0.0
    %908 = vmatpush1.msra.mxu0 %v333
    %909 = vmatprep.subr.mxu0 0.0
    %910 = vmatpush1.msra.mxu0 %v334
    %911 = vmatprep.subr.mxu0 0.0
    %912 = vmatpush1.msra.mxu0 %v335
    %913 = vmatprep.subr.mxu0 0.0
    %914 = vmatpush1.msra.mxu0 %v336
    %915 = vmatprep.subr.mxu0 0.0
    %916 = vmatpush1.msra.mxu0 %v337
    %917 = vmatprep.subr.mxu0 0.0
    %918 = vmatpush1.msra.mxu0 %v338
    %919 = vmatprep.subr.mxu0 0.0
    %920 = vmatpush1.msra.mxu0 %v339
    %921 = vmatprep.subr.mxu0 0.0
    %922 = vmatpush1.msra.mxu0 %v340
    %923 = vmatprep.subr.mxu0 0.0
    %924 = vmatpush1.msra.mxu0 %v341
    %925 = vmatprep.subr.mxu0 0.0
    %926 = vmatpush1.msra.mxu0 %v342
    %927 = vmatprep.subr.mxu0 0.0
    %928 = vmatpush1.msra.mxu0 %v343
    %929 = vmatprep.subr.mxu0 0.0
    %930 = vmatpush1.msra.mxu0 %v344
    %931 = vmatprep.subr.mxu0 0.0
    %932 = vmatpush1.msra.mxu0 %v345
    %933 = vmatprep.mubr.f32.mxu0 %v87
    %934 = vmatmul.mubr.f32.gmra.mrb[0].mxu0 %v86
    %v935 = vpop.f32.mrb[0].mxu0
    %v936 = vadd.f32 %v856, %v935
    %v937 = vpop.f32.mrb[0].mxu0
    %938 = vmatprep.mubr.f32.mxu0 %v103
    %939 = vmatmul.mubr.f32.gmra.mrb[0].mxu0 %v102
    %v940 = vpop.f32.mrb[0].mxu0
    %v941 = vadd.f32 %v861, %v940
    %v942 = vpop.f32.mrb[0].mxu0
    %943 = vmatprep.mubr.f32.mxu0 %v119
    %944 = vmatmul.mubr.f32.gmra.mrb[0].mxu0 %v118
    %v945 = vpop.f32.mrb[0].mxu0
    %v946 = vadd.f32 %v866, %v945
    %v947 = vpop.f32.mrb[0].mxu0
    %948 = vdwg.mxu0
    %949 = vmatprep.subr.mxu0 0.0
    %950 = vmatpush1.msra.mxu0 %v346
    %951 = vmatprep.subr.mxu0 0.0
    %952 = vmatpush1.msra.mxu0 %v347
    %953 = vmatprep.subr.mxu0 0.0
    %954 = vmatpush1.msra.mxu0 %v348
    %955 = vmatprep.subr.mxu0 0.0
    %956 = vmatpush1.msra.mxu0 %v349
    %957 = vmatprep.subr.mxu0 0.0
    %958 = vmatpush1.msra.mxu0 %v350
    %959 = vmatprep.subr.mxu0 0.0
    %960 = vmatpush1.msra.mxu0 %v351
    %961 = vmatprep.subr.mxu0 0.0
    %962 = vmatpush1.msra.mxu0 %v352
    %963 = vmatprep.subr.mxu0 0.0
    %964 = vmatpush1.msra.mxu0 %v353
    %965 = vmatprep.subr.mxu0 0.0
    %966 = vmatpush1.msra.mxu0 %v354
    %967 = vmatprep.subr.mxu0 0.0
    %968 = vmatpush1.msra.mxu0 %v355
    %969 = vmatprep.subr.mxu0 0.0
    %970 = vmatpush1.msra.mxu0 %v356
    %971 = vmatprep.subr.mxu0 0.0
    %972 = vmatpush1.msra.mxu0 %v357
    %973 = vmatprep.subr.mxu0 0.0
    %974 = vmatpush1.msra.mxu0 %v358
    %975 = vmatprep.subr.mxu0 0.0
    %976 = vmatpush1.msra.mxu0 %v359
    %977 = vmatprep.subr.mxu0 0.0
    %978 = vmatpush1.msra.mxu0 %v360
    %979 = vmatprep.subr.mxu0 0.0
    %980 = vmatpush1.msra.mxu0 %v361
    %981 = vmatprep.subr.mxu0 0.0
    %982 = vmatpush1.msra.mxu0 %v362
    %983 = vmatprep.subr.mxu0 0.0
    %984 = vmatpush1.msra.mxu0 %v363
    %985 = vmatprep.subr.mxu0 0.0
    %986 = vmatpush1.msra.mxu0 %v364
    %987 = vmatprep.subr.mxu0 0.0
    %988 = vmatpush1.msra.mxu0 %v365
    %989 = vmatprep.subr.mxu0 0.0
    %990 = vmatpush1.msra.mxu0 %v366
    %991 = vmatprep.subr.mxu0 0.0
    %992 = vmatpush1.msra.mxu0 %v367
    %993 = vmatprep.subr.mxu0 0.0
    %994 = vmatpush1.msra.mxu0 %v368
    %995 = vmatprep.subr.mxu0 0.0
    %996 = vmatpush1.msra.mxu0 %v369
    %997 = vmatprep.subr.mxu0 0.0
    %998 = vmatpush1.msra.mxu0 %v370
    %999 = vmatprep.subr.mxu0 0.0
    %1000 = vmatpush1.msra.mxu0 %v371
    %1001 = vmatprep.subr.mxu0 0.0
    %1002 = vmatpush1.msra.mxu0 0.0
    %1003 = vmatprep.subr.mxu0 0.0
    %1004 = vmatpush1.msra.mxu0 0.0
    %1005 = vmatprep.subr.mxu0 0.0
    %1006 = vmatpush1.msra.mxu0 0.0
    %1007 = vmatprep.subr.mxu0 0.0
    %1008 = vmatpush1.msra.mxu0 0.0
    %1009 = vmatprep.subr.mxu0 0.0
    %1010 = vmatpush1.msra.mxu0 0.0
    %1011 = vmatprep.subr.mxu0 0.0
    %1012 = vmatpush1.msra.mxu0 0.0
    %1013 = vmatprep.mubr.f32.mxu0 %v381
    %1014 = vmatmul.mubr.f32.gmra.mrb[0].mxu0 %v88
    %v1015 = vpop.f32.mrb[0].mxu0
    %v1016 = vadd.f32 %v936, %v1015
    %v1017 = vpop.f32.mrb[0].mxu0
    %1018 = vmatprep.mubr.f32.mxu0 %v384
    %1019 = vmatmul.mubr.f32.gmra.mrb[0].mxu0 %v104
    %v1020 = vpop.f32.mrb[0].mxu0
    %v1021 = vadd.f32 %v941, %v1020
    %v1022 = vpop.f32.mrb[0].mxu0
    %1023 = vmatprep.mubr.f32.mxu0 %v387
    %1024 = vmatmul.mubr.f32.gmra.mrb[0].mxu0 %v120
    %v1025 = vpop.f32.mrb[0].mxu0
    %v1026 = vadd.f32 %v946, %v1025
    %v1027 = vpop.f32.mrb[0].mxu0
    %1028 = vdwg.mxu0
    %v1029 = vld [vmem:[%s4] sm:$0xff]
    %v1030 = vld [vmem:[%s4 + $0x8] sm:$0xff]
    %v1031 = vld [vmem:[%s4 + $0x10] sm:$0xff]
    %v1032 = vld [vmem:[%s4 + $0x18] sm:$0xff]
    %v1033 = vld [vmem:[%s4 + $0x20] sm:$0xff]
    %v1034 = vld [vmem:[%s4 + $0x28] sm:$0xff]
    %v1035 = vld [vmem:[%s4 + $0x30] sm:$0xff]
    %v1036 = vld [vmem:[%s4 + $0x38] sm:$0xff]
    %v1037 = vld [vmem:[%s4 + $0x40] sm:$0xff]
    %v1038 = vld [vmem:[%s4 + $0x48] sm:$0xff]
    %v1039 = vld [vmem:[%s4 + $0x50] sm:$0xff]
    %v1040 = vld [vmem:[%s4 + $0x58] sm:$0xff]
    %v1041 = vld [vmem:[%s4 + $0x60] sm:$0xff]
    %v1042 = vld [vmem:[%s4 + $0x68] sm:$0xff]
    %v1043 = vld [vmem:[%s4 + $0x70] sm:$0xff]
    %v1044 = vld [vmem:[%s4 + $0x78] sm:$0xff]
    %v1045 = vld [vmem:[%s5] sm:$0x1]
    %v1047 = vlaneseq
    %v1048 = vshrl.u32 %v1047, 7
    %v1049 = vsub.s32 0, %v1048
    %v1050 = vrot.slane %v1045, %v1049
    %1052 = vmatprep.subr.mxu0 0.0
    %1053 = vmatpush1.msra.mxu0 %v1029
    %1054 = vmatprep.subr.mxu0 0.0
    %1055 = vmatpush1.msra.mxu0 %v1030
    %1056 = vmatprep.subr.mxu0 0.0
    %1057 = vmatpush1.msra.mxu0 %v1031
    %1058 = vmatprep.subr.mxu0 0.0
    %1059 = vmatpush1.msra.mxu0 %v1032
    %1060 = vmatprep.subr.mxu0 0.0
    %1061 = vmatpush1.msra.mxu0 %v1033
    %1062 = vmatprep.subr.mxu0 0.0
    %1063 = vmatpush1.msra.mxu0 %v1034
    %1064 = vmatprep.subr.mxu0 0.0
    %1065 = vmatpush1.msra.mxu0 %v1035
    %1066 = vmatprep.subr.mxu0 0.0
    %1067 = vmatpush1.msra.mxu0 %v1036
    %1068 = vmatprep.subr.mxu0 0.0
    %1069 = vmatpush1.msra.mxu0 %v1037
    %1070 = vmatprep.subr.mxu0 0.0
    %1071 = vmatpush1.msra.mxu0 %v1038
    %1072 = vmatprep.subr.mxu0 0.0
    %1073 = vmatpush1.msra.mxu0 %v1039
    %1074 = vmatprep.subr.mxu0 0.0
    %1075 = vmatpush1.msra.mxu0 %v1040
    %1076 = vmatprep.subr.mxu0 0.0
    %1077 = vmatpush1.msra.mxu0 %v1041
    %1078 = vmatprep.subr.mxu0 0.0
    %1079 = vmatpush1.msra.mxu0 %v1042
    %1080 = vmatprep.subr.mxu0 0.0
    %1081 = vmatpush1.msra.mxu0 %v1043
    %1082 = vmatprep.subr.mxu0 0.0
    %1083 = vmatpush1.msra.mxu0 %v1044
    %1084 = vmatprep.subr.mxu0 0.0
    %1085 = vmatpush1.msra.mxu0 0.0
    %1086 = vmatprep.subr.mxu0 0.0
    %1087 = vmatpush1.msra.mxu0 0.0
    %1088 = vmatprep.subr.mxu0 0.0
    %1089 = vmatpush1.msra.mxu0 0.0
    %1090 = vmatprep.subr.mxu0 0.0
    %1091 = vmatpush1.msra.mxu0 0.0
    %1092 = vmatprep.subr.mxu0 0.0
    %1093 = vmatpush1.msra.mxu0 0.0
    %1094 = vmatprep.subr.mxu0 0.0
    %1095 = vmatpush1.msra.mxu0 0.0
    %1096 = vmatprep.subr.mxu0 0.0
    %1097 = vmatpush1.msra.mxu0 0.0
    %1098 = vmatprep.subr.mxu0 0.0
    %1099 = vmatpush1.msra.mxu0 0.0
    %1100 = vmatprep.subr.mxu0 0.0
    %1101 = vmatpush1.msra.mxu0 0.0
    %1102 = vmatprep.subr.mxu0 0.0
    %1103 = vmatpush1.msra.mxu0 0.0
    %1104 = vmatprep.subr.mxu0 0.0
    %1105 = vmatpush1.msra.mxu0 0.0
    %1106 = vmatprep.subr.mxu0 0.0
    %1107 = vmatpush1.msra.mxu0 0.0
    %1108 = vmatprep.subr.mxu0 0.0
    %1109 = vmatpush1.msra.mxu0 0.0
    %1110 = vmatprep.subr.mxu0 0.0
    %1111 = vmatpush1.msra.mxu0 0.0
    %1112 = vmatprep.subr.mxu0 0.0
    %1113 = vmatpush1.msra.mxu0 0.0
    %1114 = vmatprep.subr.mxu0 0.0
    %1115 = vmatpush1.msra.mxu0 0.0
    %1116 = vmatprep.mubr.f32.mxu0 0.0
    %1117 = vmatmul.mubr.f32.gmra.mrb[0].mxu0 %v1016
    %v1118 = vpop.f32.mrb[0].mxu0
    %v1119 = vadd.f32 %v1050, %v1118
    %v1120 = vpop.f32.mrb[0].mxu0
    %1121 = vmatprep.mubr.f32.mxu0 0.0
    %1122 = vmatmul.mubr.f32.gmra.mrb[0].mxu0 %v1021
    %v1123 = vpop.f32.mrb[0].mxu0
    %v1124 = vadd.f32 %v1050, %v1123
    %v1125 = vpop.f32.mrb[0].mxu0
    %1126 = vmatprep.mubr.f32.mxu0 0.0
    %1127 = vmatmul.mubr.f32.gmra.mrb[0].mxu0 %v1026
    %v1128 = vpop.f32.mrb[0].mxu0
    %v1129 = vadd.f32 %v1050, %v1128
    %v1130 = vpop.f32.mrb[0].mxu0
    %1131 = vdwg.mxu0
    %v1132 = vmax.f32 %v1119, 0.0
    %v1133 = vmax.f32 %v1124, 0.0
    %v1134 = vmax.f32 %v1129, 0.0
    %v1135 = vld [vmem:[%s6] sm:$0xff]
    %v1136 = vld [vmem:[%s6 + $0x8] sm:$0xff]
    %v1137 = vld [vmem:[%s6 + $0x10] sm:$0xff]
    %v1138 = vld [vmem:[%s6 + $0x18] sm:$0xff]
    %v1139 = vld [vmem:[%s6 + $0x20] sm:$0xff]
    %v1140 = vld [vmem:[%s6 + $0x28] sm:$0xff]
    %v1141 = vld [vmem:[%s6 + $0x30] sm:$0xff]
    %v1142 = vld [vmem:[%s6 + $0x38] sm:$0xff]
    %v1143 = vld [vmem:[%s6 + $0x40] sm:$0xff]
    %v1144 = vld [vmem:[%s6 + $0x48] sm:$0xff]
    %v1145 = vld [vmem:[%s6 + $0x50] sm:$0xff]
    %v1146 = vld [vmem:[%s6 + $0x58] sm:$0xff]
    %v1147 = vld [vmem:[%s6 + $0x60] sm:$0xff]
    %v1148 = vld [vmem:[%s6 + $0x68] sm:$0xff]
    %v1149 = vld [vmem:[%s6 + $0x70] sm:$0xff]
    %v1150 = vld [vmem:[%s6 + $0x78] sm:$0xff]
    %v1151 = vld [vmem:[%s7] sm:$0x1]
    %v1153 = vlaneseq
    %v1154 = vshrl.u32 %v1153, 7
    %v1155 = vsub.s32 0, %v1154
    %v1156 = vrot.slane %v1151, %v1155
    %1158 = vmatprep.subr.mxu0 0.0
    %1159 = vmatpush1.msra.mxu0 %v1135
    %1160 = vmatprep.subr.mxu0 0.0
    %1161 = vmatpush1.msra.mxu0 %v1136
    %1162 = vmatprep.subr.mxu0 0.0
    %1163 = vmatpush1.msra.mxu0 %v1137
    %1164 = vmatprep.subr.mxu0 0.0
    %1165 = vmatpush1.msra.mxu0 %v1138
    %1166 = vmatprep.subr.mxu0 0.0
    %1167 = vmatpush1.msra.mxu0 %v1139
    %1168 = vmatprep.subr.mxu0 0.0
    %1169 = vmatpush1.msra.mxu0 %v1140
    %1170 = vmatprep.subr.mxu0 0.0
    %1171 = vmatpush1.msra.mxu0 %v1141
    %1172 = vmatprep.subr.mxu0 0.0
    %1173 = vmatpush1.msra.mxu0 %v1142
    %1174 = vmatprep.subr.mxu0 0.0
    %1175 = vmatpush1.msra.mxu0 %v1143
    %1176 = vmatprep.subr.mxu0 0.0
    %1177 = vmatpush1.msra.mxu0 %v1144
    %1178 = vmatprep.subr.mxu0 0.0
    %1179 = vmatpush1.msra.mxu0 %v1145
    %1180 = vmatprep.subr.mxu0 0.0
    %1181 = vmatpush1.msra.mxu0 %v1146
    %1182 = vmatprep.subr.mxu0 0.0
    %1183 = vmatpush1.msra.mxu0 %v1147
    %1184 = vmatprep.subr.mxu0 0.0
    %1185 = vmatpush1.msra.mxu0 %v1148
    %1186 = vmatprep.subr.mxu0 0.0
    %1187 = vmatpush1.msra.mxu0 %v1149
    %1188 = vmatprep.subr.mxu0 0.0
    %1189 = vmatpush1.msra.mxu0 %v1150
    %1190 = vmatprep.subr.mxu0 0.0
    %1191 = vmatpush1.msra.mxu0 0.0
    %1192 = vmatprep.subr.mxu0 0.0
    %1193 = vmatpush1.msra.mxu0 0.0
    %1194 = vmatprep.subr.mxu0 0.0
    %1195 = vmatpush1.msra.mxu0 0.0
    %1196 = vmatprep.subr.mxu0 0.0
    %1197 = vmatpush1.msra.mxu0 0.0
    %1198 = vmatprep.subr.mxu0 0.0
    %1199 = vmatpush1.msra.mxu0 0.0
    %1200 = vmatprep.subr.mxu0 0.0
    %1201 = vmatpush1.msra.mxu0 0.0
    %1202 = vmatprep.subr.mxu0 0.0
    %1203 = vmatpush1.msra.mxu0 0.0
    %1204 = vmatprep.subr.mxu0 0.0
    %1205 = vmatpush1.msra.mxu0 0.0
    %1206 = vmatprep.subr.mxu0 0.0
    %1207 = vmatpush1.msra.mxu0 0.0
    %1208 = vmatprep.subr.mxu0 0.0
    %1209 = vmatpush1.msra.mxu0 0.0
    %1210 = vmatprep.subr.mxu0 0.0
    %1211 = vmatpush1.msra.mxu0 0.0
    %1212 = vmatprep.subr.mxu0 0.0
    %1213 = vmatpush1.msra.mxu0 0.0
    %1214 = vmatprep.subr.mxu0 0.0
    %1215 = vmatpush1.msra.mxu0 0.0
    %1216 = vmatprep.subr.mxu0 0.0
    %1217 = vmatpush1.msra.mxu0 0.0
    %1218 = vmatprep.subr.mxu0 0.0
    %1219 = vmatpush1.msra.mxu0 0.0
    %1220 = vmatprep.subr.mxu0 0.0
    %1221 = vmatpush1.msra.mxu0 0.0
    %1222 = vmatprep.mubr.f32.mxu0 0.0
    %1223 = vmatmul.mubr.f32.gmra.mrb[0].mxu0 %v1132
    %v1224 = vpop.f32.mrb[0].mxu0
    %v1225 = vadd.f32 %v1156, %v1224
    %v1226 = vpop.f32.mrb[0].mxu0
    %1227 = vmatprep.mubr.f32.mxu0 0.0
    %1228 = vmatmul.mubr.f32.gmra.mrb[0].mxu0 %v1133
    %v1229 = vpop.f32.mrb[0].mxu0
    %v1230 = vadd.f32 %v1156, %v1229
    %v1231 = vpop.f32.mrb[0].mxu0
    %1232 = vmatprep.mubr.f32.mxu0 0.0
    %1233 = vmatmul.mubr.f32.gmra.mrb[0].mxu0 %v1134
    %v1234 = vpop.f32.mrb[0].mxu0
    %v1235 = vadd.f32 %v1156, %v1234
    %v1236 = vpop.f32.mrb[0].mxu0
    %1237 = vdwg.mxu0
    %v1238 = vadd.f32 %v1225, %v1016
    %v1239 = vadd.f32 %v1230, %v1021
    %v1240 = vadd.f32 %v1235, %v1026
    %v1241 = vmax.f32 %v1238, 0.0
    %v1242 = vmax.f32 %v1239, 0.0
    %v1243 = vmax.f32 %v1240, 0.0
    %s1244 = scalar_lea.vmem %s4, 128
    %v1245 = vld [vmem:[%s1244] sm:$0xff]
    %v1246 = vld [vmem:[%s1244 + $0x8] sm:$0xff]
    %v1247 = vld [vmem:[%s1244 + $0x10] sm:$0xff]
    %v1248 = vld [vmem:[%s1244 + $0x18] sm:$0xff]
    %v1249 = vld [vmem:[%s1244 + $0x20] sm:$0xff]
    %v1250 = vld [vmem:[%s1244 + $0x28] sm:$0xff]
    %v1251 = vld [vmem:[%s1244 + $0x30] sm:$0xff]
    %v1252 = vld [vmem:[%s1244 + $0x38] sm:$0xff]
    %v1253 = vld [vmem:[%s1244 + $0x40] sm:$0xff]
    %v1254 = vld [vmem:[%s1244 + $0x48] sm:$0xff]
    %v1255 = vld [vmem:[%s1244 + $0x50] sm:$0xff]
    %v1256 = vld [vmem:[%s1244 + $0x58] sm:$0xff]
    %v1257 = vld [vmem:[%s1244 + $0x60] sm:$0xff]
    %v1258 = vld [vmem:[%s1244 + $0x68] sm:$0xff]
    %v1259 = vld [vmem:[%s1244 + $0x70] sm:$0xff]
    %v1260 = vld [vmem:[%s1244 + $0x78] sm:$0xff]
    %s1261 = scalar_lea.vmem %s5, 1
    %v1262 = vld [vmem:[%s1261] sm:$0x1]
    %v1264 = vlaneseq
    %v1265 = vshrl.u32 %v1264, 7
    %v1266 = vsub.s32 0, %v1265
    %v1267 = vrot.slane %v1262, %v1266
    %1269 = vmatprep.subr.mxu0 0.0
    %1270 = vmatpush1.msra.mxu0 %v1245
    %1271 = vmatprep.subr.mxu0 0.0
    %1272 = vmatpush1.msra.mxu0 %v1246
    %1273 = vmatprep.subr.mxu0 0.0
    %1274 = vmatpush1.msra.mxu0 %v1247
    %1275 = vmatprep.subr.mxu0 0.0
    %1276 = vmatpush1.msra.mxu0 %v1248
    %1277 = vmatprep.subr.mxu0 0.0
    %1278 = vmatpush1.msra.mxu0 %v1249
    %1279 = vmatprep.subr.mxu0 0.0
    %1280 = vmatpush1.msra.mxu0 %v1250
    %1281 = vmatprep.subr.mxu0 0.0
    %1282 = vmatpush1.msra.mxu0 %v1251
    %1283 = vmatprep.subr.mxu0 0.0
    %1284 = vmatpush1.msra.mxu0 %v1252
    %1285 = vmatprep.subr.mxu0 0.0
    %1286 = vmatpush1.msra.mxu0 %v1253
    %1287 = vmatprep.subr.mxu0 0.0
    %1288 = vmatpush1.msra.mxu0 %v1254
    %1289 = vmatprep.subr.mxu0 0.0
    %1290 = vmatpush1.msra.mxu0 %v1255
    %1291 = vmatprep.subr.mxu0 0.0
    %1292 = vmatpush1.msra.mxu0 %v1256
    %1293 = vmatprep.subr.mxu0 0.0
    %1294 = vmatpush1.msra.mxu0 %v1257
    %1295 = vmatprep.subr.mxu0 0.0
    %1296 = vmatpush1.msra.mxu0 %v1258
    %1297 = vmatprep.subr.mxu0 0.0
    %1298 = vmatpush1.msra.mxu0 %v1259
    %1299 = vmatprep.subr.mxu0 0.0
    %1300 = vmatpush1.msra.mxu0 %v1260
    %1301 = vmatprep.subr.mxu0 0.0
    %1302 = vmatpush1.msra.mxu0 0.0
    %1303 = vmatprep.subr.mxu0 0.0
    %1304 = vmatpush1.msra.mxu0 0.0
    %1305 = vmatprep.subr.mxu0 0.0
    %1306 = vmatpush1.msra.mxu0 0.0
    %1307 = vmatprep.subr.mxu0 0.0
    %1308 = vmatpush1.msra.mxu0 0.0
    %1309 = vmatprep.subr.mxu0 0.0
    %1310 = vmatpush1.msra.mxu0 0.0
    %1311 = vmatprep.subr.mxu0 0.0
    %1312 = vmatpush1.msra.mxu0 0.0
    %1313 = vmatprep.subr.mxu0 0.0
    %1314 = vmatpush1.msra.mxu0 0.0
    %1315 = vmatprep.subr.mxu0 0.0
    %1316 = vmatpush1.msra.mxu0 0.0
    %1317 = vmatprep.subr.mxu0 0.0
    %1318 = vmatpush1.msra.mxu0 0.0
    %1319 = vmatprep.subr.mxu0 0.0
    %1320 = vmatpush1.msra.mxu0 0.0
    %1321 = vmatprep.subr.mxu0 0.0
    %1322 = vmatpush1.msra.mxu0 0.0
    %1323 = vmatprep.subr.mxu0 0.0
    %1324 = vmatpush1.msra.mxu0 0.0
    %1325 = vmatprep.subr.mxu0 0.0
    %1326 = vmatpush1.msra.mxu0 0.0
    %1327 = vmatprep.subr.mxu0 0.0
    %1328 = vmatpush1.msra.mxu0 0.0
    %1329 = vmatprep.subr.mxu0 0.0
    %1330 = vmatpush1.msra.mxu0 0.0
    %1331 = vmatprep.subr.mxu0 0.0
    %1332 = vmatpush1.msra.mxu0 0.0
    %1333 = vmatprep.mubr.f32.mxu0 0.0
    %1334 = vmatmul.mubr.f32.gmra.mrb[0].mxu0 %v1241
    %v1335 = vpop.f32.mrb[0].mxu0
    %v1336 = vadd.f32 %v1267, %v1335
    %v1337 = vpop.f32.mrb[0].mxu0
    %1338 = vmatprep.mubr.f32.mxu0 0.0
    %1339 = vmatmul.mubr.f32.gmra.mrb[0].mxu0 %v1242
    %v1340 = vpop.f32.mrb[0].mxu0
    %v1341 = vadd.f32 %v1267, %v1340
    %v1342 = vpop.f32.mrb[0].mxu0
    %1343 = vmatprep.mubr.f32.mxu0 0.0
    %1344 = vmatmul.mubr.f32.gmra.mrb[0].mxu0 %v1243
    %v1345 = vpop.f32.mrb[0].mxu0
    %v1346 = vadd.f32 %v1267, %v1345
    %v1347 = vpop.f32.mrb[0].mxu0
    %1348 = vdwg.mxu0
    %v1349 = vmax.f32 %v1336, 0.0
    %v1350 = vmax.f32 %v1341, 0.0
    %v1351 = vmax.f32 %v1346, 0.0
    %s1352 = scalar_lea.vmem %s6, 128
    %v1353 = vld [vmem:[%s1352] sm:$0xff]
    %v1354 = vld [vmem:[%s1352 + $0x8] sm:$0xff]
    %v1355 = vld [vmem:[%s1352 + $0x10] sm:$0xff]
    %v1356 = vld [vmem:[%s1352 + $0x18] sm:$0xff]
    %v1357 = vld [vmem:[%s1352 + $0x20] sm:$0xff]
    %v1358 = vld [vmem:[%s1352 + $0x28] sm:$0xff]
    %v1359 = vld [vmem:[%s1352 + $0x30] sm:$0xff]
    %v1360 = vld [vmem:[%s1352 + $0x38] sm:$0xff]
    %v1361 = vld [vmem:[%s1352 + $0x40] sm:$0xff]
    %v1362 = vld [vmem:[%s1352 + $0x48] sm:$0xff]
    %v1363 = vld [vmem:[%s1352 + $0x50] sm:$0xff]
    %v1364 = vld [vmem:[%s1352 + $0x58] sm:$0xff]
    %v1365 = vld [vmem:[%s1352 + $0x60] sm:$0xff]
    %v1366 = vld [vmem:[%s1352 + $0x68] sm:$0xff]
    %v1367 = vld [vmem:[%s1352 + $0x70] sm:$0xff]
    %v1368 = vld [vmem:[%s1352 + $0x78] sm:$0xff]
    %s1369 = scalar_lea.vmem %s7, 1
    %v1370 = vld [vmem:[%s1369] sm:$0x1]
    %v1372 = vlaneseq
    %v1373 = vshrl.u32 %v1372, 7
    %v1374 = vsub.s32 0, %v1373
    %v1375 = vrot.slane %v1370, %v1374
    %1377 = vmatprep.subr.mxu0 0.0
    %1378 = vmatpush1.msra.mxu0 %v1353
    %1379 = vmatprep.subr.mxu0 0.0
    %1380 = vmatpush1.msra.mxu0 %v1354
    %1381 = vmatprep.subr.mxu0 0.0
    %1382 = vmatpush1.msra.mxu0 %v1355
    %1383 = vmatprep.subr.mxu0 0.0
    %1384 = vmatpush1.msra.mxu0 %v1356
    %1385 = vmatprep.subr.mxu0 0.0
    %1386 = vmatpush1.msra.mxu0 %v1357
    %1387 = vmatprep.subr.mxu0 0.0
    %1388 = vmatpush1.msra.mxu0 %v1358
    %1389 = vmatprep.subr.mxu0 0.0
    %1390 = vmatpush1.msra.mxu0 %v1359
    %1391 = vmatprep.subr.mxu0 0.0
    %1392 = vmatpush1.msra.mxu0 %v1360
    %1393 = vmatprep.subr.mxu0 0.0
    %1394 = vmatpush1.msra.mxu0 %v1361
    %1395 = vmatprep.subr.mxu0 0.0
    %1396 = vmatpush1.msra.mxu0 %v1362
    %1397 = vmatprep.subr.mxu0 0.0
    %1398 = vmatpush1.msra.mxu0 %v1363
    %1399 = vmatprep.subr.mxu0 0.0
    %1400 = vmatpush1.msra.mxu0 %v1364
    %1401 = vmatprep.subr.mxu0 0.0
    %1402 = vmatpush1.msra.mxu0 %v1365
    %1403 = vmatprep.subr.mxu0 0.0
    %1404 = vmatpush1.msra.mxu0 %v1366
    %1405 = vmatprep.subr.mxu0 0.0
    %1406 = vmatpush1.msra.mxu0 %v1367
    %1407 = vmatprep.subr.mxu0 0.0
    %1408 = vmatpush1.msra.mxu0 %v1368
    %1409 = vmatprep.subr.mxu0 0.0
    %1410 = vmatpush1.msra.mxu0 0.0
    %1411 = vmatprep.subr.mxu0 0.0
    %1412 = vmatpush1.msra.mxu0 0.0
    %1413 = vmatprep.subr.mxu0 0.0
    %1414 = vmatpush1.msra.mxu0 0.0
    %1415 = vmatprep.subr.mxu0 0.0
    %1416 = vmatpush1.msra.mxu0 0.0
    %1417 = vmatprep.subr.mxu0 0.0
    %1418 = vmatpush1.msra.mxu0 0.0
    %1419 = vmatprep.subr.mxu0 0.0
    %1420 = vmatpush1.msra.mxu0 0.0
    %1421 = vmatprep.subr.mxu0 0.0
    %1422 = vmatpush1.msra.mxu0 0.0
    %1423 = vmatprep.subr.mxu0 0.0
    %1424 = vmatpush1.msra.mxu0 0.0
    %1425 = vmatprep.subr.mxu0 0.0
    %1426 = vmatpush1.msra.mxu0 0.0
    %1427 = vmatprep.subr.mxu0 0.0
    %1428 = vmatpush1.msra.mxu0 0.0
    %1429 = vmatprep.subr.mxu0 0.0
    %1430 = vmatpush1.msra.mxu0 0.0
    %1431 = vmatprep.subr.mxu0 0.0
    %1432 = vmatpush1.msra.mxu0 0.0
    %1433 = vmatprep.subr.mxu0 0.0
    %1434 = vmatpush1.msra.mxu0 0.0
    %1435 = vmatprep.subr.mxu0 0.0
    %1436 = vmatpush1.msra.mxu0 0.0
    %1437 = vmatprep.subr.mxu0 0.0
    %1438 = vmatpush1.msra.mxu0 0.0
    %1439 = vmatprep.subr.mxu0 0.0
    %1440 = vmatpush1.msra.mxu0 0.0
    %1441 = vmatprep.mubr.f32.mxu0 0.0
    %1442 = vmatmul.mubr.f32.gmra.mrb[0].mxu0 %v1349
    %v1443 = vpop.f32.mrb[0].mxu0
    %v1444 = vadd.f32 %v1375, %v1443
    %v1445 = vpop.f32.mrb[0].mxu0
    %1446 = vmatprep.mubr.f32.mxu0 0.0
    %1447 = vmatmul.mubr.f32.gmra.mrb[0].mxu0 %v1350
    %v1448 = vpop.f32.mrb[0].mxu0
    %v1449 = vadd.f32 %v1375, %v1448
    %v1450 = vpop.f32.mrb[0].mxu0
    %1451 = vmatprep.mubr.f32.mxu0 0.0
    %1452 = vmatmul.mubr.f32.gmra.mrb[0].mxu0 %v1351
    %v1453 = vpop.f32.mrb[0].mxu0
    %v1454 = vadd.f32 %v1375, %v1453
    %v1455 = vpop.f32.mrb[0].mxu0
    %1456 = vdwg.mxu0
    %v1457 = vadd.f32 %v1444, %v1241
    %v1458 = vadd.f32 %v1449, %v1242
    %v1459 = vadd.f32 %v1454, %v1243
    %v1460 = vmax.f32 %v1457, 0.0
    %v1461 = vmax.f32 %v1458, 0.0
    %v1462 = vmax.f32 %v1459, 0.0
    %v1463 = vld [vmem:[%s8] sm:$0xff]
    %v1464 = vld [vmem:[%s8 + $0x8] sm:$0xff]
    %v1465 = vld [vmem:[%s8 + $0x10] sm:$0xff]
    %v1466 = vld [vmem:[%s8 + $0x18] sm:$0xff]
    %v1467 = vld [vmem:[%s8 + $0x20] sm:$0xff]
    %v1468 = vld [vmem:[%s8 + $0x28] sm:$0xff]
    %v1469 = vld [vmem:[%s8 + $0x30] sm:$0xff]
    %v1470 = vld [vmem:[%s8 + $0x38] sm:$0xff]
    %v1471 = vld [vmem:[%s8 + $0x40] sm:$0xff]
    %v1472 = vld [vmem:[%s8 + $0x48] sm:$0xff]
    %v1473 = vld [vmem:[%s8 + $0x50] sm:$0xff]
    %v1474 = vld [vmem:[%s8 + $0x58] sm:$0xff]
    %v1475 = vld [vmem:[%s8 + $0x60] sm:$0xff]
    %v1476 = vld [vmem:[%s8 + $0x68] sm:$0xff]
    %v1477 = vld [vmem:[%s8 + $0x70] sm:$0xff]
    %v1478 = vld [vmem:[%s8 + $0x78] sm:$0xff]
    %s1479 = scalar_lea.vmem %s8, 128
    %v1480 = vld [vmem:[%s1479] sm:$0xff]
    %v1481 = vld [vmem:[%s1479 + $0x8] sm:$0xff]
    %v1482 = vld [vmem:[%s1479 + $0x10] sm:$0xff]
    %v1483 = vld [vmem:[%s1479 + $0x18] sm:$0xff]
    %v1484 = vld [vmem:[%s1479 + $0x20] sm:$0xff]
    %v1485 = vld [vmem:[%s1479 + $0x28] sm:$0xff]
    %v1486 = vld [vmem:[%s1479 + $0x30] sm:$0xff]
    %v1487 = vld [vmem:[%s1479 + $0x38] sm:$0xff]
    %v1488 = vld [vmem:[%s1479 + $0x40] sm:$0xff]
    %v1489 = vld [vmem:[%s1479 + $0x48] sm:$0xff]
    %v1490 = vld [vmem:[%s1479 + $0x50] sm:$0xff]
    %v1491 = vld [vmem:[%s1479 + $0x58] sm:$0xff]
    %v1492 = vld [vmem:[%s1479 + $0x60] sm:$0xff]
    %v1493 = vld [vmem:[%s1479 + $0x68] sm:$0xff]
    %v1494 = vld [vmem:[%s1479 + $0x70] sm:$0xff]
    %v1495 = vld [vmem:[%s1479 + $0x78] sm:$0xff]
    %v1497 = vrot.slane %v1460, 2
    %1499 = vmatprep.subr.mxu0 0.0
    %1500 = vmatpush1.msra.mxu0 %v1480
    %1501 = vmatprep.subr.mxu0 0.0
    %1502 = vmatpush1.msra.mxu0 %v1481
    %1503 = vmatprep.subr.mxu0 0.0
    %1504 = vmatpush1.msra.mxu0 %v1482
    %1505 = vmatprep.subr.mxu0 0.0
    %1506 = vmatpush1.msra.mxu0 %v1483
    %1507 = vmatprep.subr.mxu0 0.0
    %1508 = vmatpush1.msra.mxu0 %v1484
    %1509 = vmatprep.subr.mxu0 0.0
    %1510 = vmatpush1.msra.mxu0 %v1485
    %1511 = vmatprep.subr.mxu0 0.0
    %1512 = vmatpush1.msra.mxu0 %v1486
    %1513 = vmatprep.subr.mxu0 0.0
    %1514 = vmatpush1.msra.mxu0 %v1487
    %1515 = vmatprep.subr.mxu0 0.0
    %1516 = vmatpush1.msra.mxu0 %v1488
    %1517 = vmatprep.subr.mxu0 0.0
    %1518 = vmatpush1.msra.mxu0 %v1489
    %1519 = vmatprep.subr.mxu0 0.0
    %1520 = vmatpush1.msra.mxu0 %v1490
    %1521 = vmatprep.subr.mxu0 0.0
    %1522 = vmatpush1.msra.mxu0 %v1491
    %1523 = vmatprep.subr.mxu0 0.0
    %1524 = vmatpush1.msra.mxu0 %v1492
    %1525 = vmatprep.subr.mxu0 0.0
    %1526 = vmatpush1.msra.mxu0 %v1493
    %1527 = vmatprep.subr.mxu0 0.0
    %1528 = vmatpush1.msra.mxu0 %v1494
    %1529 = vmatprep.subr.mxu0 0.0
    %1530 = vmatpush1.msra.mxu0 %v1495
    %1531 = vmatprep.subr.mxu0 0.0
    %1532 = vmatpush1.msra.mxu0 0.0
    %1533 = vmatprep.subr.mxu0 0.0
    %1534 = vmatpush1.msra.mxu0 0.0
    %1535 = vmatprep.subr.mxu0 0.0
    %1536 = vmatpush1.msra.mxu0 0.0
    %1537 = vmatprep.subr.mxu0 0.0
    %1538 = vmatpush1.msra.mxu0 0.0
    %1539 = vmatprep.subr.mxu0 0.0
    %1540 = vmatpush1.msra.mxu0 0.0
    %1541 = vmatprep.subr.mxu0 0.0
    %1542 = vmatpush1.msra.mxu0 0.0
    %1543 = vmatprep.subr.mxu0 0.0
    %1544 = vmatpush1.msra.mxu0 0.0
    %1545 = vmatprep.subr.mxu0 0.0
    %1546 = vmatpush1.msra.mxu0 0.0
    %1547 = vmatprep.subr.mxu0 0.0
    %1548 = vmatpush1.msra.mxu0 0.0
    %1549 = vmatprep.subr.mxu0 0.0
    %1550 = vmatpush1.msra.mxu0 0.0
    %1551 = vmatprep.subr.mxu0 0.0
    %1552 = vmatpush1.msra.mxu0 0.0
    %1553 = vmatprep.subr.mxu0 0.0
    %1554 = vmatpush1.msra.mxu0 0.0
    %1555 = vmatprep.subr.mxu0 0.0
    %1556 = vmatpush1.msra.mxu0 0.0
    %1557 = vmatprep.subr.mxu0 0.0
    %1558 = vmatpush1.msra.mxu0 0.0
    %1559 = vmatprep.subr.mxu0 0.0
    %1560 = vmatpush1.msra.mxu0 0.0
    %1561 = vmatprep.subr.mxu0 0.0
    %1562 = vmatpush1.msra.mxu0 0.0
    %1563 = vmatprep.mubr.f32.mxu0 0.0
    %1564 = vmatmul.mubr.f32.gmra.mrb[0].mxu0 %v1497
    %v1565 = vpop.f32.mrb[0].mxu0
    %v1566 = vadd.f32 0.0, %v1565
    %v1567 = vpop.f32.mrb[0].mxu0
    %1568 = vdwg.mxu0
    %1569 = vmatprep.subr.mxu0 0.0
    %1570 = vmatpush1.msra.mxu0 %v1463
    %1571 = vmatprep.subr.mxu0 0.0
    %1572 = vmatpush1.msra.mxu0 %v1464
    %1573 = vmatprep.subr.mxu0 0.0
    %1574 = vmatpush1.msra.mxu0 %v1465
    %1575 = vmatprep.subr.mxu0 0.0
    %1576 = vmatpush1.msra.mxu0 %v1466
    %1577 = vmatprep.subr.mxu0 0.0
    %1578 = vmatpush1.msra.mxu0 %v1467
    %1579 = vmatprep.subr.mxu0 0.0
    %1580 = vmatpush1.msra.mxu0 %v1468
    %1581 = vmatprep.subr.mxu0 0.0
    %1582 = vmatpush1.msra.mxu0 %v1469
    %1583 = vmatprep.subr.mxu0 0.0
    %1584 = vmatpush1.msra.mxu0 %v1470
    %1585 = vmatprep.subr.mxu0 0.0
    %1586 = vmatpush1.msra.mxu0 %v1471
    %1587 = vmatprep.subr.mxu0 0.0
    %1588 = vmatpush1.msra.mxu0 %v1472
    %1589 = vmatprep.subr.mxu0 0.0
    %1590 = vmatpush1.msra.mxu0 %v1473
    %1591 = vmatprep.subr.mxu0 0.0
    %1592 = vmatpush1.msra.mxu0 %v1474
    %1593 = vmatprep.subr.mxu0 0.0
    %1594 = vmatpush1.msra.mxu0 %v1475
    %1595 = vmatprep.subr.mxu0 0.0
    %1596 = vmatpush1.msra.mxu0 %v1476
    %1597 = vmatprep.subr.mxu0 0.0
    %1598 = vmatpush1.msra.mxu0 %v1477
    %1599 = vmatprep.subr.mxu0 0.0
    %1600 = vmatpush1.msra.mxu0 %v1478
    %1601 = vmatprep.subr.mxu0 0.0
    %1602 = vmatpush1.msra.mxu0 0.0
    %1603 = vmatprep.subr.mxu0 0.0
    %1604 = vmatpush1.msra.mxu0 0.0
    %1605 = vmatprep.subr.mxu0 0.0
    %1606 = vmatpush1.msra.mxu0 0.0
    %1607 = vmatprep.subr.mxu0 0.0
    %1608 = vmatpush1.msra.mxu0 0.0
    %1609 = vmatprep.subr.mxu0 0.0
    %1610 = vmatpush1.msra.mxu0 0.0
    %1611 = vmatprep.subr.mxu0 0.0
    %1612 = vmatpush1.msra.mxu0 0.0
    %1613 = vmatprep.subr.mxu0 0.0
    %1614 = vmatpush1.msra.mxu0 0.0
    %1615 = vmatprep.subr.mxu0 0.0
    %1616 = vmatpush1.msra.mxu0 0.0
    %1617 = vmatprep.subr.mxu0 0.0
    %1618 = vmatpush1.msra.mxu0 0.0
    %1619 = vmatprep.subr.mxu0 0.0
    %1620 = vmatpush1.msra.mxu0 0.0
    %1621 = vmatprep.subr.mxu0 0.0
    %1622 = vmatpush1.msra.mxu0 0.0
    %1623 = vmatprep.subr.mxu0 0.0
    %1624 = vmatpush1.msra.mxu0 0.0
    %1625 = vmatprep.subr.mxu0 0.0
    %1626 = vmatpush1.msra.mxu0 0.0
    %1627 = vmatprep.subr.mxu0 0.0
    %1628 = vmatpush1.msra.mxu0 0.0
    %1629 = vmatprep.subr.mxu0 0.0
    %1630 = vmatpush1.msra.mxu0 0.0
    %1631 = vmatprep.subr.mxu0 0.0
    %1632 = vmatpush1.msra.mxu0 0.0
    %1633 = vmatprep.mubr.f32.mxu0 0.0
    %1634 = vmatmul.mubr.f32.gmra.mrb[0].mxu0 %v1460
    %v1635 = vpop.f32.mrb[0].mxu0
    %v1636 = vadd.f32 %v1566, %v1635
    %v1637 = vpop.f32.mrb[0].mxu0
    %1638 = vdwg.mxu0
    %s1639 = scalar_lea.vmem %s8, 256
    %v1640 = vld [vmem:[%s1639] sm:$0xff]
    %v1641 = vld [vmem:[%s1639 + $0x8] sm:$0xff]
    %v1642 = vld [vmem:[%s1639 + $0x10] sm:$0xff]
    %v1643 = vld [vmem:[%s1639 + $0x18] sm:$0xff]
    %v1644 = vld [vmem:[%s1639 + $0x20] sm:$0xff]
    %v1645 = vld [vmem:[%s1639 + $0x28] sm:$0xff]
    %v1646 = vld [vmem:[%s1639 + $0x30] sm:$0xff]
    %v1647 = vld [vmem:[%s1639 + $0x38] sm:$0xff]
    %v1648 = vld [vmem:[%s1639 + $0x40] sm:$0xff]
    %v1649 = vld [vmem:[%s1639 + $0x48] sm:$0xff]
    %v1650 = vld [vmem:[%s1639 + $0x50] sm:$0xff]
    %v1651 = vld [vmem:[%s1639 + $0x58] sm:$0xff]
    %v1652 = vld [vmem:[%s1639 + $0x60] sm:$0xff]
    %v1653 = vld [vmem:[%s1639 + $0x68] sm:$0xff]
    %v1654 = vld [vmem:[%s1639 + $0x70] sm:$0xff]
    %v1655 = vld [vmem:[%s1639 + $0x78] sm:$0xff]
    %v1656 = vrot.slane %v1460, 4
    %1658 = vmatprep.subr.mxu0 0.0
    %1659 = vmatpush1.msra.mxu0 %v1640
    %1660 = vmatprep.subr.mxu0 0.0
    %1661 = vmatpush1.msra.mxu0 %v1641
    %1662 = vmatprep.subr.mxu0 0.0
    %1663 = vmatpush1.msra.mxu0 %v1642
    %1664 = vmatprep.subr.mxu0 0.0
    %1665 = vmatpush1.msra.mxu0 %v1643
    %1666 = vmatprep.subr.mxu0 0.0
    %1667 = vmatpush1.msra.mxu0 %v1644
    %1668 = vmatprep.subr.mxu0 0.0
    %1669 = vmatpush1.msra.mxu0 %v1645
    %1670 = vmatprep.subr.mxu0 0.0
    %1671 = vmatpush1.msra.mxu0 %v1646
    %1672 = vmatprep.subr.mxu0 0.0
    %1673 = vmatpush1.msra.mxu0 %v1647
    %1674 = vmatprep.subr.mxu0 0.0
    %1675 = vmatpush1.msra.mxu0 %v1648
    %1676 = vmatprep.subr.mxu0 0.0
    %1677 = vmatpush1.msra.mxu0 %v1649
    %1678 = vmatprep.subr.mxu0 0.0
    %1679 = vmatpush1.msra.mxu0 %v1650
    %1680 = vmatprep.subr.mxu0 0.0
    %1681 = vmatpush1.msra.mxu0 %v1651
    %1682 = vmatprep.subr.mxu0 0.0
    %1683 = vmatpush1.msra.mxu0 %v1652
    %1684 = vmatprep.subr.mxu0 0.0
    %1685 = vmatpush1.msra.mxu0 %v1653
    %1686 = vmatprep.subr.mxu0 0.0
    %1687 = vmatpush1.msra.mxu0 %v1654
    %1688 = vmatprep.subr.mxu0 0.0
    %1689 = vmatpush1.msra.mxu0 %v1655
    %1690 = vmatprep.subr.mxu0 0.0
    %1691 = vmatpush1.msra.mxu0 0.0
    %1692 = vmatprep.subr.mxu0 0.0
    %1693 = vmatpush1.msra.mxu0 0.0
    %1694 = vmatprep.subr.mxu0 0.0
    %1695 = vmatpush1.msra.mxu0 0.0
    %1696 = vmatprep.subr.mxu0 0.0
    %1697 = vmatpush1.msra.mxu0 0.0
    %1698 = vmatprep.subr.mxu0 0.0
    %1699 = vmatpush1.msra.mxu0 0.0
    %1700 = vmatprep.subr.mxu0 0.0
    %1701 = vmatpush1.msra.mxu0 0.0
    %1702 = vmatprep.subr.mxu0 0.0
    %1703 = vmatpush1.msra.mxu0 0.0
    %1704 = vmatprep.subr.mxu0 0.0
    %1705 = vmatpush1.msra.mxu0 0.0
    %1706 = vmatprep.subr.mxu0 0.0
    %1707 = vmatpush1.msra.mxu0 0.0
    %1708 = vmatprep.subr.mxu0 0.0
    %1709 = vmatpush1.msra.mxu0 0.0
    %1710 = vmatprep.subr.mxu0 0.0
    %1711 = vmatpush1.msra.mxu0 0.0
    %1712 = vmatprep.subr.mxu0 0.0
    %1713 = vmatpush1.msra.mxu0 0.0
    %1714 = vmatprep.subr.mxu0 0.0
    %1715 = vmatpush1.msra.mxu0 0.0
    %1716 = vmatprep.subr.mxu0 0.0
    %1717 = vmatpush1.msra.mxu0 0.0
    %1718 = vmatprep.subr.mxu0 0.0
    %1719 = vmatpush1.msra.mxu0 0.0
    %1720 = vmatprep.subr.mxu0 0.0
    %1721 = vmatpush1.msra.mxu0 0.0
    %1722 = vmatprep.mubr.f32.mxu0 0.0
    %1723 = vmatmul.mubr.f32.gmra.mrb[0].mxu0 %v1656
    %v1724 = vpop.f32.mrb[0].mxu0
    %v1725 = vadd.f32 0.0, %v1724
    %v1726 = vpop.f32.mrb[0].mxu0
    %1727 = vdwg.mxu0
    %v1728 = vadd.f32 %v1636, %v1725
    %s1729 = scalar_lea.vmem %s8, 384
    %v1730 = vld [vmem:[%s1729] sm:$0xff]
    %v1731 = vld [vmem:[%s1729 + $0x8] sm:$0xff]
    %v1732 = vld [vmem:[%s1729 + $0x10] sm:$0xff]
    %v1733 = vld [vmem:[%s1729 + $0x18] sm:$0xff]
    %v1734 = vld [vmem:[%s1729 + $0x20] sm:$0xff]
    %v1735 = vld [vmem:[%s1729 + $0x28] sm:$0xff]
    %v1736 = vld [vmem:[%s1729 + $0x30] sm:$0xff]
    %v1737 = vld [vmem:[%s1729 + $0x38] sm:$0xff]
    %v1738 = vld [vmem:[%s1729 + $0x40] sm:$0xff]
    %v1739 = vld [vmem:[%s1729 + $0x48] sm:$0xff]
    %v1740 = vld [vmem:[%s1729 + $0x50] sm:$0xff]
    %v1741 = vld [vmem:[%s1729 + $0x58] sm:$0xff]
    %v1742 = vld [vmem:[%s1729 + $0x60] sm:$0xff]
    %v1743 = vld [vmem:[%s1729 + $0x68] sm:$0xff]
    %v1744 = vld [vmem:[%s1729 + $0x70] sm:$0xff]
    %v1745 = vld [vmem:[%s1729 + $0x78] sm:$0xff]
    %v1746 = vrot.slane %v1460, 6
    %1748 = vmatprep.subr.mxu0 0.0
    %1749 = vmatpush1.msra.mxu0 %v1730
    %1750 = vmatprep.subr.mxu0 0.0
    %1751 = vmatpush1.msra.mxu0 %v1731
    %1752 = vmatprep.subr.mxu0 0.0
    %1753 = vmatpush1.msra.mxu0 %v1732
    %1754 = vmatprep.subr.mxu0 0.0
    %1755 = vmatpush1.msra.mxu0 %v1733
    %1756 = vmatprep.subr.mxu0 0.0
    %1757 = vmatpush1.msra.mxu0 %v1734
    %1758 = vmatprep.subr.mxu0 0.0
    %1759 = vmatpush1.msra.mxu0 %v1735
    %1760 = vmatprep.subr.mxu0 0.0
    %1761 = vmatpush1.msra.mxu0 %v1736
    %1762 = vmatprep.subr.mxu0 0.0
    %1763 = vmatpush1.msra.mxu0 %v1737
    %1764 = vmatprep.subr.mxu0 0.0
    %1765 = vmatpush1.msra.mxu0 %v1738
    %1766 = vmatprep.subr.mxu0 0.0
    %1767 = vmatpush1.msra.mxu0 %v1739
    %1768 = vmatprep.subr.mxu0 0.0
    %1769 = vmatpush1.msra.mxu0 %v1740
    %1770 = vmatprep.subr.mxu0 0.0
    %1771 = vmatpush1.msra.mxu0 %v1741
    %1772 = vmatprep.subr.mxu0 0.0
    %1773 = vmatpush1.msra.mxu0 %v1742
    %1774 = vmatprep.subr.mxu0 0.0
    %1775 = vmatpush1.msra.mxu0 %v1743
    %1776 = vmatprep.subr.mxu0 0.0
    %1777 = vmatpush1.msra.mxu0 %v1744
    %1778 = vmatprep.subr.mxu0 0.0
    %1779 = vmatpush1.msra.mxu0 %v1745
    %1780 = vmatprep.subr.mxu0 0.0
    %1781 = vmatpush1.msra.mxu0 0.0
    %1782 = vmatprep.subr.mxu0 0.0
    %1783 = vmatpush1.msra.mxu0 0.0
    %1784 = vmatprep.subr.mxu0 0.0
    %1785 = vmatpush1.msra.mxu0 0.0
    %1786 = vmatprep.subr.mxu0 0.0
    %1787 = vmatpush1.msra.mxu0 0.0
    %1788 = vmatprep.subr.mxu0 0.0
    %1789 = vmatpush1.msra.mxu0 0.0
    %1790 = vmatprep.subr.mxu0 0.0
    %1791 = vmatpush1.msra.mxu0 0.0
    %1792 = vmatprep.subr.mxu0 0.0
    %1793 = vmatpush1.msra.mxu0 0.0
    %1794 = vmatprep.subr.mxu0 0.0
    %1795 = vmatpush1.msra.mxu0 0.0
    %1796 = vmatprep.subr.mxu0 0.0
    %1797 = vmatpush1.msra.mxu0 0.0
    %1798 = vmatprep.subr.mxu0 0.0
    %1799 = vmatpush1.msra.mxu0 0.0
    %1800 = vmatprep.subr.mxu0 0.0
    %1801 = vmatpush1.msra.mxu0 0.0
    %1802 = vmatprep.subr.mxu0 0.0
    %1803 = vmatpush1.msra.mxu0 0.0
    %1804 = vmatprep.subr.mxu0 0.0
    %1805 = vmatpush1.msra.mxu0 0.0
    %1806 = vmatprep.subr.mxu0 0.0
    %1807 = vmatpush1.msra.mxu0 0.0
    %1808 = vmatprep.subr.mxu0 0.0
    %1809 = vmatpush1.msra.mxu0 0.0
    %1810 = vmatprep.subr.mxu0 0.0
    %1811 = vmatpush1.msra.mxu0 0.0
    %1812 = vmatprep.mubr.f32.mxu0 0.0
    %1813 = vmatmul.mubr.f32.gmra.mrb[0].mxu0 %v1746
    %v1814 = vpop.f32.mrb[0].mxu0
    %v1815 = vadd.f32 0.0, %v1814
    %v1816 = vpop.f32.mrb[0].mxu0
    %1817 = vdwg.mxu0
    %v1818 = vadd.f32 %v1728, %v1815
    %s1819 = scalar_lea.vmem %s8, 512
    %v1820 = vld [vmem:[%s1819] sm:$0xff]
    %v1821 = vld [vmem:[%s1819 + $0x8] sm:$0xff]
    %v1822 = vld [vmem:[%s1819 + $0x10] sm:$0xff]
    %v1823 = vld [vmem:[%s1819 + $0x18] sm:$0xff]
    %v1824 = vld [vmem:[%s1819 + $0x20] sm:$0xff]
    %v1825 = vld [vmem:[%s1819 + $0x28] sm:$0xff]
    %v1826 = vld [vmem:[%s1819 + $0x30] sm:$0xff]
    %v1827 = vld [vmem:[%s1819 + $0x38] sm:$0xff]
    %v1828 = vld [vmem:[%s1819 + $0x40] sm:$0xff]
    %v1829 = vld [vmem:[%s1819 + $0x48] sm:$0xff]
    %v1830 = vld [vmem:[%s1819 + $0x50] sm:$0xff]
    %v1831 = vld [vmem:[%s1819 + $0x58] sm:$0xff]
    %v1832 = vld [vmem:[%s1819 + $0x60] sm:$0xff]
    %v1833 = vld [vmem:[%s1819 + $0x68] sm:$0xff]
    %v1834 = vld [vmem:[%s1819 + $0x70] sm:$0xff]
    %v1835 = vld [vmem:[%s1819 + $0x78] sm:$0xff]
    %1836 = vmatprep.subr.mxu0 0.0
    %1837 = vmatpush1.msra.mxu0 %v1820
    %1838 = vmatprep.subr.mxu0 0.0
    %1839 = vmatpush1.msra.mxu0 %v1821
    %1840 = vmatprep.subr.mxu0 0.0
    %1841 = vmatpush1.msra.mxu0 %v1822
    %1842 = vmatprep.subr.mxu0 0.0
    %1843 = vmatpush1.msra.mxu0 %v1823
    %1844 = vmatprep.subr.mxu0 0.0
    %1845 = vmatpush1.msra.mxu0 %v1824
    %1846 = vmatprep.subr.mxu0 0.0
    %1847 = vmatpush1.msra.mxu0 %v1825
    %1848 = vmatprep.subr.mxu0 0.0
    %1849 = vmatpush1.msra.mxu0 %v1826
    %1850 = vmatprep.subr.mxu0 0.0
    %1851 = vmatpush1.msra.mxu0 %v1827
    %1852 = vmatprep.subr.mxu0 0.0
    %1853 = vmatpush1.msra.mxu0 %v1828
    %1854 = vmatprep.subr.mxu0 0.0
    %1855 = vmatpush1.msra.mxu0 %v1829
    %1856 = vmatprep.subr.mxu0 0.0
    %1857 = vmatpush1.msra.mxu0 %v1830
    %1858 = vmatprep.subr.mxu0 0.0
    %1859 = vmatpush1.msra.mxu0 %v1831
    %1860 = vmatprep.subr.mxu0 0.0
    %1861 = vmatpush1.msra.mxu0 %v1832
    %1862 = vmatprep.subr.mxu0 0.0
    %1863 = vmatpush1.msra.mxu0 %v1833
    %1864 = vmatprep.subr.mxu0 0.0
    %1865 = vmatpush1.msra.mxu0 %v1834
    %1866 = vmatprep.subr.mxu0 0.0
    %1867 = vmatpush1.msra.mxu0 %v1835
    %1868 = vmatprep.subr.mxu0 0.0
    %1869 = vmatpush1.msra.mxu0 0.0
    %1870 = vmatprep.subr.mxu0 0.0
    %1871 = vmatpush1.msra.mxu0 0.0
    %1872 = vmatprep.subr.mxu0 0.0
    %1873 = vmatpush1.msra.mxu0 0.0
    %1874 = vmatprep.subr.mxu0 0.0
    %1875 = vmatpush1.msra.mxu0 0.0
    %1876 = vmatprep.subr.mxu0 0.0
    %1877 = vmatpush1.msra.mxu0 0.0
    %1878 = vmatprep.subr.mxu0 0.0
    %1879 = vmatpush1.msra.mxu0 0.0
    %1880 = vmatprep.subr.mxu0 0.0
    %1881 = vmatpush1.msra.mxu0 0.0
    %1882 = vmatprep.subr.mxu0 0.0
    %1883 = vmatpush1.msra.mxu0 0.0
    %1884 = vmatprep.subr.mxu0 0.0
    %1885 = vmatpush1.msra.mxu0 0.0
    %1886 = vmatprep.subr.mxu0 0.0
    %1887 = vmatpush1.msra.mxu0 0.0
    %1888 = vmatprep.subr.mxu0 0.0
    %1889 = vmatpush1.msra.mxu0 0.0
    %1890 = vmatprep.subr.mxu0 0.0
    %1891 = vmatpush1.msra.mxu0 0.0
    %1892 = vmatprep.subr.mxu0 0.0
    %1893 = vmatpush1.msra.mxu0 0.0
    %1894 = vmatprep.subr.mxu0 0.0
    %1895 = vmatpush1.msra.mxu0 0.0
    %1896 = vmatprep.subr.mxu0 0.0
    %1897 = vmatpush1.msra.mxu0 0.0
    %1898 = vmatprep.subr.mxu0 0.0
    %1899 = vmatpush1.msra.mxu0 0.0
    %1900 = vmatprep.mubr.f32.mxu0 0.0
    %1901 = vmatmul.mubr.f32.gmra.mrb[0].mxu0 %v1461
    %v1902 = vpop.f32.mrb[0].mxu0
    %v1903 = vadd.f32 0.0, %v1902
    %v1904 = vpop.f32.mrb[0].mxu0
    %1905 = vdwg.mxu0
    %v1906 = vadd.f32 %v1818, %v1903
    %s1907 = scalar_lea.vmem %s8, 640
    %v1908 = vld [vmem:[%s1907] sm:$0xff]
    %v1909 = vld [vmem:[%s1907 + $0x8] sm:$0xff]
    %v1910 = vld [vmem:[%s1907 + $0x10] sm:$0xff]
    %v1911 = vld [vmem:[%s1907 + $0x18] sm:$0xff]
    %v1912 = vld [vmem:[%s1907 + $0x20] sm:$0xff]
    %v1913 = vld [vmem:[%s1907 + $0x28] sm:$0xff]
    %v1914 = vld [vmem:[%s1907 + $0x30] sm:$0xff]
    %v1915 = vld [vmem:[%s1907 + $0x38] sm:$0xff]
    %v1916 = vld [vmem:[%s1907 + $0x40] sm:$0xff]
    %v1917 = vld [vmem:[%s1907 + $0x48] sm:$0xff]
    %v1918 = vld [vmem:[%s1907 + $0x50] sm:$0xff]
    %v1919 = vld [vmem:[%s1907 + $0x58] sm:$0xff]
    %v1920 = vld [vmem:[%s1907 + $0x60] sm:$0xff]
    %v1921 = vld [vmem:[%s1907 + $0x68] sm:$0xff]
    %v1922 = vld [vmem:[%s1907 + $0x70] sm:$0xff]
    %v1923 = vld [vmem:[%s1907 + $0x78] sm:$0xff]
    %v1925 = vrot.slane %v1461, 2
    %1927 = vmatprep.subr.mxu0 0.0
    %1928 = vmatpush1.msra.mxu0 %v1908
    %1929 = vmatprep.subr.mxu0 0.0
    %1930 = vmatpush1.msra.mxu0 %v1909
    %1931 = vmatprep.subr.mxu0 0.0
    %1932 = vmatpush1.msra.mxu0 %v1910
    %1933 = vmatprep.subr.mxu0 0.0
    %1934 = vmatpush1.msra.mxu0 %v1911
    %1935 = vmatprep.subr.mxu0 0.0
    %1936 = vmatpush1.msra.mxu0 %v1912
    %1937 = vmatprep.subr.mxu0 0.0
    %1938 = vmatpush1.msra.mxu0 %v1913
    %1939 = vmatprep.subr.mxu0 0.0
    %1940 = vmatpush1.msra.mxu0 %v1914
    %1941 = vmatprep.subr.mxu0 0.0
    %1942 = vmatpush1.msra.mxu0 %v1915
    %1943 = vmatprep.subr.mxu0 0.0
    %1944 = vmatpush1.msra.mxu0 %v1916
    %1945 = vmatprep.subr.mxu0 0.0
    %1946 = vmatpush1.msra.mxu0 %v1917
    %1947 = vmatprep.subr.mxu0 0.0
    %1948 = vmatpush1.msra.mxu0 %v1918
    %1949 = vmatprep.subr.mxu0 0.0
    %1950 = vmatpush1.msra.mxu0 %v1919
    %1951 = vmatprep.subr.mxu0 0.0
    %1952 = vmatpush1.msra.mxu0 %v1920
    %1953 = vmatprep.subr.mxu0 0.0
    %1954 = vmatpush1.msra.mxu0 %v1921
    %1955 = vmatprep.subr.mxu0 0.0
    %1956 = vmatpush1.msra.mxu0 %v1922
    %1957 = vmatprep.subr.mxu0 0.0
    %1958 = vmatpush1.msra.mxu0 %v1923
    %1959 = vmatprep.subr.mxu0 0.0
    %1960 = vmatpush1.msra.mxu0 0.0
    %1961 = vmatprep.subr.mxu0 0.0
    %1962 = vmatpush1.msra.mxu0 0.0
    %1963 = vmatprep.subr.mxu0 0.0
    %1964 = vmatpush1.msra.mxu0 0.0
    %1965 = vmatprep.subr.mxu0 0.0
    %1966 = vmatpush1.msra.mxu0 0.0
    %1967 = vmatprep.subr.mxu0 0.0
    %1968 = vmatpush1.msra.mxu0 0.0
    %1969 = vmatprep.subr.mxu0 0.0
    %1970 = vmatpush1.msra.mxu0 0.0
    %1971 = vmatprep.subr.mxu0 0.0
    %1972 = vmatpush1.msra.mxu0 0.0
    %1973 = vmatprep.subr.mxu0 0.0
    %1974 = vmatpush1.msra.mxu0 0.0
    %1975 = vmatprep.subr.mxu0 0.0
    %1976 = vmatpush1.msra.mxu0 0.0
    %1977 = vmatprep.subr.mxu0 0.0
    %1978 = vmatpush1.msra.mxu0 0.0
    %1979 = vmatprep.subr.mxu0 0.0
    %1980 = vmatpush1.msra.mxu0 0.0
    %1981 = vmatprep.subr.mxu0 0.0
    %1982 = vmatpush1.msra.mxu0 0.0
    %1983 = vmatprep.subr.mxu0 0.0
    %1984 = vmatpush1.msra.mxu0 0.0
    %1985 = vmatprep.subr.mxu0 0.0
    %1986 = vmatpush1.msra.mxu0 0.0
    %1987 = vmatprep.subr.mxu0 0.0
    %1988 = vmatpush1.msra.mxu0 0.0
    %1989 = vmatprep.subr.mxu0 0.0
    %1990 = vmatpush1.msra.mxu0 0.0
    %1991 = vmatprep.mubr.f32.mxu0 0.0
    %1992 = vmatmul.mubr.f32.gmra.mrb[0].mxu0 %v1925
    %v1993 = vpop.f32.mrb[0].mxu0
    %v1994 = vadd.f32 0.0, %v1993
    %v1995 = vpop.f32.mrb[0].mxu0
    %1996 = vdwg.mxu0
    %v1997 = vadd.f32 %v1906, %v1994
    %s1998 = scalar_lea.vmem %s8, 768
    %v1999 = vld [vmem:[%s1998] sm:$0xff]
    %v2000 = vld [vmem:[%s1998 + $0x8] sm:$0xff]
    %v2001 = vld [vmem:[%s1998 + $0x10] sm:$0xff]
    %v2002 = vld [vmem:[%s1998 + $0x18] sm:$0xff]
    %v2003 = vld [vmem:[%s1998 + $0x20] sm:$0xff]
    %v2004 = vld [vmem:[%s1998 + $0x28] sm:$0xff]
    %v2005 = vld [vmem:[%s1998 + $0x30] sm:$0xff]
    %v2006 = vld [vmem:[%s1998 + $0x38] sm:$0xff]
    %v2007 = vld [vmem:[%s1998 + $0x40] sm:$0xff]
    %v2008 = vld [vmem:[%s1998 + $0x48] sm:$0xff]
    %v2009 = vld [vmem:[%s1998 + $0x50] sm:$0xff]
    %v2010 = vld [vmem:[%s1998 + $0x58] sm:$0xff]
    %v2011 = vld [vmem:[%s1998 + $0x60] sm:$0xff]
    %v2012 = vld [vmem:[%s1998 + $0x68] sm:$0xff]
    %v2013 = vld [vmem:[%s1998 + $0x70] sm:$0xff]
    %v2014 = vld [vmem:[%s1998 + $0x78] sm:$0xff]
    %v2015 = vrot.slane %v1461, 4
    %2017 = vmatprep.subr.mxu0 0.0
    %2018 = vmatpush1.msra.mxu0 %v1999
    %2019 = vmatprep.subr.mxu0 0.0
    %2020 = vmatpush1.msra.mxu0 %v2000
    %2021 = vmatprep.subr.mxu0 0.0
    %2022 = vmatpush1.msra.mxu0 %v2001
    %2023 = vmatprep.subr.mxu0 0.0
    %2024 = vmatpush1.msra.mxu0 %v2002
    %2025 = vmatprep.subr.mxu0 0.0
    %2026 = vmatpush1.msra.mxu0 %v2003
    %2027 = vmatprep.subr.mxu0 0.0
    %2028 = vmatpush1.msra.mxu0 %v2004
    %2029 = vmatprep.subr.mxu0 0.0
    %2030 = vmatpush1.msra.mxu0 %v2005
    %2031 = vmatprep.subr.mxu0 0.0
    %2032 = vmatpush1.msra.mxu0 %v2006
    %2033 = vmatprep.subr.mxu0 0.0
    %2034 = vmatpush1.msra.mxu0 %v2007
    %2035 = vmatprep.subr.mxu0 0.0
    %2036 = vmatpush1.msra.mxu0 %v2008
    %2037 = vmatprep.subr.mxu0 0.0
    %2038 = vmatpush1.msra.mxu0 %v2009
    %2039 = vmatprep.subr.mxu0 0.0
    %2040 = vmatpush1.msra.mxu0 %v2010
    %2041 = vmatprep.subr.mxu0 0.0
    %2042 = vmatpush1.msra.mxu0 %v2011
    %2043 = vmatprep.subr.mxu0 0.0
    %2044 = vmatpush1.msra.mxu0 %v2012
    %2045 = vmatprep.subr.mxu0 0.0
    %2046 = vmatpush1.msra.mxu0 %v2013
    %2047 = vmatprep.subr.mxu0 0.0
    %2048 = vmatpush1.msra.mxu0 %v2014
    %2049 = vmatprep.subr.mxu0 0.0
    %2050 = vmatpush1.msra.mxu0 0.0
    %2051 = vmatprep.subr.mxu0 0.0
    %2052 = vmatpush1.msra.mxu0 0.0
    %2053 = vmatprep.subr.mxu0 0.0
    %2054 = vmatpush1.msra.mxu0 0.0
    %2055 = vmatprep.subr.mxu0 0.0
    %2056 = vmatpush1.msra.mxu0 0.0
    %2057 = vmatprep.subr.mxu0 0.0
    %2058 = vmatpush1.msra.mxu0 0.0
    %2059 = vmatprep.subr.mxu0 0.0
    %2060 = vmatpush1.msra.mxu0 0.0
    %2061 = vmatprep.subr.mxu0 0.0
    %2062 = vmatpush1.msra.mxu0 0.0
    %2063 = vmatprep.subr.mxu0 0.0
    %2064 = vmatpush1.msra.mxu0 0.0
    %2065 = vmatprep.subr.mxu0 0.0
    %2066 = vmatpush1.msra.mxu0 0.0
    %2067 = vmatprep.subr.mxu0 0.0
    %2068 = vmatpush1.msra.mxu0 0.0
    %2069 = vmatprep.subr.mxu0 0.0
    %2070 = vmatpush1.msra.mxu0 0.0
    %2071 = vmatprep.subr.mxu0 0.0
    %2072 = vmatpush1.msra.mxu0 0.0
    %2073 = vmatprep.subr.mxu0 0.0
    %2074 = vmatpush1.msra.mxu0 0.0
    %2075 = vmatprep.subr.mxu0 0.0
    %2076 = vmatpush1.msra.mxu0 0.0
    %2077 = vmatprep.subr.mxu0 0.0
    %2078 = vmatpush1.msra.mxu0 0.0
    %2079 = vmatprep.subr.mxu0 0.0
    %2080 = vmatpush1.msra.mxu0 0.0
    %2081 = vmatprep.mubr.f32.mxu0 0.0
    %2082 = vmatmul.mubr.f32.gmra.mrb[0].mxu0 %v2015
    %v2083 = vpop.f32.mrb[0].mxu0
    %v2084 = vadd.f32 0.0, %v2083
    %v2085 = vpop.f32.mrb[0].mxu0
    %2086 = vdwg.mxu0
    %v2087 = vadd.f32 %v1997, %v2084
    %s2088 = scalar_lea.vmem %s8, 896
    %v2089 = vld [vmem:[%s2088] sm:$0xff]
    %v2090 = vld [vmem:[%s2088 + $0x8] sm:$0xff]
    %v2091 = vld [vmem:[%s2088 + $0x10] sm:$0xff]
    %v2092 = vld [vmem:[%s2088 + $0x18] sm:$0xff]
    %v2093 = vld [vmem:[%s2088 + $0x20] sm:$0xff]
    %v2094 = vld [vmem:[%s2088 + $0x28] sm:$0xff]
    %v2095 = vld [vmem:[%s2088 + $0x30] sm:$0xff]
    %v2096 = vld [vmem:[%s2088 + $0x38] sm:$0xff]
    %v2097 = vld [vmem:[%s2088 + $0x40] sm:$0xff]
    %v2098 = vld [vmem:[%s2088 + $0x48] sm:$0xff]
    %v2099 = vld [vmem:[%s2088 + $0x50] sm:$0xff]
    %v2100 = vld [vmem:[%s2088 + $0x58] sm:$0xff]
    %v2101 = vld [vmem:[%s2088 + $0x60] sm:$0xff]
    %v2102 = vld [vmem:[%s2088 + $0x68] sm:$0xff]
    %v2103 = vld [vmem:[%s2088 + $0x70] sm:$0xff]
    %v2104 = vld [vmem:[%s2088 + $0x78] sm:$0xff]
    %v2105 = vrot.slane %v1461, 6
    %2107 = vmatprep.subr.mxu0 0.0
    %2108 = vmatpush1.msra.mxu0 %v2089
    %2109 = vmatprep.subr.mxu0 0.0
    %2110 = vmatpush1.msra.mxu0 %v2090
    %2111 = vmatprep.subr.mxu0 0.0
    %2112 = vmatpush1.msra.mxu0 %v2091
    %2113 = vmatprep.subr.mxu0 0.0
    %2114 = vmatpush1.msra.mxu0 %v2092
    %2115 = vmatprep.subr.mxu0 0.0
    %2116 = vmatpush1.msra.mxu0 %v2093
    %2117 = vmatprep.subr.mxu0 0.0
    %2118 = vmatpush1.msra.mxu0 %v2094
    %2119 = vmatprep.subr.mxu0 0.0
    %2120 = vmatpush1.msra.mxu0 %v2095
    %2121 = vmatprep.subr.mxu0 0.0
    %2122 = vmatpush1.msra.mxu0 %v2096
    %2123 = vmatprep.subr.mxu0 0.0
    %2124 = vmatpush1.msra.mxu0 %v2097
    %2125 = vmatprep.subr.mxu0 0.0
    %2126 = vmatpush1.msra.mxu0 %v2098
    %2127 = vmatprep.subr.mxu0 0.0
    %2128 = vmatpush1.msra.mxu0 %v2099
    %2129 = vmatprep.subr.mxu0 0.0
    %2130 = vmatpush1.msra.mxu0 %v2100
    %2131 = vmatprep.subr.mxu0 0.0
    %2132 = vmatpush1.msra.mxu0 %v2101
    %2133 = vmatprep.subr.mxu0 0.0
    %2134 = vmatpush1.msra.mxu0 %v2102
    %2135 = vmatprep.subr.mxu0 0.0
    %2136 = vmatpush1.msra.mxu0 %v2103
    %2137 = vmatprep.subr.mxu0 0.0
    %2138 = vmatpush1.msra.mxu0 %v2104
    %2139 = vmatprep.subr.mxu0 0.0
    %2140 = vmatpush1.msra.mxu0 0.0
    %2141 = vmatprep.subr.mxu0 0.0
    %2142 = vmatpush1.msra.mxu0 0.0
    %2143 = vmatprep.subr.mxu0 0.0
    %2144 = vmatpush1.msra.mxu0 0.0
    %2145 = vmatprep.subr.mxu0 0.0
    %2146 = vmatpush1.msra.mxu0 0.0
    %2147 = vmatprep.subr.mxu0 0.0
    %2148 = vmatpush1.msra.mxu0 0.0
    %2149 = vmatprep.subr.mxu0 0.0
    %2150 = vmatpush1.msra.mxu0 0.0
    %2151 = vmatprep.subr.mxu0 0.0
    %2152 = vmatpush1.msra.mxu0 0.0
    %2153 = vmatprep.subr.mxu0 0.0
    %2154 = vmatpush1.msra.mxu0 0.0
    %2155 = vmatprep.subr.mxu0 0.0
    %2156 = vmatpush1.msra.mxu0 0.0
    %2157 = vmatprep.subr.mxu0 0.0
    %2158 = vmatpush1.msra.mxu0 0.0
    %2159 = vmatprep.subr.mxu0 0.0
    %2160 = vmatpush1.msra.mxu0 0.0
    %2161 = vmatprep.subr.mxu0 0.0
    %2162 = vmatpush1.msra.mxu0 0.0
    %2163 = vmatprep.subr.mxu0 0.0
    %2164 = vmatpush1.msra.mxu0 0.0
    %2165 = vmatprep.subr.mxu0 0.0
    %2166 = vmatpush1.msra.mxu0 0.0
    %2167 = vmatprep.subr.mxu0 0.0
    %2168 = vmatpush1.msra.mxu0 0.0
    %2169 = vmatprep.subr.mxu0 0.0
    %2170 = vmatpush1.msra.mxu0 0.0
    %2171 = vmatprep.mubr.f32.mxu0 0.0
    %2172 = vmatmul.mubr.f32.gmra.mrb[0].mxu0 %v2105
    %v2173 = vpop.f32.mrb[0].mxu0
    %v2174 = vadd.f32 0.0, %v2173
    %v2175 = vpop.f32.mrb[0].mxu0
    %2176 = vdwg.mxu0
    %v2177 = vadd.f32 %v2087, %v2174
    %s2178 = scalar_lea.vmem %s8, 1024
    %v2179 = vld [vmem:[%s2178] sm:$0xff]
    %v2180 = vld [vmem:[%s2178 + $0x8] sm:$0xff]
    %v2181 = vld [vmem:[%s2178 + $0x10] sm:$0xff]
    %v2182 = vld [vmem:[%s2178 + $0x18] sm:$0xff]
    %v2183 = vld [vmem:[%s2178 + $0x20] sm:$0xff]
    %v2184 = vld [vmem:[%s2178 + $0x28] sm:$0xff]
    %v2185 = vld [vmem:[%s2178 + $0x30] sm:$0xff]
    %v2186 = vld [vmem:[%s2178 + $0x38] sm:$0xff]
    %v2187 = vld [vmem:[%s2178 + $0x40] sm:$0xff]
    %v2188 = vld [vmem:[%s2178 + $0x48] sm:$0xff]
    %v2189 = vld [vmem:[%s2178 + $0x50] sm:$0xff]
    %v2190 = vld [vmem:[%s2178 + $0x58] sm:$0xff]
    %v2191 = vld [vmem:[%s2178 + $0x60] sm:$0xff]
    %v2192 = vld [vmem:[%s2178 + $0x68] sm:$0xff]
    %v2193 = vld [vmem:[%s2178 + $0x70] sm:$0xff]
    %v2194 = vld [vmem:[%s2178 + $0x78] sm:$0xff]
    %2195 = vmatprep.subr.mxu0 0.0
    %2196 = vmatpush1.msra.mxu0 %v2179
    %2197 = vmatprep.subr.mxu0 0.0
    %2198 = vmatpush1.msra.mxu0 %v2180
    %2199 = vmatprep.subr.mxu0 0.0
    %2200 = vmatpush1.msra.mxu0 %v2181
    %2201 = vmatprep.subr.mxu0 0.0
    %2202 = vmatpush1.msra.mxu0 %v2182
    %2203 = vmatprep.subr.mxu0 0.0
    %2204 = vmatpush1.msra.mxu0 %v2183
    %2205 = vmatprep.subr.mxu0 0.0
    %2206 = vmatpush1.msra.mxu0 %v2184
    %2207 = vmatprep.subr.mxu0 0.0
    %2208 = vmatpush1.msra.mxu0 %v2185
    %2209 = vmatprep.subr.mxu0 0.0
    %2210 = vmatpush1.msra.mxu0 %v2186
    %2211 = vmatprep.subr.mxu0 0.0
    %2212 = vmatpush1.msra.mxu0 %v2187
    %2213 = vmatprep.subr.mxu0 0.0
    %2214 = vmatpush1.msra.mxu0 %v2188
    %2215 = vmatprep.subr.mxu0 0.0
    %2216 = vmatpush1.msra.mxu0 %v2189
    %2217 = vmatprep.subr.mxu0 0.0
    %2218 = vmatpush1.msra.mxu0 %v2190
    %2219 = vmatprep.subr.mxu0 0.0
    %2220 = vmatpush1.msra.mxu0 %v2191
    %2221 = vmatprep.subr.mxu0 0.0
    %2222 = vmatpush1.msra.mxu0 %v2192
    %2223 = vmatprep.subr.mxu0 0.0
    %2224 = vmatpush1.msra.mxu0 %v2193
    %2225 = vmatprep.subr.mxu0 0.0
    %2226 = vmatpush1.msra.mxu0 %v2194
    %2227 = vmatprep.subr.mxu0 0.0
    %2228 = vmatpush1.msra.mxu0 0.0
    %2229 = vmatprep.subr.mxu0 0.0
    %2230 = vmatpush1.msra.mxu0 0.0
    %2231 = vmatprep.subr.mxu0 0.0
    %2232 = vmatpush1.msra.mxu0 0.0
    %2233 = vmatprep.subr.mxu0 0.0
    %2234 = vmatpush1.msra.mxu0 0.0
    %2235 = vmatprep.subr.mxu0 0.0
    %2236 = vmatpush1.msra.mxu0 0.0
    %2237 = vmatprep.subr.mxu0 0.0
    %2238 = vmatpush1.msra.mxu0 0.0
    %2239 = vmatprep.subr.mxu0 0.0
    %2240 = vmatpush1.msra.mxu0 0.0
    %2241 = vmatprep.subr.mxu0 0.0
    %2242 = vmatpush1.msra.mxu0 0.0
    %2243 = vmatprep.subr.mxu0 0.0
    %2244 = vmatpush1.msra.mxu0 0.0
    %2245 = vmatprep.subr.mxu0 0.0
    %2246 = vmatpush1.msra.mxu0 0.0
    %2247 = vmatprep.subr.mxu0 0.0
    %2248 = vmatpush1.msra.mxu0 0.0
    %2249 = vmatprep.subr.mxu0 0.0
    %2250 = vmatpush1.msra.mxu0 0.0
    %2251 = vmatprep.subr.mxu0 0.0
    %2252 = vmatpush1.msra.mxu0 0.0
    %2253 = vmatprep.subr.mxu0 0.0
    %2254 = vmatpush1.msra.mxu0 0.0
    %2255 = vmatprep.subr.mxu0 0.0
    %2256 = vmatpush1.msra.mxu0 0.0
    %2257 = vmatprep.subr.mxu0 0.0
    %2258 = vmatpush1.msra.mxu0 0.0
    %2259 = vmatprep.mubr.f32.mxu0 0.0
    %2260 = vmatmul.mubr.f32.gmra.mrb[0].mxu0 %v1462
    %v2261 = vpop.f32.mrb[0].mxu0
    %v2262 = vadd.f32 0.0, %v2261
    %v2263 = vpop.f32.mrb[0].mxu0
    %2264 = vdwg.mxu0
    %v2265 = vadd.f32 %v2177, %v2262
    %s2266 = scalar_lea.vmem %s8, 1152
    %v2267 = vld [vmem:[%s2266] sm:$0xff]
    %v2268 = vld [vmem:[%s2266 + $0x8] sm:$0xff]
    %v2269 = vld [vmem:[%s2266 + $0x10] sm:$0xff]
    %v2270 = vld [vmem:[%s2266 + $0x18] sm:$0xff]
    %v2271 = vld [vmem:[%s2266 + $0x20] sm:$0xff]
    %v2272 = vld [vmem:[%s2266 + $0x28] sm:$0xff]
    %v2273 = vld [vmem:[%s2266 + $0x30] sm:$0xff]
    %v2274 = vld [vmem:[%s2266 + $0x38] sm:$0xff]
    %v2275 = vld [vmem:[%s2266 + $0x40] sm:$0xff]
    %v2276 = vld [vmem:[%s2266 + $0x48] sm:$0xff]
    %v2277 = vld [vmem:[%s2266 + $0x50] sm:$0xff]
    %v2278 = vld [vmem:[%s2266 + $0x58] sm:$0xff]
    %v2279 = vld [vmem:[%s2266 + $0x60] sm:$0xff]
    %v2280 = vld [vmem:[%s2266 + $0x68] sm:$0xff]
    %v2281 = vld [vmem:[%s2266 + $0x70] sm:$0xff]
    %v2282 = vld [vmem:[%s2266 + $0x78] sm:$0xff]
    %v2284 = vrot.slane %v1462, 2
    %2286 = vmatprep.subr.mxu0 0.0
    %2287 = vmatpush1.msra.mxu0 %v2267
    %2288 = vmatprep.subr.mxu0 0.0
    %2289 = vmatpush1.msra.mxu0 %v2268
    %2290 = vmatprep.subr.mxu0 0.0
    %2291 = vmatpush1.msra.mxu0 %v2269
    %2292 = vmatprep.subr.mxu0 0.0
    %2293 = vmatpush1.msra.mxu0 %v2270
    %2294 = vmatprep.subr.mxu0 0.0
    %2295 = vmatpush1.msra.mxu0 %v2271
    %2296 = vmatprep.subr.mxu0 0.0
    %2297 = vmatpush1.msra.mxu0 %v2272
    %2298 = vmatprep.subr.mxu0 0.0
    %2299 = vmatpush1.msra.mxu0 %v2273
    %2300 = vmatprep.subr.mxu0 0.0
    %2301 = vmatpush1.msra.mxu0 %v2274
    %2302 = vmatprep.subr.mxu0 0.0
    %2303 = vmatpush1.msra.mxu0 %v2275
    %2304 = vmatprep.subr.mxu0 0.0
    %2305 = vmatpush1.msra.mxu0 %v2276
    %2306 = vmatprep.subr.mxu0 0.0
    %2307 = vmatpush1.msra.mxu0 %v2277
    %2308 = vmatprep.subr.mxu0 0.0
    %2309 = vmatpush1.msra.mxu0 %v2278
    %2310 = vmatprep.subr.mxu0 0.0
    %2311 = vmatpush1.msra.mxu0 %v2279
    %2312 = vmatprep.subr.mxu0 0.0
    %2313 = vmatpush1.msra.mxu0 %v2280
    %2314 = vmatprep.subr.mxu0 0.0
    %2315 = vmatpush1.msra.mxu0 %v2281
    %2316 = vmatprep.subr.mxu0 0.0
    %2317 = vmatpush1.msra.mxu0 %v2282
    %2318 = vmatprep.subr.mxu0 0.0
    %2319 = vmatpush1.msra.mxu0 0.0
    %2320 = vmatprep.subr.mxu0 0.0
    %2321 = vmatpush1.msra.mxu0 0.0
    %2322 = vmatprep.subr.mxu0 0.0
    %2323 = vmatpush1.msra.mxu0 0.0
    %2324 = vmatprep.subr.mxu0 0.0
    %2325 = vmatpush1.msra.mxu0 0.0
    %2326 = vmatprep.subr.mxu0 0.0
    %2327 = vmatpush1.msra.mxu0 0.0
    %2328 = vmatprep.subr.mxu0 0.0
    %2329 = vmatpush1.msra.mxu0 0.0
    %2330 = vmatprep.subr.mxu0 0.0
    %2331 = vmatpush1.msra.mxu0 0.0
    %2332 = vmatprep.subr.mxu0 0.0
    %2333 = vmatpush1.msra.mxu0 0.0
    %2334 = vmatprep.subr.mxu0 0.0
    %2335 = vmatpush1.msra.mxu0 0.0
    %2336 = vmatprep.subr.mxu0 0.0
    %2337 = vmatpush1.msra.mxu0 0.0
    %2338 = vmatprep.subr.mxu0 0.0
    %2339 = vmatpush1.msra.mxu0 0.0
    %2340 = vmatprep.subr.mxu0 0.0
    %2341 = vmatpush1.msra.mxu0 0.0
    %2342 = vmatprep.subr.mxu0 0.0
    %2343 = vmatpush1.msra.mxu0 0.0
    %2344 = vmatprep.subr.mxu0 0.0
    %2345 = vmatpush1.msra.mxu0 0.0
    %2346 = vmatprep.subr.mxu0 0.0
    %2347 = vmatpush1.msra.mxu0 0.0
    %2348 = vmatprep.subr.mxu0 0.0
    %2349 = vmatpush1.msra.mxu0 0.0
    %2350 = vmatprep.mubr.f32.mxu0 0.0
    %2351 = vmatmul.mubr.f32.gmra.mrb[0].mxu0 %v2284
    %v2352 = vpop.f32.mrb[0].mxu0
    %v2353 = vadd.f32 0.0, %v2352
    %v2354 = vpop.f32.mrb[0].mxu0
    %2355 = vdwg.mxu0
    %v2356 = vadd.f32 %v2265, %v2353
    %v2357 = vld [vmem:[%s9] sm:$0x1]
    %v2359 = vlaneseq
    %v2360 = vshrl.u32 %v2359, 7
    %v2361 = vsub.s32 0, %v2360
    %v2362 = vrot.slane %v2357, %v2361
    %v2364 = vadd.f32 %v2356, %v2362
    %v2365 = vld [vmem:[%s1] sm:$0x3]
    %v2366 = vlaneseq
    %v2367 = vand.u32 %v2366, 127
    %vm2368 = vcmp.lt.s32.totalorder %v2367, 16
    %vm2369 = vcmask 15360
    %v2371 = vsel %vm2369, %v2365, 0
    %vm2373 = vcmask 1041408
    %v2375 = vsel %vm2373, %v2364, 0
    %2377 = vmatprep.subr.mxu0 0.0
    %2378 = vmatpush1.msra.mxu0 %v2375
    %2379 = vmatprep.subr.mxu0 0.0
    %2380 = vmatpush1.msra.mxu0 0.0
    %2381 = vmatprep.subr.mxu0 0.0
    %2382 = vmatpush1.msra.mxu0 0.0
    %2383 = vmatprep.subr.mxu0 0.0
    %2384 = vmatpush1.msra.mxu0 0.0
    %2385 = vmatprep.subr.mxu0 0.0
    %2386 = vmatpush1.msra.mxu0 0.0
    %2387 = vmatprep.subr.mxu0 0.0
    %2388 = vmatpush1.msra.mxu0 0.0
    %2389 = vmatprep.subr.mxu0 0.0
    %2390 = vmatpush1.msra.mxu0 0.0
    %2391 = vmatprep.subr.mxu0 0.0
    %2392 = vmatpush1.msra.mxu0 0.0
    %2393 = vmatprep.subr.mxu0 0.0
    %2394 = vmatpush1.msra.mxu0 0.0
    %2395 = vmatprep.subr.mxu0 0.0
    %2396 = vmatpush1.msra.mxu0 0.0
    %2397 = vmatprep.subr.mxu0 0.0
    %2398 = vmatpush1.msra.mxu0 0.0
    %2399 = vmatprep.subr.mxu0 0.0
    %2400 = vmatpush1.msra.mxu0 0.0
    %2401 = vmatprep.subr.mxu0 0.0
    %2402 = vmatpush1.msra.mxu0 0.0
    %2403 = vmatprep.subr.mxu0 0.0
    %2404 = vmatpush1.msra.mxu0 0.0
    %2405 = vmatprep.subr.mxu0 0.0
    %2406 = vmatpush1.msra.mxu0 0.0
    %2407 = vmatprep.subr.mxu0 0.0
    %2408 = vmatpush1.msra.mxu0 0.0
    %2409 = vmatprep.subr.mxu0 0.0
    %2410 = vmatpush1.msra.mxu0 0.0
    %2411 = vmatprep.subr.mxu0 0.0
    %2412 = vmatpush1.msra.mxu0 0.0
    %2413 = vmatprep.subr.mxu0 0.0
    %2414 = vmatpush1.msra.mxu0 0.0
    %2415 = vmatprep.subr.mxu0 0.0
    %2416 = vmatpush1.msra.mxu0 0.0
    %2417 = vmatprep.subr.mxu0 0.0
    %2418 = vmatpush1.msra.mxu0 0.0
    %2419 = vmatprep.subr.mxu0 0.0
    %2420 = vmatpush1.msra.mxu0 0.0
    %2421 = vmatprep.subr.mxu0 0.0
    %2422 = vmatpush1.msra.mxu0 0.0
    %2423 = vmatprep.subr.mxu0 0.0
    %2424 = vmatpush1.msra.mxu0 0.0
    %2425 = vmatprep.subr.mxu0 0.0
    %2426 = vmatpush1.msra.mxu0 0.0
    %2427 = vmatprep.subr.mxu0 0.0
    %2428 = vmatpush1.msra.mxu0 0.0
    %2429 = vmatprep.subr.mxu0 0.0
    %2430 = vmatpush1.msra.mxu0 0.0
    %2431 = vmatprep.subr.mxu0 0.0
    %2432 = vmatpush1.msra.mxu0 0.0
    %2433 = vmatprep.subr.mxu0 0.0
    %2434 = vmatpush1.msra.mxu0 0.0
    %2435 = vmatprep.subr.mxu0 0.0
    %2436 = vmatpush1.msra.mxu0 0.0
    %2437 = vmatprep.subr.mxu0 0.0
    %2438 = vmatpush1.msra.mxu0 0.0
    %2439 = vmatprep.subr.mxu0 0.0
    %2440 = vmatpush1.msra.mxu0 0.0
    %2441 = vmatprep.mubr.f32.mxu0 0.0
    %2442 = vmatmul.mubr.f32.gmra.mrb[0].mxu0 %v2371
    %v2443 = vpop.f32.mrb[0].mxu0
    %v2444 = vadd.f32 0.0, %v2443
    %v2445 = vpop.f32.mrb[0].mxu0
    %2446 = vdwg.mxu0
    %vm2447 = vcmask 254976
    %2448 = vst.msk [vmem:[#allocation3] sm:$0x3] %vm2447, %v2364
    %2450 = vrot.lane.b32.xlu0 %v2444, 32
    %v2451 = vpop.permute.xlu0 %2450
    %vm2453 = vcmask 517376
    %2454 = vst.msk [vmem:[#allocation3] sm:$0x3] %vm2453, %v2451
    %v2455 = vld [vmem:[#allocation3] sm:$0x3]
    %v2456 = vld [vmem:[%s10] sm:$0xff]
    %v2457 = vld [vmem:[%s10 + $0x8] sm:$0xff]
    %v2458 = vld [vmem:[%s10 + $0x10] sm:$0xff]
    %v2459 = vld [vmem:[%s10 + $0x18] sm:$0xff]
    %v2460 = vld [vmem:[%s10 + $0x20] sm:$0xff]
    %v2461 = vld [vmem:[%s10 + $0x28] sm:$0xff]
    %v2462 = vld [vmem:[%s10 + $0x30] sm:$0xff]
    %v2463 = vld [vmem:[%s10 + $0x38] sm:$0xff]
    %v2464 = vld [vmem:[%s12] sm:$0x1]
    %v2466 = vlaneseq
    %v2467 = vshrl.u32 %v2466, 7
    %v2468 = vsub.s32 0, %v2467
    %v2469 = vrot.slane %v2464, %v2468
    %vm2471 = vcmask 523264
    %v2473 = vsel %vm2471, %v2455, 0
    %2475 = vmatprep.subr.mxu0 0.0
    %2476 = vmatpush1.msra.mxu0 %v2456
    %2477 = vmatprep.subr.mxu0 0.0
    %2478 = vmatpush1.msra.mxu0 %v2457
    %2479 = vmatprep.subr.mxu0 0.0
    %2480 = vmatpush1.msra.mxu0 %v2458
    %2481 = vmatprep.subr.mxu0 0.0
    %2482 = vmatpush1.msra.mxu0 %v2459
    %2483 = vmatprep.subr.mxu0 0.0
    %2484 = vmatpush1.msra.mxu0 %v2460
    %2485 = vmatprep.subr.mxu0 0.0
    %2486 = vmatpush1.msra.mxu0 %v2461
    %2487 = vmatprep.subr.mxu0 0.0
    %2488 = vmatpush1.msra.mxu0 %v2462
    %2489 = vmatprep.subr.mxu0 0.0
    %2490 = vmatpush1.msra.mxu0 %v2463
    %2491 = vmatprep.subr.mxu0 0.0
    %2492 = vmatpush1.msra.mxu0 0.0
    %2493 = vmatprep.subr.mxu0 0.0
    %2494 = vmatpush1.msra.mxu0 0.0
    %2495 = vmatprep.subr.mxu0 0.0
    %2496 = vmatpush1.msra.mxu0 0.0
    %2497 = vmatprep.subr.mxu0 0.0
    %2498 = vmatpush1.msra.mxu0 0.0
    %2499 = vmatprep.subr.mxu0 0.0
    %2500 = vmatpush1.msra.mxu0 0.0
    %2501 = vmatprep.subr.mxu0 0.0
    %2502 = vmatpush1.msra.mxu0 0.0
    %2503 = vmatprep.subr.mxu0 0.0
    %2504 = vmatpush1.msra.mxu0 0.0
    %2505 = vmatprep.subr.mxu0 0.0
    %2506 = vmatpush1.msra.mxu0 0.0
    %2507 = vmatprep.subr.mxu0 0.0
    %2508 = vmatpush1.msra.mxu0 0.0
    %2509 = vmatprep.subr.mxu0 0.0
    %2510 = vmatpush1.msra.mxu0 0.0
    %2511 = vmatprep.subr.mxu0 0.0
    %2512 = vmatpush1.msra.mxu0 0.0
    %2513 = vmatprep.subr.mxu0 0.0
    %2514 = vmatpush1.msra.mxu0 0.0
    %2515 = vmatprep.subr.mxu0 0.0
    %2516 = vmatpush1.msra.mxu0 0.0
    %2517 = vmatprep.subr.mxu0 0.0
    %2518 = vmatpush1.msra.mxu0 0.0
    %2519 = vmatprep.subr.mxu0 0.0
    %2520 = vmatpush1.msra.mxu0 0.0
    %2521 = vmatprep.subr.mxu0 0.0
    %2522 = vmatpush1.msra.mxu0 0.0
    %2523 = vmatprep.subr.mxu0 0.0
    %2524 = vmatpush1.msra.mxu0 0.0
    %2525 = vmatprep.subr.mxu0 0.0
    %2526 = vmatpush1.msra.mxu0 0.0
    %2527 = vmatprep.subr.mxu0 0.0
    %2528 = vmatpush1.msra.mxu0 0.0
    %2529 = vmatprep.subr.mxu0 0.0
    %2530 = vmatpush1.msra.mxu0 0.0
    %2531 = vmatprep.subr.mxu0 0.0
    %2532 = vmatpush1.msra.mxu0 0.0
    %2533 = vmatprep.subr.mxu0 0.0
    %2534 = vmatpush1.msra.mxu0 0.0
    %2535 = vmatprep.subr.mxu0 0.0
    %2536 = vmatpush1.msra.mxu0 0.0
    %2537 = vmatprep.subr.mxu0 0.0
    %2538 = vmatpush1.msra.mxu0 0.0
    %2539 = vmatprep.mubr.f32.mxu0 0.0
    %2540 = vmatmul.mubr.f32.gmra.mrb[0].mxu0 %v2473
    %v2541 = vpop.f32.mrb[0].mxu0
    %v2542 = vadd.f32 %v2469, %v2541
    %v2543 = vpop.f32.mrb[0].mxu0
    %2544 = vdwg.mxu0
    %2545 = vst [vmem:[#allocation2] sm:$0x3] %v2542
    %v2546 = vld [vmem:[%s11] sm:$0xff]
    %v2547 = vld [vmem:[%s11 + $0x8] sm:$0xff]
    %v2548 = vld [vmem:[%s11 + $0x10] sm:$0xff]
    %v2549 = vld [vmem:[%s11 + $0x18] sm:$0xff]
    %v2550 = vld [vmem:[#allocation2] sm:$0x1]
    %vm2551 = vcmask 261120
    %v2553 = vsel %vm2551, 0.0, 0
    %2555 = vmatprep.subr.mxu0 0.0
    %2556 = vmatpush1.msra.mxu0 %v2546
    %2557 = vmatprep.subr.mxu0 0.0
    %2558 = vmatpush1.msra.mxu0 %v2547
    %2559 = vmatprep.subr.mxu0 0.0
    %2560 = vmatpush1.msra.mxu0 %v2548
    %2561 = vmatprep.subr.mxu0 0.0
    %2562 = vmatpush1.msra.mxu0 %v2549
    %2563 = vmatprep.subr.mxu0 0.0
    %2564 = vmatpush1.msra.mxu0 0.0
    %2565 = vmatprep.subr.mxu0 0.0
    %2566 = vmatpush1.msra.mxu0 0.0
    %2567 = vmatprep.subr.mxu0 0.0
    %2568 = vmatpush1.msra.mxu0 0.0
    %2569 = vmatprep.subr.mxu0 0.0
    %2570 = vmatpush1.msra.mxu0 0.0
    %2571 = vmatprep.subr.mxu0 0.0
    %2572 = vmatpush1.msra.mxu0 0.0
    %2573 = vmatprep.subr.mxu0 0.0
    %2574 = vmatpush1.msra.mxu0 0.0
    %2575 = vmatprep.subr.mxu0 0.0
    %2576 = vmatpush1.msra.mxu0 0.0
    %2577 = vmatprep.subr.mxu0 0.0
    %2578 = vmatpush1.msra.mxu0 0.0
    %2579 = vmatprep.subr.mxu0 0.0
    %2580 = vmatpush1.msra.mxu0 0.0
    %2581 = vmatprep.subr.mxu0 0.0
    %2582 = vmatpush1.msra.mxu0 0.0
    %2583 = vmatprep.subr.mxu0 0.0
    %2584 = vmatpush1.msra.mxu0 0.0
    %2585 = vmatprep.subr.mxu0 0.0
    %2586 = vmatpush1.msra.mxu0 0.0
    %2587 = vmatprep.subr.mxu0 0.0
    %2588 = vmatpush1.msra.mxu0 0.0
    %2589 = vmatprep.subr.mxu0 0.0
    %2590 = vmatpush1.msra.mxu0 0.0
    %2591 = vmatprep.subr.mxu0 0.0
    %2592 = vmatpush1.msra.mxu0 0.0
    %2593 = vmatprep.subr.mxu0 0.0
    %2594 = vmatpush1.msra.mxu0 0.0
    %2595 = vmatprep.subr.mxu0 0.0
    %2596 = vmatpush1.msra.mxu0 0.0
    %2597 = vmatprep.subr.mxu0 0.0
    %2598 = vmatpush1.msra.mxu0 0.0
    %2599 = vmatprep.subr.mxu0 0.0
    %2600 = vmatpush1.msra.mxu0 0.0
    %2601 = vmatprep.subr.mxu0 0.0
    %2602 = vmatpush1.msra.mxu0 0.0
    %2603 = vmatprep.subr.mxu0 0.0
    %2604 = vmatpush1.msra.mxu0 0.0
    %2605 = vmatprep.subr.mxu0 0.0
    %2606 = vmatpush1.msra.mxu0 0.0
    %2607 = vmatprep.subr.mxu0 0.0
    %2608 = vmatpush1.msra.mxu0 0.0
    %2609 = vmatprep.subr.mxu0 0.0
    %2610 = vmatpush1.msra.mxu0 0.0
    %2611 = vmatprep.subr.mxu0 0.0
    %2612 = vmatpush1.msra.mxu0 0.0
    %2613 = vmatprep.subr.mxu0 0.0
    %2614 = vmatpush1.msra.mxu0 0.0
    %2615 = vmatprep.subr.mxu0 0.0
    %2616 = vmatpush1.msra.mxu0 0.0
    %2617 = vmatprep.subr.mxu0 0.0
    %2618 = vmatpush1.msra.mxu0 0.0
    %2619 = vmatprep.mubr.f32.mxu0 0.0
    %2620 = vmatmul.mubr.f32.gmra.mrb[0].mxu0 %v2553
    %v2621 = vpop.f32.mrb[0].mxu0
    %v2622 = vadd.f32 0.0, %v2621
    %v2623 = vpop.f32.mrb[0].mxu0
    %2624 = vdwg.mxu0
    %v2625 = vadd.f32 %v2550, %v2622
    %v2626 = vxor.u32 %v2625, 2147483648
    %v2627 = vmul.f32 %v2626, 1.442695
    %v2628 = vpow.pop %v2627
    %v2629 = vadd.f32 %v2628, 1.0
    %v2630 = vrcp.pop %v2629
    %v2631 = vmul.f32 1.0, %v2630
    %v2632 = vtanh.pop %v2625
    %v2633 = vmul.f32 %v2631, 0.0
    %2635 = vrot.lane.b32.xlu0 %v2632, 32
    %v2636 = vpop.permute.xlu0 %2635
    %v2638 = vmul.f32 %v2631, %v2636
    %2640 = vrot.lane.b32.xlu0 %v2638, 32
    %v2641 = vpop.permute.xlu0 %2640
    %v2643 = vadd.f32 %v2633, %v2641
    %v2644 = vtanh.pop %v2643
    %2646 = vrot.lane.b32.xlu0 %v2644, 32
    %v2647 = vpop.permute.xlu0 %2646
    %v2649 = vmul.f32 %v2631, %v2647
    %2651 = vrot.lane.b32.xlu0 %v2649, 64
    %v2652 = vpop.permute.xlu0 %2651
    %vm2654 = vcmask 253952
    %2655 = vst.msk [vmem:[#allocation4] sm:$0x1] %vm2654, %v2652
    %v2656 = vld [vmem:[#allocation2 + $0x1] sm:$0x1]
    %v2657 = vsel %vm2551, %v2652, 0
    %2659 = vmatprep.subr.mxu0 0.0
    %2660 = vmatpush1.msra.mxu0 %v2546
    %2661 = vmatprep.subr.mxu0 0.0
    %2662 = vmatpush1.msra.mxu0 %v2547
    %2663 = vmatprep.subr.mxu0 0.0
    %2664 = vmatpush1.msra.mxu0 %v2548
    %2665 = vmatprep.subr.mxu0 0.0
    %2666 = vmatpush1.msra.mxu0 %v2549
    %2667 = vmatprep.subr.mxu0 0.0
    %2668 = vmatpush1.msra.mxu0 0.0
    %2669 = vmatprep.subr.mxu0 0.0
    %2670 = vmatpush1.msra.mxu0 0.0
    %2671 = vmatprep.subr.mxu0 0.0
    %2672 = vmatpush1.msra.mxu0 0.0
    %2673 = vmatprep.subr.mxu0 0.0
    %2674 = vmatpush1.msra.mxu0 0.0
    %2675 = vmatprep.subr.mxu0 0.0
    %2676 = vmatpush1.msra.mxu0 0.0
    %2677 = vmatprep.subr.mxu0 0.0
    %2678 = vmatpush1.msra.mxu0 0.0
    %2679 = vmatprep.subr.mxu0 0.0
    %2680 = vmatpush1.msra.mxu0 0.0
    %2681 = vmatprep.subr.mxu0 0.0
    %2682 = vmatpush1.msra.mxu0 0.0
    %2683 = vmatprep.subr.mxu0 0.0
    %2684 = vmatpush1.msra.mxu0 0.0
    %2685 = vmatprep.subr.mxu0 0.0
    %2686 = vmatpush1.msra.mxu0 0.0
    %2687 = vmatprep.subr.mxu0 0.0
    %2688 = vmatpush1.msra.mxu0 0.0
    %2689 = vmatprep.subr.mxu0 0.0
    %2690 = vmatpush1.msra.mxu0 0.0
    %2691 = vmatprep.subr.mxu0 0.0
    %2692 = vmatpush1.msra.mxu0 0.0
    %2693 = vmatprep.subr.mxu0 0.0
    %2694 = vmatpush1.msra.mxu0 0.0
    %2695 = vmatprep.subr.mxu0 0.0
    %2696 = vmatpush1.msra.mxu0 0.0
    %2697 = vmatprep.subr.mxu0 0.0
    %2698 = vmatpush1.msra.mxu0 0.0
    %2699 = vmatprep.subr.mxu0 0.0
    %2700 = vmatpush1.msra.mxu0 0.0
    %2701 = vmatprep.subr.mxu0 0.0
    %2702 = vmatpush1.msra.mxu0 0.0
    %2703 = vmatprep.subr.mxu0 0.0
    %2704 = vmatpush1.msra.mxu0 0.0
    %2705 = vmatprep.subr.mxu0 0.0
    %2706 = vmatpush1.msra.mxu0 0.0
    %2707 = vmatprep.subr.mxu0 0.0
    %2708 = vmatpush1.msra.mxu0 0.0
    %2709 = vmatprep.subr.mxu0 0.0
    %2710 = vmatpush1.msra.mxu0 0.0
    %2711 = vmatprep.subr.mxu0 0.0
    %2712 = vmatpush1.msra.mxu0 0.0
    %2713 = vmatprep.subr.mxu0 0.0
    %2714 = vmatpush1.msra.mxu0 0.0
    %2715 = vmatprep.subr.mxu0 0.0
    %2716 = vmatpush1.msra.mxu0 0.0
    %2717 = vmatprep.subr.mxu0 0.0
    %2718 = vmatpush1.msra.mxu0 0.0
    %2719 = vmatprep.subr.mxu0 0.0
    %2720 = vmatpush1.msra.mxu0 0.0
    %2721 = vmatprep.subr.mxu0 0.0
    %2722 = vmatpush1.msra.mxu0 0.0
    %2723 = vmatprep.mubr.f32.mxu0 0.0
    %2724 = vmatmul.mubr.f32.gmra.mrb[0].mxu0 %v2657
    %v2725 = vpop.f32.mrb[0].mxu0
    %v2726 = vadd.f32 0.0, %v2725
    %v2727 = vpop.f32.mrb[0].mxu0
    %2728 = vdwg.mxu0
    %v2729 = vadd.f32 %v2656, %v2726
    %v2730 = vxor.u32 %v2729, 2147483648
    %v2731 = vmul.f32 %v2730, 1.442695
    %v2732 = vpow.pop %v2731
    %v2733 = vadd.f32 %v2732, 1.0
    %v2734 = vrcp.pop %v2733
    %v2735 = vmul.f32 1.0, %v2734
    %v2736 = vtanh.pop %v2729
    %v2737 = vmul.f32 %v2735, %v2643
    %2739 = vrot.lane.b32.xlu0 %v2736, 32
    %v2740 = vpop.permute.xlu0 %2739
    %v2742 = vmul.f32 %v2735, %v2740
    %2744 = vrot.lane.b32.xlu0 %v2742, 32
    %v2745 = vpop.permute.xlu0 %2744
    %v2747 = vadd.f32 %v2737, %v2745
    %v2748 = vtanh.pop %v2747
    %2750 = vrot.lane.b32.xlu0 %v2748, 32
    %v2751 = vpop.permute.xlu0 %2750
    %v2753 = vmul.f32 %v2735, %v2751
    %2755 = vrot.lane.b32.xlu0 %v2753, 64
    %v2756 = vpop.permute.xlu0 %2755
    %2758 = vst.msk [vmem:[#allocation4 + $0x1] sm:$0x1] %vm2654, %v2756
    %v2759 = vld [vmem:[#allocation4] sm:$0x3]
    %v2761 = vsel %vm2373, %v2759, 0
    %2763 = vmatprep.subr.mxu0 0.0
    %2764 = vmatpush1.msra.mxu0 %v2761
    %2765 = vmatprep.subr.mxu0 0.0
    %2766 = vmatpush1.msra.mxu0 0.0
    %2767 = vmatprep.subr.mxu0 0.0
    %2768 = vmatpush1.msra.mxu0 0.0
    %2769 = vmatprep.subr.mxu0 0.0
    %2770 = vmatpush1.msra.mxu0 0.0
    %2771 = vmatprep.subr.mxu0 0.0
    %2772 = vmatpush1.msra.mxu0 0.0
    %2773 = vmatprep.subr.mxu0 0.0
    %2774 = vmatpush1.msra.mxu0 0.0
    %2775 = vmatprep.subr.mxu0 0.0
    %2776 = vmatpush1.msra.mxu0 0.0
    %2777 = vmatprep.subr.mxu0 0.0
    %2778 = vmatpush1.msra.mxu0 0.0
    %2779 = vmatprep.subr.mxu0 0.0
    %2780 = vmatpush1.msra.mxu0 0.0
    %2781 = vmatprep.subr.mxu0 0.0
    %2782 = vmatpush1.msra.mxu0 0.0
    %2783 = vmatprep.subr.mxu0 0.0
    %2784 = vmatpush1.msra.mxu0 0.0
    %2785 = vmatprep.subr.mxu0 0.0
    %2786 = vmatpush1.msra.mxu0 0.0
    %2787 = vmatprep.subr.mxu0 0.0
    %2788 = vmatpush1.msra.mxu0 0.0
    %2789 = vmatprep.subr.mxu0 0.0
    %2790 = vmatpush1.msra.mxu0 0.0
    %2791 = vmatprep.subr.mxu0 0.0
    %2792 = vmatpush1.msra.mxu0 0.0
    %2793 = vmatprep.subr.mxu0 0.0
    %2794 = vmatpush1.msra.mxu0 0.0
    %2795 = vmatprep.subr.mxu0 0.0
    %2796 = vmatpush1.msra.mxu0 0.0
    %2797 = vmatprep.subr.mxu0 0.0
    %2798 = vmatpush1.msra.mxu0 0.0
    %2799 = vmatprep.subr.mxu0 0.0
    %2800 = vmatpush1.msra.mxu0 0.0
    %2801 = vmatprep.subr.mxu0 0.0
    %2802 = vmatpush1.msra.mxu0 0.0
    %2803 = vmatprep.subr.mxu0 0.0
    %2804 = vmatpush1.msra.mxu0 0.0
    %2805 = vmatprep.subr.mxu0 0.0
    %2806 = vmatpush1.msra.mxu0 0.0
    %2807 = vmatprep.subr.mxu0 0.0
    %2808 = vmatpush1.msra.mxu0 0.0
    %2809 = vmatprep.subr.mxu0 0.0
    %2810 = vmatpush1.msra.mxu0 0.0
    %2811 = vmatprep.subr.mxu0 0.0
    %2812 = vmatpush1.msra.mxu0 0.0
    %2813 = vmatprep.subr.mxu0 0.0
    %2814 = vmatpush1.msra.mxu0 0.0
    %2815 = vmatprep.subr.mxu0 0.0
    %2816 = vmatpush1.msra.mxu0 0.0
    %2817 = vmatprep.subr.mxu0 0.0
    %2818 = vmatpush1.msra.mxu0 0.0
    %2819 = vmatprep.subr.mxu0 0.0
    %2820 = vmatpush1.msra.mxu0 0.0
    %2821 = vmatprep.subr.mxu0 0.0
    %2822 = vmatpush1.msra.mxu0 0.0
    %2823 = vmatprep.subr.mxu0 0.0
    %2824 = vmatpush1.msra.mxu0 0.0
    %2825 = vmatprep.subr.mxu0 0.0
    %2826 = vmatpush1.msra.mxu0 0.0
    %2827 = vmatprep.mubr.f32.mxu0 0.0
    %2828 = vmatmul.mubr.f32.gmra.mrb[0].mxu0 %v2371
    %v2829 = vpop.f32.mrb[0].mxu0
    %v2830 = vadd.f32 0.0, %v2829
    %v2831 = vpop.f32.mrb[0].mxu0
    %2832 = vdwg.mxu0
    %v2833 = vsel %vm2368, %v2759, %v2830
    %v2835 = vsel %vm2373, %v2833, 0
    %2837 = vmatprep.subr.mxu0 0.0
    %2838 = vmatpush1.msra.mxu0 %v2835
    %2839 = vmatprep.subr.mxu0 0.0
    %2840 = vmatpush1.msra.mxu0 0.0
    %2841 = vmatprep.subr.mxu0 0.0
    %2842 = vmatpush1.msra.mxu0 0.0
    %2843 = vmatprep.subr.mxu0 0.0
    %2844 = vmatpush1.msra.mxu0 0.0
    %2845 = vmatprep.subr.mxu0 0.0
    %2846 = vmatpush1.msra.mxu0 0.0
    %2847 = vmatprep.subr.mxu0 0.0
    %2848 = vmatpush1.msra.mxu0 0.0
    %2849 = vmatprep.subr.mxu0 0.0
    %2850 = vmatpush1.msra.mxu0 0.0
    %2851 = vmatprep.subr.mxu0 0.0
    %2852 = vmatpush1.msra.mxu0 0.0
    %2853 = vmatprep.subr.mxu0 0.0
    %2854 = vmatpush1.msra.mxu0 0.0
    %2855 = vmatprep.subr.mxu0 0.0
    %2856 = vmatpush1.msra.mxu0 0.0
    %2857 = vmatprep.subr.mxu0 0.0
    %2858 = vmatpush1.msra.mxu0 0.0
    %2859 = vmatprep.subr.mxu0 0.0
    %2860 = vmatpush1.msra.mxu0 0.0
    %2861 = vmatprep.subr.mxu0 0.0
    %2862 = vmatpush1.msra.mxu0 0.0
    %2863 = vmatprep.subr.mxu0 0.0
    %2864 = vmatpush1.msra.mxu0 0.0
    %2865 = vmatprep.subr.mxu0 0.0
    %2866 = vmatpush1.msra.mxu0 0.0
    %2867 = vmatprep.subr.mxu0 0.0
    %2868 = vmatpush1.msra.mxu0 0.0
    %2869 = vmatprep.subr.mxu0 0.0
    %2870 = vmatpush1.msra.mxu0 0.0
    %2871 = vmatprep.subr.mxu0 0.0
    %2872 = vmatpush1.msra.mxu0 0.0
    %2873 = vmatprep.subr.mxu0 0.0
    %2874 = vmatpush1.msra.mxu0 0.0
    %2875 = vmatprep.subr.mxu0 0.0
    %2876 = vmatpush1.msra.mxu0 0.0
    %2877 = vmatprep.subr.mxu0 0.0
    %2878 = vmatpush1.msra.mxu0 0.0
    %2879 = vmatprep.subr.mxu0 0.0
    %2880 = vmatpush1.msra.mxu0 0.0
    %2881 = vmatprep.subr.mxu0 0.0
    %2882 = vmatpush1.msra.mxu0 0.0
    %2883 = vmatprep.subr.mxu0 0.0
    %2884 = vmatpush1.msra.mxu0 0.0
    %2885 = vmatprep.subr.mxu0 0.0
    %2886 = vmatpush1.msra.mxu0 0.0
    %2887 = vmatprep.subr.mxu0 0.0
    %2888 = vmatpush1.msra.mxu0 0.0
    %2889 = vmatprep.subr.mxu0 0.0
    %2890 = vmatpush1.msra.mxu0 0.0
    %2891 = vmatprep.subr.mxu0 0.0
    %2892 = vmatpush1.msra.mxu0 0.0
    %2893 = vmatprep.subr.mxu0 0.0
    %2894 = vmatpush1.msra.mxu0 0.0
    %2895 = vmatprep.subr.mxu0 0.0
    %2896 = vmatpush1.msra.mxu0 0.0
    %2897 = vmatprep.subr.mxu0 0.0
    %2898 = vmatpush1.msra.mxu0 0.0
    %2899 = vmatprep.subr.mxu0 0.0
    %2900 = vmatpush1.msra.mxu0 0.0
    %2901 = vmatprep.mubr.f32.mxu0 0.0
    %2902 = vmatmul.mubr.f32.gmra.mrb[0].mxu0 %v2371
    %v2903 = vpop.f32.mrb[0].mxu0
    %v2904 = vadd.f32 0.0, %v2903
    %v2905 = vpop.f32.mrb[0].mxu0
    %2906 = vdwg.mxu0
    %2907 = vst.msk [vmem:[#allocation3] sm:$0x3] %vm2447, %v2833
    %2909 = vrot.lane.b32.xlu0 %v2904, 32
    %v2910 = vpop.permute.xlu0 %2909
    %2912 = vst.msk [vmem:[#allocation3] sm:$0x3] %vm2453, %v2910
    %v2913 = vld [vmem:[#allocation3] sm:$0x3]
    %v2914 = vld [vmem:[%s13] sm:$0xff]
    %v2915 = vld [vmem:[%s13 + $0x8] sm:$0xff]
    %v2916 = vld [vmem:[%s13 + $0x10] sm:$0xff]
    %v2917 = vld [vmem:[%s13 + $0x18] sm:$0xff]
    %v2918 = vld [vmem:[%s13 + $0x20] sm:$0xff]
    %v2919 = vld [vmem:[%s13 + $0x28] sm:$0xff]
    %v2920 = vld [vmem:[%s13 + $0x30] sm:$0xff]
    %v2921 = vld [vmem:[%s13 + $0x38] sm:$0xff]
    %v2922 = vld [vmem:[%s15] sm:$0x1]
    %v2924 = vlaneseq
    %v2925 = vshrl.u32 %v2924, 7
    %v2926 = vsub.s32 0, %v2925
    %v2927 = vrot.slane %v2922, %v2926
    %v2930 = vsel %vm2471, %v2913, 0
    %2932 = vmatprep.subr.mxu0 0.0
    %2933 = vmatpush1.msra.mxu0 %v2914
    %2934 = vmatprep.subr.mxu0 0.0
    %2935 = vmatpush1.msra.mxu0 %v2915
    %2936 = vmatprep.subr.mxu0 0.0
    %2937 = vmatpush1.msra.mxu0 %v2916
    %2938 = vmatprep.subr.mxu0 0.0
    %2939 = vmatpush1.msra.mxu0 %v2917
    %2940 = vmatprep.subr.mxu0 0.0
    %2941 = vmatpush1.msra.mxu0 %v2918
    %2942 = vmatprep.subr.mxu0 0.0
    %2943 = vmatpush1.msra.mxu0 %v2919
    %2944 = vmatprep.subr.mxu0 0.0
    %2945 = vmatpush1.msra.mxu0 %v2920
    %2946 = vmatprep.subr.mxu0 0.0
    %2947 = vmatpush1.msra.mxu0 %v2921
    %2948 = vmatprep.subr.mxu0 0.0
    %2949 = vmatpush1.msra.mxu0 0.0
    %2950 = vmatprep.subr.mxu0 0.0
    %2951 = vmatpush1.msra.mxu0 0.0
    %2952 = vmatprep.subr.mxu0 0.0
    %2953 = vmatpush1.msra.mxu0 0.0
    %2954 = vmatprep.subr.mxu0 0.0
    %2955 = vmatpush1.msra.mxu0 0.0
    %2956 = vmatprep.subr.mxu0 0.0
    %2957 = vmatpush1.msra.mxu0 0.0
    %2958 = vmatprep.subr.mxu0 0.0
    %2959 = vmatpush1.msra.mxu0 0.0
    %2960 = vmatprep.subr.mxu0 0.0
    %2961 = vmatpush1.msra.mxu0 0.0
    %2962 = vmatprep.subr.mxu0 0.0
    %2963 = vmatpush1.msra.mxu0 0.0
    %2964 = vmatprep.subr.mxu0 0.0
    %2965 = vmatpush1.msra.mxu0 0.0
    %2966 = vmatprep.subr.mxu0 0.0
    %2967 = vmatpush1.msra.mxu0 0.0
    %2968 = vmatprep.subr.mxu0 0.0
    %2969 = vmatpush1.msra.mxu0 0.0
    %2970 = vmatprep.subr.mxu0 0.0
    %2971 = vmatpush1.msra.mxu0 0.0
    %2972 = vmatprep.subr.mxu0 0.0
    %2973 = vmatpush1.msra.mxu0 0.0
    %2974 = vmatprep.subr.mxu0 0.0
    %2975 = vmatpush1.msra.mxu0 0.0
    %2976 = vmatprep.subr.mxu0 0.0
    %2977 = vmatpush1.msra.mxu0 0.0
    %2978 = vmatprep.subr.mxu0 0.0
    %2979 = vmatpush1.msra.mxu0 0.0
    %2980 = vmatprep.subr.mxu0 0.0
    %2981 = vmatpush1.msra.mxu0 0.0
    %2982 = vmatprep.subr.mxu0 0.0
    %2983 = vmatpush1.msra.mxu0 0.0
    %2984 = vmatprep.subr.mxu0 0.0
    %2985 = vmatpush1.msra.mxu0 0.0
    %2986 = vmatprep.subr.mxu0 0.0
    %2987 = vmatpush1.msra.mxu0 0.0
    %2988 = vmatprep.subr.mxu0 0.0
    %2989 = vmatpush1.msra.mxu0 0.0
    %2990 = vmatprep.subr.mxu0 0.0
    %2991 = vmatpush1.msra.mxu0 0.0
    %2992 = vmatprep.subr.mxu0 0.0
    %2993 = vmatpush1.msra.mxu0 0.0
    %2994 = vmatprep.subr.mxu0 0.0
    %2995 = vmatpush1.msra.mxu0 0.0
    %2996 = vmatprep.mubr.f32.mxu0 0.0
    %2997 = vmatmul.mubr.f32.gmra.mrb[0].mxu0 %v2930
    %v2998 = vpop.f32.mrb[0].mxu0
    %v2999 = vadd.f32 %v2927, %v2998
    %v3000 = vpop.f32.mrb[0].mxu0
    %3001 = vdwg.mxu0
    %3002 = vst [vmem:[#allocation2] sm:$0x3] %v2999
    %v3003 = vld [vmem:[%s14] sm:$0xff]
    %v3004 = vld [vmem:[%s14 + $0x8] sm:$0xff]
    %v3005 = vld [vmem:[%s14 + $0x10] sm:$0xff]
    %v3006 = vld [vmem:[%s14 + $0x18] sm:$0xff]
    %v3007 = vld [vmem:[#allocation2] sm:$0x1]
    %3008 = vmatprep.subr.mxu0 0.0
    %3009 = vmatpush1.msra.mxu0 %v3003
    %3010 = vmatprep.subr.mxu0 0.0
    %3011 = vmatpush1.msra.mxu0 %v3004
    %3012 = vmatprep.subr.mxu0 0.0
    %3013 = vmatpush1.msra.mxu0 %v3005
    %3014 = vmatprep.subr.mxu0 0.0
    %3015 = vmatpush1.msra.mxu0 %v3006
    %3016 = vmatprep.subr.mxu0 0.0
    %3017 = vmatpush1.msra.mxu0 0.0
    %3018 = vmatprep.subr.mxu0 0.0
    %3019 = vmatpush1.msra.mxu0 0.0
    %3020 = vmatprep.subr.mxu0 0.0
    %3021 = vmatpush1.msra.mxu0 0.0
    %3022 = vmatprep.subr.mxu0 0.0
    %3023 = vmatpush1.msra.mxu0 0.0
    %3024 = vmatprep.subr.mxu0 0.0
    %3025 = vmatpush1.msra.mxu0 0.0
    %3026 = vmatprep.subr.mxu0 0.0
    %3027 = vmatpush1.msra.mxu0 0.0
    %3028 = vmatprep.subr.mxu0 0.0
    %3029 = vmatpush1.msra.mxu0 0.0
    %3030 = vmatprep.subr.mxu0 0.0
    %3031 = vmatpush1.msra.mxu0 0.0
    %3032 = vmatprep.subr.mxu0 0.0
    %3033 = vmatpush1.msra.mxu0 0.0
    %3034 = vmatprep.subr.mxu0 0.0
    %3035 = vmatpush1.msra.mxu0 0.0
    %3036 = vmatprep.subr.mxu0 0.0
    %3037 = vmatpush1.msra.mxu0 0.0
    %3038 = vmatprep.subr.mxu0 0.0
    %3039 = vmatpush1.msra.mxu0 0.0
    %3040 = vmatprep.subr.mxu0 0.0
    %3041 = vmatpush1.msra.mxu0 0.0
    %3042 = vmatprep.subr.mxu0 0.0
    %3043 = vmatpush1.msra.mxu0 0.0
    %3044 = vmatprep.subr.mxu0 0.0
    %3045 = vmatpush1.msra.mxu0 0.0
    %3046 = vmatprep.subr.mxu0 0.0
    %3047 = vmatpush1.msra.mxu0 0.0
    %3048 = vmatprep.subr.mxu0 0.0
    %3049 = vmatpush1.msra.mxu0 0.0
    %3050 = vmatprep.subr.mxu0 0.0
    %3051 = vmatpush1.msra.mxu0 0.0
    %3052 = vmatprep.subr.mxu0 0.0
    %3053 = vmatpush1.msra.mxu0 0.0
    %3054 = vmatprep.subr.mxu0 0.0
    %3055 = vmatpush1.msra.mxu0 0.0
    %3056 = vmatprep.subr.mxu0 0.0
    %3057 = vmatpush1.msra.mxu0 0.0
    %3058 = vmatprep.subr.mxu0 0.0
    %3059 = vmatpush1.msra.mxu0 0.0
    %3060 = vmatprep.subr.mxu0 0.0
    %3061 = vmatpush1.msra.mxu0 0.0
    %3062 = vmatprep.subr.mxu0 0.0
    %3063 = vmatpush1.msra.mxu0 0.0
    %3064 = vmatprep.subr.mxu0 0.0
    %3065 = vmatpush1.msra.mxu0 0.0
    %3066 = vmatprep.subr.mxu0 0.0
    %3067 = vmatpush1.msra.mxu0 0.0
    %3068 = vmatprep.subr.mxu0 0.0
    %3069 = vmatpush1.msra.mxu0 0.0
    %3070 = vmatprep.subr.mxu0 0.0
    %3071 = vmatpush1.msra.mxu0 0.0
    %3072 = vmatprep.mubr.f32.mxu0 0.0
    %3073 = vmatmul.mubr.f32.gmra.mrb[0].mxu0 %v2553
    %v3074 = vpop.f32.mrb[0].mxu0
    %v3075 = vadd.f32 0.0, %v3074
    %v3076 = vpop.f32.mrb[0].mxu0
    %3077 = vdwg.mxu0
    %v3078 = vadd.f32 %v3007, %v3075
    %v3079 = vxor.u32 %v3078, 2147483648
    %v3080 = vmul.f32 %v3079, 1.442695
    %v3081 = vpow.pop %v3080
    %v3082 = vadd.f32 %v3081, 1.0
    %v3083 = vrcp.pop %v3082
    %v3084 = vmul.f32 1.0, %v3083
    %v3085 = vtanh.pop %v3078
    %v3086 = vmul.f32 %v3084, 0.0
    %3088 = vrot.lane.b32.xlu0 %v3085, 32
    %v3089 = vpop.permute.xlu0 %3088
    %v3091 = vmul.f32 %v3084, %v3089
    %3093 = vrot.lane.b32.xlu0 %v3091, 32
    %v3094 = vpop.permute.xlu0 %3093
    %v3096 = vadd.f32 %v3086, %v3094
    %v3097 = vtanh.pop %v3096
    %3099 = vrot.lane.b32.xlu0 %v3097, 32
    %v3100 = vpop.permute.xlu0 %3099
    %v3102 = vmul.f32 %v3084, %v3100
    %3104 = vrot.lane.b32.xlu0 %v3102, 64
    %v3105 = vpop.permute.xlu0 %3104
    %3107 = vst.msk [vmem:[#allocation5] sm:$0x1] %vm2654, %v3105
    %v3108 = vld [vmem:[#allocation2 + $0x1] sm:$0x1]
    %v3109 = vsel %vm2551, %v3105, 0
    %3111 = vmatprep.subr.mxu0 0.0
    %3112 = vmatpush1.msra.mxu0 %v3003
    %3113 = vmatprep.subr.mxu0 0.0
    %3114 = vmatpush1.msra.mxu0 %v3004
    %3115 = vmatprep.subr.mxu0 0.0
    %3116 = vmatpush1.msra.mxu0 %v3005
    %3117 = vmatprep.subr.mxu0 0.0
    %3118 = vmatpush1.msra.mxu0 %v3006
    %3119 = vmatprep.subr.mxu0 0.0
    %3120 = vmatpush1.msra.mxu0 0.0
    %3121 = vmatprep.subr.mxu0 0.0
    %3122 = vmatpush1.msra.mxu0 0.0
    %3123 = vmatprep.subr.mxu0 0.0
    %3124 = vmatpush1.msra.mxu0 0.0
    %3125 = vmatprep.subr.mxu0 0.0
    %3126 = vmatpush1.msra.mxu0 0.0
    %3127 = vmatprep.subr.mxu0 0.0
    %3128 = vmatpush1.msra.mxu0 0.0
    %3129 = vmatprep.subr.mxu0 0.0
    %3130 = vmatpush1.msra.mxu0 0.0
    %3131 = vmatprep.subr.mxu0 0.0
    %3132 = vmatpush1.msra.mxu0 0.0
    %3133 = vmatprep.subr.mxu0 0.0
    %3134 = vmatpush1.msra.mxu0 0.0
    %3135 = vmatprep.subr.mxu0 0.0
    %3136 = vmatpush1.msra.mxu0 0.0
    %3137 = vmatprep.subr.mxu0 0.0
    %3138 = vmatpush1.msra.mxu0 0.0
    %3139 = vmatprep.subr.mxu0 0.0
    %3140 = vmatpush1.msra.mxu0 0.0
    %3141 = vmatprep.subr.mxu0 0.0
    %3142 = vmatpush1.msra.mxu0 0.0
    %3143 = vmatprep.subr.mxu0 0.0
    %3144 = vmatpush1.msra.mxu0 0.0
    %3145 = vmatprep.subr.mxu0 0.0
    %3146 = vmatpush1.msra.mxu0 0.0
    %3147 = vmatprep.subr.mxu0 0.0
    %3148 = vmatpush1.msra.mxu0 0.0
    %3149 = vmatprep.subr.mxu0 0.0
    %3150 = vmatpush1.msra.mxu0 0.0
    %3151 = vmatprep.subr.mxu0 0.0
    %3152 = vmatpush1.msra.mxu0 0.0
    %3153 = vmatprep.subr.mxu0 0.0
    %3154 = vmatpush1.msra.mxu0 0.0
    %3155 = vmatprep.subr.mxu0 0.0
    %3156 = vmatpush1.msra.mxu0 0.0
    %3157 = vmatprep.subr.mxu0 0.0
    %3158 = vmatpush1.msra.mxu0 0.0
    %3159 = vmatprep.subr.mxu0 0.0
    %3160 = vmatpush1.msra.mxu0 0.0
    %3161 = vmatprep.subr.mxu0 0.0
    %3162 = vmatpush1.msra.mxu0 0.0
    %3163 = vmatprep.subr.mxu0 0.0
    %3164 = vmatpush1.msra.mxu0 0.0
    %3165 = vmatprep.subr.mxu0 0.0
    %3166 = vmatpush1.msra.mxu0 0.0
    %3167 = vmatprep.subr.mxu0 0.0
    %3168 = vmatpush1.msra.mxu0 0.0
    %3169 = vmatprep.subr.mxu0 0.0
    %3170 = vmatpush1.msra.mxu0 0.0
    %3171 = vmatprep.subr.mxu0 0.0
    %3172 = vmatpush1.msra.mxu0 0.0
    %3173 = vmatprep.subr.mxu0 0.0
    %3174 = vmatpush1.msra.mxu0 0.0
    %3175 = vmatprep.mubr.f32.mxu0 0.0
    %3176 = vmatmul.mubr.f32.gmra.mrb[0].mxu0 %v3109
    %v3177 = vpop.f32.mrb[0].mxu0
    %v3178 = vadd.f32 0.0, %v3177
    %v3179 = vpop.f32.mrb[0].mxu0
    %3180 = vdwg.mxu0
    %v3181 = vadd.f32 %v3108, %v3178
    %v3182 = vxor.u32 %v3181, 2147483648
    %v3183 = vmul.f32 %v3182, 1.442695
    %v3184 = vpow.pop %v3183
    %v3185 = vadd.f32 %v3184, 1.0
    %v3186 = vrcp.pop %v3185
    %v3187 = vmul.f32 1.0, %v3186
    %v3188 = vtanh.pop %v3181
    %v3189 = vmul.f32 %v3187, %v3096
    %3191 = vrot.lane.b32.xlu0 %v3188, 32
    %v3192 = vpop.permute.xlu0 %3191
    %v3194 = vmul.f32 %v3187, %v3192
    %3196 = vrot.lane.b32.xlu0 %v3194, 32
    %v3197 = vpop.permute.xlu0 %3196
    %v3199 = vadd.f32 %v3189, %v3197
    %v3200 = vtanh.pop %v3199
    %3202 = vrot.lane.b32.xlu0 %v3200, 32
    %v3203 = vpop.permute.xlu0 %3202
    %v3205 = vmul.f32 %v3187, %v3203
    %3207 = vrot.lane.b32.xlu0 %v3205, 64
    %v3208 = vpop.permute.xlu0 %3207
    %3210 = vst.msk [vmem:[#allocation5 + $0x1] sm:$0x1] %vm2654, %v3208
    %v3211 = vld [vmem:[#allocation5] sm:$0x3]
    %v3213 = vsel %vm2373, %v3211, 0
    %3215 = vmatprep.subr.mxu0 0.0
    %3216 = vmatpush1.msra.mxu0 %v3213
    %3217 = vmatprep.subr.mxu0 0.0
    %3218 = vmatpush1.msra.mxu0 0.0
    %3219 = vmatprep.subr.mxu0 0.0
    %3220 = vmatpush1.msra.mxu0 0.0
    %3221 = vmatprep.subr.mxu0 0.0
    %3222 = vmatpush1.msra.mxu0 0.0
    %3223 = vmatprep.subr.mxu0 0.0
    %3224 = vmatpush1.msra.mxu0 0.0
    %3225 = vmatprep.subr.mxu0 0.0
    %3226 = vmatpush1.msra.mxu0 0.0
    %3227 = vmatprep.subr.mxu0 0.0
    %3228 = vmatpush1.msra.mxu0 0.0
    %3229 = vmatprep.subr.mxu0 0.0
    %3230 = vmatpush1.msra.mxu0 0.0
    %3231 = vmatprep.subr.mxu0 0.0
    %3232 = vmatpush1.msra.mxu0 0.0
    %3233 = vmatprep.subr.mxu0 0.0
    %3234 = vmatpush1.msra.mxu0 0.0
    %3235 = vmatprep.subr.mxu0 0.0
    %3236 = vmatpush1.msra.mxu0 0.0
    %3237 = vmatprep.subr.mxu0 0.0
    %3238 = vmatpush1.msra.mxu0 0.0
    %3239 = vmatprep.subr.mxu0 0.0
    %3240 = vmatpush1.msra.mxu0 0.0
    %3241 = vmatprep.subr.mxu0 0.0
    %3242 = vmatpush1.msra.mxu0 0.0
    %3243 = vmatprep.subr.mxu0 0.0
    %3244 = vmatpush1.msra.mxu0 0.0
    %3245 = vmatprep.subr.mxu0 0.0
    %3246 = vmatpush1.msra.mxu0 0.0
    %3247 = vmatprep.subr.mxu0 0.0
    %3248 = vmatpush1.msra.mxu0 0.0
    %3249 = vmatprep.subr.mxu0 0.0
    %3250 = vmatpush1.msra.mxu0 0.0
    %3251 = vmatprep.subr.mxu0 0.0
    %3252 = vmatpush1.msra.mxu0 0.0
    %3253 = vmatprep.subr.mxu0 0.0
    %3254 = vmatpush1.msra.mxu0 0.0
    %3255 = vmatprep.subr.mxu0 0.0
    %3256 = vmatpush1.msra.mxu0 0.0
    %3257 = vmatprep.subr.mxu0 0.0
    %3258 = vmatpush1.msra.mxu0 0.0
    %3259 = vmatprep.subr.mxu0 0.0
    %3260 = vmatpush1.msra.mxu0 0.0
    %3261 = vmatprep.subr.mxu0 0.0
    %3262 = vmatpush1.msra.mxu0 0.0
    %3263 = vmatprep.subr.mxu0 0.0
    %3264 = vmatpush1.msra.mxu0 0.0
    %3265 = vmatprep.subr.mxu0 0.0
    %3266 = vmatpush1.msra.mxu0 0.0
    %3267 = vmatprep.subr.mxu0 0.0
    %3268 = vmatpush1.msra.mxu0 0.0
    %3269 = vmatprep.subr.mxu0 0.0
    %3270 = vmatpush1.msra.mxu0 0.0
    %3271 = vmatprep.subr.mxu0 0.0
    %3272 = vmatpush1.msra.mxu0 0.0
    %3273 = vmatprep.subr.mxu0 0.0
    %3274 = vmatpush1.msra.mxu0 0.0
    %3275 = vmatprep.subr.mxu0 0.0
    %3276 = vmatpush1.msra.mxu0 0.0
    %3277 = vmatprep.subr.mxu0 0.0
    %3278 = vmatpush1.msra.mxu0 0.0
    %3279 = vmatprep.mubr.f32.mxu0 0.0
    %3280 = vmatmul.mubr.f32.gmra.mrb[0].mxu0 %v2371
    %v3281 = vpop.f32.mrb[0].mxu0
    %v3282 = vadd.f32 0.0, %v3281
    %v3283 = vpop.f32.mrb[0].mxu0
    %3284 = vdwg.mxu0
    %v3285 = vsel %vm2368, %v3211, %v3282
    %v3286 = vld [vmem:[%s16] sm:$0xff]
    %v3287 = vld [vmem:[%s16 + $0x8] sm:$0xff]
    %v3288 = vld [vmem:[%s16 + $0x10] sm:$0xff]
    %v3289 = vld [vmem:[%s16 + $0x18] sm:$0xff]
    %v3290 = vld [vmem:[%s17] sm:$0x1]
    %v3292 = vlaneseq
    %v3293 = vshrl.u32 %v3292, 7
    %v3294 = vsub.s32 0, %v3293
    %v3295 = vrot.slane %v3290, %v3294
    %v3298 = vsel %vm2551, %v3285, 0
    %3300 = vmatprep.subr.mxu0 0.0
    %3301 = vmatpush1.msra.mxu0 %v3286
    %3302 = vmatprep.subr.mxu0 0.0
    %3303 = vmatpush1.msra.mxu0 %v3287
    %3304 = vmatprep.subr.mxu0 0.0
    %3305 = vmatpush1.msra.mxu0 %v3288
    %3306 = vmatprep.subr.mxu0 0.0
    %3307 = vmatpush1.msra.mxu0 %v3289
    %3308 = vmatprep.subr.mxu0 0.0
    %3309 = vmatpush1.msra.mxu0 0.0
    %3310 = vmatprep.subr.mxu0 0.0
    %3311 = vmatpush1.msra.mxu0 0.0
    %3312 = vmatprep.subr.mxu0 0.0
    %3313 = vmatpush1.msra.mxu0 0.0
    %3314 = vmatprep.subr.mxu0 0.0
    %3315 = vmatpush1.msra.mxu0 0.0
    %3316 = vmatprep.subr.mxu0 0.0
    %3317 = vmatpush1.msra.mxu0 0.0
    %3318 = vmatprep.subr.mxu0 0.0
    %3319 = vmatpush1.msra.mxu0 0.0
    %3320 = vmatprep.subr.mxu0 0.0
    %3321 = vmatpush1.msra.mxu0 0.0
    %3322 = vmatprep.subr.mxu0 0.0
    %3323 = vmatpush1.msra.mxu0 0.0
    %3324 = vmatprep.subr.mxu0 0.0
    %3325 = vmatpush1.msra.mxu0 0.0
    %3326 = vmatprep.subr.mxu0 0.0
    %3327 = vmatpush1.msra.mxu0 0.0
    %3328 = vmatprep.subr.mxu0 0.0
    %3329 = vmatpush1.msra.mxu0 0.0
    %3330 = vmatprep.subr.mxu0 0.0
    %3331 = vmatpush1.msra.mxu0 0.0
    %3332 = vmatprep.subr.mxu0 0.0
    %3333 = vmatpush1.msra.mxu0 0.0
    %3334 = vmatprep.subr.mxu0 0.0
    %3335 = vmatpush1.msra.mxu0 0.0
    %3336 = vmatprep.subr.mxu0 0.0
    %3337 = vmatpush1.msra.mxu0 0.0
    %3338 = vmatprep.subr.mxu0 0.0
    %3339 = vmatpush1.msra.mxu0 0.0
    %3340 = vmatprep.subr.mxu0 0.0
    %3341 = vmatpush1.msra.mxu0 0.0
    %3342 = vmatprep.subr.mxu0 0.0
    %3343 = vmatpush1.msra.mxu0 0.0
    %3344 = vmatprep.subr.mxu0 0.0
    %3345 = vmatpush1.msra.mxu0 0.0
    %3346 = vmatprep.subr.mxu0 0.0
    %3347 = vmatpush1.msra.mxu0 0.0
    %3348 = vmatprep.subr.mxu0 0.0
    %3349 = vmatpush1.msra.mxu0 0.0
    %3350 = vmatprep.subr.mxu0 0.0
    %3351 = vmatpush1.msra.mxu0 0.0
    %3352 = vmatprep.subr.mxu0 0.0
    %3353 = vmatpush1.msra.mxu0 0.0
    %3354 = vmatprep.subr.mxu0 0.0
    %3355 = vmatpush1.msra.mxu0 0.0
    %3356 = vmatprep.subr.mxu0 0.0
    %3357 = vmatpush1.msra.mxu0 0.0
    %3358 = vmatprep.subr.mxu0 0.0
    %3359 = vmatpush1.msra.mxu0 0.0
    %3360 = vmatprep.subr.mxu0 0.0
    %3361 = vmatpush1.msra.mxu0 0.0
    %3362 = vmatprep.subr.mxu0 0.0
    %3363 = vmatpush1.msra.mxu0 0.0
    %3364 = vmatprep.mubr.f32.mxu0 0.0
    %3365 = vmatmul.mubr.f32.gmra.mrb[0].mxu0 %v3298
    %v3366 = vpop.f32.mrb[0].mxu0
    %v3367 = vadd.f32 %v3295, %v3366
    %v3368 = vpop.f32.mrb[0].mxu0
    %3369 = vdwg.mxu0
    %v3370 = vmax.f32 %v3367, 0.0
    %3371 = vst [vmem:[#allocation9] sm:$0x3] %v3370
    // Predicated region
    $region78: #{tpu_custom_call.1} parent=1 // pred_check
      _
    $region79: #{tpu_custom_call.1} parent=1 // pred_check_branch
      %3373 = sbr.rel (0) target = $region81
    $region80: #{tpu_custom_call.1} parent=1 // pred_region
      %s3375 = ssub.s32 32, 32
      %3376 = vsyncadd [#allocation8], %s3375
      %s3378 = sshll.u32 [#allocation9], 4
      %s3379 = int_to_ptr.vmem [resolvable:$true] %s3378
      %3381 = dma.vmem_to_hbm [thread:$0]  %s3379, 32, %s18, [#allocation8]
    $region81: #{tpu_custom_call.1} parent=1 // pred_fallthru
      _
    // Predicated region
    $region82: #{tpu_custom_call.1} parent=1 // pred_check
      _
    $region83: #{tpu_custom_call.1} parent=1 // pred_check_branch
      %3383 = sbr.rel (0) target = $region85
    $region84: #{tpu_custom_call.1} parent=1 // pred_region
      %3384 = dma.done [#allocation8], 32
    $region85: #{tpu_custom_call.1} parent=1 // pred_fallthru
      _
    %3385 = vsyncpa [#allocation7], 1
    %3386 = vsyncpa [#allocation8], 1

</llo_original>
